<compile_context>
chip_gen: v5e
topology: v5e:2x2
jax: 0.10.0
libtpu: 0.0.40
codegen_flags: <defaults>
</compile_context>

<pallas_src>
import jax
import jax.numpy as jnp
from jax import lax
from jax.experimental import pallas as pl
from jax.experimental.pallas import tpu as pltpu

EPS = 1e-5                      # nn.BatchNorm2d default eps
VMEM_LIMIT = 48 * 1024 * 1024   # v7x-safe scoped-VMEM budget


def _round_up(x, m):
    return (x + m - 1) // m * m


# --------------------------------------------------------------------------
# kernel 1: 3x3 conv (stride s) + bias + per-image BN partial stats.
# Input is the flattened "phase" slab; tap (dh, dw) is a contiguous 2-D slice.
# Output rows are in "junk-column" layout: ho * (wo + 2) rows per image, the
# last 2 columns of every output row are garbage and masked out of the stats.
# --------------------------------------------------------------------------
def conv3x3_stats(xph, w, b, mask, *, s, ho, wo):
    B = xph.shape[0]
    cinp = xph.shape[-1]
    cop = w.shape[-1]
    We = wo + 2
    M = ho * We
    PH = (ho + 3) * We

    def kernel(x_ref, w_ref, b_ref, m_ref, y_ref, ps_ref, pq_ref):
        acc = None
        for t in range(9):
            dh, dw = divmod(t, 3)
            ph = (dh % s) * s + (dw % s)
            start = (dh // s) * We + (dw // s)
            a = x_ref[ph, pl.ds(start, M), :]
            d = jnp.dot(a, w_ref[t], preferred_element_type=jnp.float32)
            acc = d if acc is None else acc + d
        y = acc + b_ref[...]
        y_ref[...] = y.astype(y_ref.dtype)
        ym = y * m_ref[...]                       # junk columns -> 0 for stats
        ps_ref[...] = jnp.sum(ym, axis=0, keepdims=True)
        pq_ref[...] = jnp.sum(ym * y, axis=0, keepdims=True)

    return pl.pallas_call(
        kernel,
        out_shape=(jax.ShapeDtypeStruct((B, M, cop), jnp.bfloat16),
                   jax.ShapeDtypeStruct((B, 1, cop), jnp.float32),
                   jax.ShapeDtypeStruct((B, 1, cop), jnp.float32)),
        grid=(B,),
        in_specs=[
            pl.BlockSpec((None, s * s, PH, cinp), lambda bi: (bi, 0, 0, 0)),
            pl.BlockSpec((9, cinp, cop), lambda bi: (0, 0, 0)),
            pl.BlockSpec((1, cop), lambda bi: (0, 0)),
            pl.BlockSpec((M, 1), lambda bi: (0, 0)),
        ],
        out_specs=(
            pl.BlockSpec((None, M, cop), lambda bi: (bi, 0, 0)),
            pl.BlockSpec((None, 1, cop), lambda bi: (bi, 0, 0)),
            pl.BlockSpec((None, 1, cop), lambda bi: (bi, 0, 0)),
        ),
        compiler_params=pltpu.CompilerParams(
            dimension_semantics=("parallel",),
            vmem_limit_bytes=VMEM_LIMIT),
    )(xph, w, b, mask)


# --------------------------------------------------------------------------
# kernel 2: BN1+ELU applied to the loaded y1 tile (fused), padded h1 built in
# a VMEM scratch, then 3x3 stride-1 conv (9 taps) + bias + BN2 partial stats.
# --------------------------------------------------------------------------
def conv3x3_fused_bn_in(y1, vec1, w, b, mask, *, ho, wo):
    B, M, cop = y1.shape
    We = wo + 2
    woff = _round_up(We + 1, 8)               # 8-aligned interior write offset
    base = woff - (We + 1)
    PF = _round_up(base + (ho + 2) * We + 2, 8)

    def kernel(y1_ref, v_ref, w_ref, b_ref, m_ref,
               y2_ref, ps_ref, pq_ref, pf_ref):
        v = v_ref[...]
        z = y1_ref[...].astype(jnp.float32) * v[0:1, :] + v[1:2, :]
        h1 = jnp.where(z > 0.0, z, jnp.exp(jnp.minimum(z, 0.0)) - 1.0)
        h1 = h1 * m_ref[...]                  # junk columns -> exact zero pad
        pf_ref[...] = jnp.zeros_like(pf_ref)  # zero borders / overrun region
        pf_ref[pl.ds(woff, M), :] = h1.astype(pf_ref.dtype)
        acc = None
        for t in range(9):
            dh, dw = divmod(t, 3)
            a = pf_ref[pl.ds(base + dh * We + dw, M), :]
            d = jnp.dot(a, w_ref[t], preferred_element_type=jnp.float32)
            acc = d if acc is None else acc + d
        y2 = acc + b_ref[...]
        y2_ref[...] = y2.astype(y2_ref.dtype)
        ym = y2 * m_ref[...]
        ps_ref[...] = jnp.sum(ym, axis=0, keepdims=True)
        pq_ref[...] = jnp.sum(ym * y2, axis=0, keepdims=True)

    return pl.pallas_call(
        kernel,
        out_shape=(jax.ShapeDtypeStruct((B, M, cop), jnp.bfloat16),
                   jax.ShapeDtypeStruct((B, 1, cop), jnp.float32),
                   jax.ShapeDtypeStruct((B, 1, cop), jnp.float32)),
        grid=(B,),
        in_specs=[
            pl.BlockSpec((None, M, cop), lambda bi: (bi, 0, 0)),
            pl.BlockSpec((2, cop), lambda bi: (0, 0)),
            pl.BlockSpec((9, cop, cop), lambda bi: (0, 0, 0)),
            pl.BlockSpec((1, cop), lambda bi: (0, 0)),
            pl.BlockSpec((M, 1), lambda bi: (0, 0)),
        ],
        out_specs=(
            pl.BlockSpec((None, M, cop), lambda bi: (bi, 0, 0)),
            pl.BlockSpec((None, 1, cop), lambda bi: (bi, 0, 0)),
            pl.BlockSpec((None, 1, cop), lambda bi: (bi, 0, 0)),
        ),
        scratch_shapes=[pltpu.VMEM((PF, cop), jnp.bfloat16)],
        compiler_params=pltpu.CompilerParams(
            dimension_semantics=("parallel",),
            vmem_limit_bytes=VMEM_LIMIT),
    )(y1, vec1, w, b, mask)


# --------------------------------------------------------------------------
# kernel 3: h2 = ELU(BN2(y2)); fused 1x1 projection shortcut (xs @ w3 + b3,
# xs sliced straight out of the phase slab); sum + BN3 partial stats.
# --------------------------------------------------------------------------
def bn_elu_shortcut_add_stats(y2, vec2, xph, w3, b3, mask, *, s, ho, wo):
    B, M, cop = y2.shape
    cinp = xph.shape[-1]
    PH = xph.shape[2]
    We = wo + 2
    P1 = (1 % s) * s + (1 % s)                # phase holding x[i*s, j*s]
    off1 = (1 // s) * We + (1 // s)

    def kernel(y2_ref, v_ref, x_ref, w3_ref, b3_ref, m_ref,
               o_ref, ps_ref, pq_ref):
        v = v_ref[...]
        z = y2_ref[...].astype(jnp.float32) * v[0:1, :] + v[1:2, :]
        h2 = jnp.where(z > 0.0, z, jnp.exp(jnp.minimum(z, 0.0)) - 1.0)
        xs = x_ref[0, pl.ds(off1, M), :]
        sc = jnp.dot(xs, w3_ref[...],
                     preferred_element_type=jnp.float32) + b3_ref[...]
        ssum = h2 + sc
        o_ref[...] = ssum.astype(o_ref.dtype)
        sm = ssum * m_ref[...]
        ps_ref[...] = jnp.sum(sm, axis=0, keepdims=True)
        pq_ref[...] = jnp.sum(sm * ssum, axis=0, keepdims=True)

    return pl.pallas_call(
        kernel,
        out_shape=(jax.ShapeDtypeStruct((B, M, cop), jnp.bfloat16),
                   jax.ShapeDtypeStruct((B, 1, cop), jnp.float32),
                   jax.ShapeDtypeStruct((B, 1, cop), jnp.float32)),
        grid=(B,),
        in_specs=[
            pl.BlockSpec((None, M, cop), lambda bi: (bi, 0, 0)),
            pl.BlockSpec((2, cop), lambda bi: (0, 0)),
            pl.BlockSpec((None, 1, PH, cinp), lambda bi: (bi, P1, 0, 0)),
            pl.BlockSpec((cinp, cop), lambda bi: (0, 0)),
            pl.BlockSpec((1, cop), lambda bi: (0, 0)),
            pl.BlockSpec((M, 1), lambda bi: (0, 0)),
        ],
        out_specs=(
            pl.BlockSpec((None, M, cop), lambda bi: (bi, 0, 0)),
            pl.BlockSpec((None, 1, cop), lambda bi: (bi, 0, 0)),
            pl.BlockSpec((None, 1, cop), lambda bi: (bi, 0, 0)),
        ),
        compiler_params=pltpu.CompilerParams(
            dimension_semantics=("parallel",),
            vmem_limit_bytes=VMEM_LIMIT),
    )(y2, vec2, xph, w3, b3, mask)


# --------------------------------------------------------------------------
# kernel 4: final BN3 + ELU, emits float32 directly.
# --------------------------------------------------------------------------
def bn_elu_final(ssum, vec3):
    B, M, cop = ssum.shape

    def kernel(s_ref, v_ref, o_ref):
        v = v_ref[...]
        z = s_ref[...].astype(jnp.float32) * v[0:1, :] + v[1:2, :]
        o_ref[...] = jnp.where(z > 0.0, z,
                               jnp.exp(jnp.minimum(z, 0.0)) - 1.0)

    return pl.pallas_call(
        kernel,
        out_shape=jax.ShapeDtypeStruct((B, M, cop), jnp.float32),
        grid=(B,),
        in_specs=[pl.BlockSpec((None, M, cop), lambda bi: (bi, 0, 0)),
                  pl.BlockSpec((2, cop), lambda bi: (0, 0))],
        out_specs=pl.BlockSpec((None, M, cop), lambda bi: (bi, 0, 0)),
        compiler_params=pltpu.CompilerParams(
            dimension_semantics=("parallel",),
            vmem_limit_bytes=VMEM_LIMIT),
    )(ssum, vec3)


# ------------------------------ JAX glue ------------------------------------

def _finish_stats(psum, psq, count, gamma, beta):
    """BN(train): biased batch stats -> stacked [scale; shift] (2, C) f32."""
    mean = psum / count
    var = jnp.maximum(psq / count - mean * mean, 0.0)
    inv = lax.rsqrt(var + EPS)
    scale = gamma * inv
    shift = beta - mean * scale
    return jnp.concatenate([scale, shift], axis=0)


def resconv_basic_forward(x_nchw, p, stride):
    """PyTorch resconv_basic.forward (do_proj=True), BN in training mode."""
    x = jnp.transpose(x_nchw, (0, 2, 3, 1))                 # NHWC f32
    B, H, W, cin = x.shape
    cout = p['w1'].shape[-1]
    s = stride
    ho = (H - 1) // s + 1
    wo = (W - 1) // s + 1
    We = wo + 2
    M = ho * We
    cinp = _round_up(cin, 16)
    cop = _round_up(cout, 16)

    # ---- phase-split + flattened padded input (replaces the HBM im2col) ----
    Hpf, Wpf = (ho + 3) * s, (wo + 2) * s
    xpad = jnp.pad(x, ((0, 0), (1, Hpf - H - 1), (1, Wpf - W - 1),
                       (0, cinp - cin))).astype(jnp.bfloat16)
    xph = xpad.reshape(B, ho + 3, s, We, s, cinp).transpose(0, 2, 4, 1, 3, 5)
    xph = xph.reshape(B, s * s, (ho + 3) * We, cinp)

    # valid-row mask for the junk-column layout (static)
    mask = ((jnp.arange(M) % We) < wo).astype(jnp.float32).reshape(M, 1)

    def padw3x3(wt, cip, co_p):                              # HWIO -> (9,K,N)
        kh, kw, ci, co = wt.shape
        wt = jnp.pad(wt, ((0, 0), (0, 0), (0, cip - ci), (0, co_p - co)))
        return wt.reshape(9, cip, co_p).astype(jnp.bfloat16)

    def padvec(v):                                           # (co,) -> (1,cop)
        return jnp.pad(v, (0, cop - v.shape[0])).reshape(1, cop).astype(
            jnp.float32)

    w1 = padw3x3(p['w1'], cinp, cop)
    w2 = padw3x3(p['w2'], cop, cop)
    w3 = jnp.pad(p['w3'], ((0, cinp - cin), (0, cop - cout))).astype(
        jnp.bfloat16)
    b1, b2, b3 = padvec(p['b1']), padvec(p['b2']), padvec(p['b3'])
    count = float(B * ho * wo)

    # conv1 (3x3, stride s) + bias, fused BN1 partial stats
    y1, ps1, pq1 = conv3x3_stats(xph, w1, b1, mask, s=s, ho=ho, wo=wo)
    vec1 = _finish_stats(ps1.sum(0), pq1.sum(0), count,
                         padvec(p['g1']), padvec(p['be1']))

    # conv2 (3x3, stride 1) with BN1+ELU fused on the load, BN2 partial stats
    y2, ps2, pq2 = conv3x3_fused_bn_in(y1, vec1, w2, b2, mask, ho=ho, wo=wo)
    vec2 = _finish_stats(ps2.sum(0), pq2.sum(0), count,
                         padvec(p['g2']), padvec(p['be2']))

    # ELU(BN2(y2)) + fused 1x1 projection shortcut + BN3 partial stats
    ssum, ps3, pq3 = bn_elu_shortcut_add_stats(y2, vec2, xph, w3, b3, mask,
                                               s=s, ho=ho, wo=wo)
    vec3 = _finish_stats(ps3.sum(0), pq3.sum(0), count,
                         padvec(p['g4']), padvec(p['be4']))

    # final BN3 + ELU (f32 output)
    out = bn_elu_final(ssum, vec3)

    out = out.reshape(B, ho, We, cop)[:, :, :wo, :cout]
    return jnp.transpose(out, (0, 3, 1, 2))                 # NHWC -> NCHW


# -------------------------- pure-JAX reference ------------------------------

def _ref_bn_elu(x, gamma, beta):
    mean = jnp.mean(x, axis=(0, 1, 2), keepdims=True)
    var = jnp.mean((x - mean) ** 2, axis=(0, 1, 2), keepdims=True)
    y = (x - mean) / jnp.sqrt(var + EPS) * gamma + beta
    return jnp.where(y > 0, y, jnp.exp(jnp.minimum(y, 0.0)) - 1.0)


def reference_forward(x_nchw, p, stride):
    x = jnp.transpose(x_nchw, (0, 2, 3, 1))
    hp = lax.Precision.HIGHEST

    def convp(xx, wt, bb, st, pad):
        return lax.conv_general_dilated(
            xx, wt, (st, st), ((pad, pad), (pad, pad)),
            dimension_numbers=('NHWC', 'HWIO', 'NHWC'), precision=hp) + bb

    h1 = _ref_bn_elu(convp(x, p['w1'], p['b1'], stride, 1), p['g1'], p['be1'])
    h2 = _ref_bn_elu(convp(h1, p['w2'], p['b2'], 1, 1), p['g2'], p['be2'])
    sc = convp(x, p['w3'].reshape(1, 1, *p['w3'].shape), p['b3'], stride, 0)
    y = _ref_bn_elu(h2 + sc, p['g4'], p['be4'])
    return jnp.transpose(y, (0, 3, 1, 2))


# ---------------------------------- main ------------------------------------

if __name__ == "__main__":
    key = jax.random.PRNGKey(0)
    n, cin, h, w = 2, 4, 16, 16
    cout, stride = 8, 2
    ks = jax.random.split(key, 8)

    x = jax.random.normal(ks[0], (n, cin, h, w), jnp.float32)
    params = dict(
        # conv1: 3x3, stride=stride  (weights stored HWIO)
        w1=0.1 * jax.random.normal(ks[1], (3, 3, cin, cout), jnp.float32),
        b1=0.1 * jax.random.normal(ks[2], (cout,), jnp.float32),
        # conv2: 3x3, stride=1
        w2=0.1 * jax.random.normal(ks[3], (3, 3, cout, cout), jnp.float32),
        b2=0.1 * jax.random.normal(ks[4], (cout,), jnp.float32),
        # conv3 (projection): 1x1, stride=stride
        w3=0.1 * jax.random.normal(ks[5], (cin, cout), jnp.float32),
        b3=0.1 * jax.random.normal(ks[6], (cout,), jnp.float32),
        # BatchNorm affine params (PyTorch default init: gamma=1, beta=0)
        g1=jnp.ones((cout,), jnp.float32), be1=jnp.zeros((cout,), jnp.float32),
        g2=jnp.ones((cout,), jnp.float32), be2=jnp.zeros((cout,), jnp.float32),
        g4=jnp.ones((cout,), jnp.float32), be4=jnp.zeros((cout,), jnp.float32),
    )

    fwd = jax.jit(resconv_basic_forward, static_argnums=2)
    out = jax.block_until_ready(fwd(x, params, stride))
    assert out.shape == (n, cout, h // stride, w // stride), out.shape

    ref = reference_forward(x, params, stride)
    assert jnp.allclose(out, ref, rtol=5e-2, atol=5e-2), \
        float(jnp.max(jnp.abs(out - ref)))

    print("KERNEL_OK")
</pallas_src>

<mosaic_0001>
module attributes {stable_mosaic.version = 11 : i64} {
  func.func @kernel(%arg0: i32, %arg1: memref<1x4x110x16xbf16, #tpu.memory_space<vmem>>, %arg2: memref<9x16x16xbf16, #tpu.memory_space<vmem>>, %arg3: memref<1x16xf32, #tpu.memory_space<vmem>>, %arg4: memref<80x1xf32, #tpu.memory_space<vmem>>, %arg5: memref<1x80x16xbf16, #tpu.memory_space<vmem>>, %arg6: memref<1x1x16xf32, #tpu.memory_space<vmem>>, %arg7: memref<1x1x16xf32, #tpu.memory_space<vmem>>) attributes {dimension_semantics = [#tpu.dimension_semantics<parallel>], iteration_bounds = array<i64: 2>, scalar_prefetch = 0 : i64, scratch_operands = 0 : i64, tpu.core_type = #tpu.core_type<tc>, window_params = [{transform_indices = @transform_0, window_bounds = array<i64: 1, 4, 110, 16>}, {pipeline_mode = #tpu.pipeline_mode<synchronous>, transform_indices = @transform_1, window_bounds = array<i64: 9, 16, 16>}, {pipeline_mode = #tpu.pipeline_mode<synchronous>, transform_indices = @transform_2, window_bounds = array<i64: 1, 16>}, {pipeline_mode = #tpu.pipeline_mode<synchronous>, transform_indices = @transform_3, window_bounds = array<i64: 80, 1>}, {transform_indices = @transform_4, window_bounds = array<i64: 1, 80, 16>}, {transform_indices = @transform_5, window_bounds = array<i64: 1, 1, 16>}, {transform_indices = @transform_6, window_bounds = array<i64: 1, 1, 16>}]} {
    %c0 = arith.constant 0 : index
    %c0_0 = arith.constant 0 : index
    %c0_1 = arith.constant 0 : index
    %c0_2 = arith.constant 0 : index
    %0 = vector.load %arg1[%c0, %c0_0, %c0_1, %c0_2] : memref<1x4x110x16xbf16, #tpu.memory_space<vmem>>, vector<1x1x80x16xbf16>
    %1 = vector.shape_cast %0 : vector<1x1x80x16xbf16> to vector<80x16xbf16>
    %c0_3 = arith.constant 0 : index
    %c0_4 = arith.constant 0 : index
    %c0_5 = arith.constant 0 : index
    %2 = vector.load %arg2[%c0_3, %c0_4, %c0_5] : memref<9x16x16xbf16, #tpu.memory_space<vmem>>, vector<1x16x16xbf16>
    %3 = vector.shape_cast %2 : vector<1x16x16xbf16> to vector<16x16xbf16>
    %cst = arith.constant dense<0.000000e+00> : vector<80x16xf32>
    %4 = tpu.matmul %1, %3, %cst {dimension_numbers = #tpu.dot_dimension_numbers<[1], [0], [0], [1], [0, 0, 1, 1], [], []>} : vector<80x16xbf16>, vector<16x16xbf16>, vector<80x16xf32> -> vector<80x16xf32>
    %c0_6 = arith.constant 0 : index
    %c1 = arith.constant 1 : index
    %c0_7 = arith.constant 0 : index
    %c0_8 = arith.constant 0 : index
    %5 = vector.load %arg1[%c0_6, %c1, %c0_7, %c0_8] : memref<1x4x110x16xbf16, #tpu.memory_space<vmem>>, vector<1x1x80x16xbf16>
    %6 = vector.shape_cast %5 : vector<1x1x80x16xbf16> to vector<80x16xbf16>
    %c1_9 = arith.constant 1 : index
    %c0_10 = arith.constant 0 : index
    %c0_11 = arith.constant 0 : index
    %7 = vector.load %arg2[%c1_9, %c0_10, %c0_11] : memref<9x16x16xbf16, #tpu.memory_space<vmem>>, vector<1x16x16xbf16>
    %8 = vector.shape_cast %7 : vector<1x16x16xbf16> to vector<16x16xbf16>
    %cst_12 = arith.constant dense<0.000000e+00> : vector<80x16xf32>
    %9 = tpu.matmul %6, %8, %cst_12 {dimension_numbers = #tpu.dot_dimension_numbers<[1], [0], [0], [1], [0, 0, 1, 1], [], []>} : vector<80x16xbf16>, vector<16x16xbf16>, vector<80x16xf32> -> vector<80x16xf32>
    %10 = arith.addf %4, %9 : vector<80x16xf32>
    %c0_13 = arith.constant 0 : index
    %c0_14 = arith.constant 0 : index
    %c1_15 = arith.constant 1 : index
    %c0_16 = arith.constant 0 : index
    %11 = vector.load %arg1[%c0_13, %c0_14, %c1_15, %c0_16] : memref<1x4x110x16xbf16, #tpu.memory_space<vmem>>, vector<1x1x80x16xbf16>
    %12 = vector.shape_cast %11 : vector<1x1x80x16xbf16> to vector<80x16xbf16>
    %c2 = arith.constant 2 : index
    %c0_17 = arith.constant 0 : index
    %c0_18 = arith.constant 0 : index
    %13 = vector.load %arg2[%c2, %c0_17, %c0_18] : memref<9x16x16xbf16, #tpu.memory_space<vmem>>, vector<1x16x16xbf16>
    %14 = vector.shape_cast %13 : vector<1x16x16xbf16> to vector<16x16xbf16>
    %cst_19 = arith.constant dense<0.000000e+00> : vector<80x16xf32>
    %15 = tpu.matmul %12, %14, %cst_19 {dimension_numbers = #tpu.dot_dimension_numbers<[1], [0], [0], [1], [0, 0, 1, 1], [], []>} : vector<80x16xbf16>, vector<16x16xbf16>, vector<80x16xf32> -> vector<80x16xf32>
    %16 = arith.addf %10, %15 : vector<80x16xf32>
    %c0_20 = arith.constant 0 : index
    %c2_21 = arith.constant 2 : index
    %c0_22 = arith.constant 0 : index
    %c0_23 = arith.constant 0 : index
    %17 = vector.load %arg1[%c0_20, %c2_21, %c0_22, %c0_23] : memref<1x4x110x16xbf16, #tpu.memory_space<vmem>>, vector<1x1x80x16xbf16>
    %18 = vector.shape_cast %17 : vector<1x1x80x16xbf16> to vector<80x16xbf16>
    %c3 = arith.constant 3 : index
    %c0_24 = arith.constant 0 : index
    %c0_25 = arith.constant 0 : index
    %19 = vector.load %arg2[%c3, %c0_24, %c0_25] : memref<9x16x16xbf16, #tpu.memory_space<vmem>>, vector<1x16x16xbf16>
    %20 = vector.shape_cast %19 : vector<1x16x16xbf16> to vector<16x16xbf16>
    %cst_26 = arith.constant dense<0.000000e+00> : vector<80x16xf32>
    %21 = tpu.matmul %18, %20, %cst_26 {dimension_numbers = #tpu.dot_dimension_numbers<[1], [0], [0], [1], [0, 0, 1, 1], [], []>} : vector<80x16xbf16>, vector<16x16xbf16>, vector<80x16xf32> -> vector<80x16xf32>
    %22 = arith.addf %16, %21 : vector<80x16xf32>
    %c0_27 = arith.constant 0 : index
    %c3_28 = arith.constant 3 : index
    %c0_29 = arith.constant 0 : index
    %c0_30 = arith.constant 0 : index
    %23 = vector.load %arg1[%c0_27, %c3_28, %c0_29, %c0_30] : memref<1x4x110x16xbf16, #tpu.memory_space<vmem>>, vector<1x1x80x16xbf16>
    %24 = vector.shape_cast %23 : vector<1x1x80x16xbf16> to vector<80x16xbf16>
    %c4 = arith.constant 4 : index
    %c0_31 = arith.constant 0 : index
    %c0_32 = arith.constant 0 : index
    %25 = vector.load %arg2[%c4, %c0_31, %c0_32] : memref<9x16x16xbf16, #tpu.memory_space<vmem>>, vector<1x16x16xbf16>
    %26 = vector.shape_cast %25 : vector<1x16x16xbf16> to vector<16x16xbf16>
    %cst_33 = arith.constant dense<0.000000e+00> : vector<80x16xf32>
    %27 = tpu.matmul %24, %26, %cst_33 {dimension_numbers = #tpu.dot_dimension_numbers<[1], [0], [0], [1], [0, 0, 1, 1], [], []>} : vector<80x16xbf16>, vector<16x16xbf16>, vector<80x16xf32> -> vector<80x16xf32>
    %28 = arith.addf %22, %27 : vector<80x16xf32>
    %c0_34 = arith.constant 0 : index
    %c2_35 = arith.constant 2 : index
    %c1_36 = arith.constant 1 : index
    %c0_37 = arith.constant 0 : index
    %29 = vector.load %arg1[%c0_34, %c2_35, %c1_36, %c0_37] : memref<1x4x110x16xbf16, #tpu.memory_space<vmem>>, vector<1x1x80x16xbf16>
    %30 = vector.shape_cast %29 : vector<1x1x80x16xbf16> to vector<80x16xbf16>
    %c5 = arith.constant 5 : index
    %c0_38 = arith.constant 0 : index
    %c0_39 = arith.constant 0 : index
    %31 = vector.load %arg2[%c5, %c0_38, %c0_39] : memref<9x16x16xbf16, #tpu.memory_space<vmem>>, vector<1x16x16xbf16>
    %32 = vector.shape_cast %31 : vector<1x16x16xbf16> to vector<16x16xbf16>
    %cst_40 = arith.constant dense<0.000000e+00> : vector<80x16xf32>
    %33 = tpu.matmul %30, %32, %cst_40 {dimension_numbers = #tpu.dot_dimension_numbers<[1], [0], [0], [1], [0, 0, 1, 1], [], []>} : vector<80x16xbf16>, vector<16x16xbf16>, vector<80x16xf32> -> vector<80x16xf32>
    %34 = arith.addf %28, %33 : vector<80x16xf32>
    %c0_41 = arith.constant 0 : index
    %c0_42 = arith.constant 0 : index
    %c10 = arith.constant 10 : index
    %c0_43 = arith.constant 0 : index
    %35 = vector.load %arg1[%c0_41, %c0_42, %c10, %c0_43] : memref<1x4x110x16xbf16, #tpu.memory_space<vmem>>, vector<1x1x80x16xbf16>
    %36 = vector.shape_cast %35 : vector<1x1x80x16xbf16> to vector<80x16xbf16>
    %c6 = arith.constant 6 : index
    %c0_44 = arith.constant 0 : index
    %c0_45 = arith.constant 0 : index
    %37 = vector.load %arg2[%c6, %c0_44, %c0_45] : memref<9x16x16xbf16, #tpu.memory_space<vmem>>, vector<1x16x16xbf16>
    %38 = vector.shape_cast %37 : vector<1x16x16xbf16> to vector<16x16xbf16>
    %cst_46 = arith.constant dense<0.000000e+00> : vector<80x16xf32>
    %39 = tpu.matmul %36, %38, %cst_46 {dimension_numbers = #tpu.dot_dimension_numbers<[1], [0], [0], [1], [0, 0, 1, 1], [], []>} : vector<80x16xbf16>, vector<16x16xbf16>, vector<80x16xf32> -> vector<80x16xf32>
    %40 = arith.addf %34, %39 : vector<80x16xf32>
    %c0_47 = arith.constant 0 : index
    %c1_48 = arith.constant 1 : index
    %c10_49 = arith.constant 10 : index
    %c0_50 = arith.constant 0 : index
    %41 = vector.load %arg1[%c0_47, %c1_48, %c10_49, %c0_50] : memref<1x4x110x16xbf16, #tpu.memory_space<vmem>>, vector<1x1x80x16xbf16>
    %42 = vector.shape_cast %41 : vector<1x1x80x16xbf16> to vector<80x16xbf16>
    %c7 = arith.constant 7 : index
    %c0_51 = arith.constant 0 : index
    %c0_52 = arith.constant 0 : index
    %43 = vector.load %arg2[%c7, %c0_51, %c0_52] : memref<9x16x16xbf16, #tpu.memory_space<vmem>>, vector<1x16x16xbf16>
    %44 = vector.shape_cast %43 : vector<1x16x16xbf16> to vector<16x16xbf16>
    %cst_53 = arith.constant dense<0.000000e+00> : vector<80x16xf32>
    %45 = tpu.matmul %42, %44, %cst_53 {dimension_numbers = #tpu.dot_dimension_numbers<[1], [0], [0], [1], [0, 0, 1, 1], [], []>} : vector<80x16xbf16>, vector<16x16xbf16>, vector<80x16xf32> -> vector<80x16xf32>
    %46 = arith.addf %40, %45 : vector<80x16xf32>
    %c0_54 = arith.constant 0 : index
    %c0_55 = arith.constant 0 : index
    %c11 = arith.constant 11 : index
    %c0_56 = arith.constant 0 : index
    %47 = vector.load %arg1[%c0_54, %c0_55, %c11, %c0_56] : memref<1x4x110x16xbf16, #tpu.memory_space<vmem>>, vector<1x1x80x16xbf16>
    %48 = vector.shape_cast %47 : vector<1x1x80x16xbf16> to vector<80x16xbf16>
    %c8 = arith.constant 8 : index
    %c0_57 = arith.constant 0 : index
    %c0_58 = arith.constant 0 : index
    %49 = vector.load %arg2[%c8, %c0_57, %c0_58] : memref<9x16x16xbf16, #tpu.memory_space<vmem>>, vector<1x16x16xbf16>
    %50 = vector.shape_cast %49 : vector<1x16x16xbf16> to vector<16x16xbf16>
    %cst_59 = arith.constant dense<0.000000e+00> : vector<80x16xf32>
    %51 = tpu.matmul %48, %50, %cst_59 {dimension_numbers = #tpu.dot_dimension_numbers<[1], [0], [0], [1], [0, 0, 1, 1], [], []>} : vector<80x16xbf16>, vector<16x16xbf16>, vector<80x16xf32> -> vector<80x16xf32>
    %52 = arith.addf %46, %51 : vector<80x16xf32>
    %c0_60 = arith.constant 0 : index
    %c0_61 = arith.constant 0 : index
    %53 = vector.load %arg3[%c0_60, %c0_61] : memref<1x16xf32, #tpu.memory_space<vmem>>, vector<1x16xf32>
    %54 = vector.broadcast %53 : vector<1x16xf32> to vector<80x16xf32>
    %55 = arith.addf %52, %54 : vector<80x16xf32>
    %56 = arith.truncf %55 : vector<80x16xf32> to vector<80x16xbf16>
    %c0_62 = arith.constant 0 : index
    %c0_63 = arith.constant 0 : index
    %c0_64 = arith.constant 0 : index
    %57 = vector.load %arg5[%c0_62, %c0_63, %c0_64] : memref<1x80x16xbf16, #tpu.memory_space<vmem>>, vector<1x80x16xbf16>
    %58 = vector.shape_cast %57 : vector<1x80x16xbf16> to vector<80x16xbf16>
    %59 = vector.shape_cast %56 : vector<80x16xbf16> to vector<1x80x16xbf16>
    tpu.vector_store %arg5[%c0_62, %c0_63, %c0_64], %59 {strides = array<i32>} : memref<1x80x16xbf16, #tpu.memory_space<vmem>>, vector<1x80x16xbf16>,
    %c0_65 = arith.constant 0 : index
    %c0_66 = arith.constant 0 : index
    %60 = vector.load %arg4[%c0_65, %c0_66] : memref<80x1xf32, #tpu.memory_space<vmem>>, vector<80x1xf32>
    %61 = vector.broadcast %60 : vector<80x1xf32> to vector<80x16xf32>
    %62 = arith.mulf %55, %61 : vector<80x16xf32>
    %cst_67 = arith.constant dense<0.000000e+00> : vector<16xf32>
    %63 = vector.multi_reduction <add>, %62, %cst_67 [0] : vector<80x16xf32> to vector<16xf32>
    %64 = vector.shape_cast %63 : vector<16xf32> to vector<1x16xf32>
    %c0_68 = arith.constant 0 : index
    %c0_69 = arith.constant 0 : index
    %c0_70 = arith.constant 0 : index
    %65 = vector.load %arg6[%c0_68, %c0_69, %c0_70] : memref<1x1x16xf32, #tpu.memory_space<vmem>>, vector<1x1x16xf32>
    %66 = vector.shape_cast %65 : vector<1x1x16xf32> to vector<1x16xf32>
    %67 = vector.shape_cast %64 : vector<1x16xf32> to vector<1x1x16xf32>
    tpu.vector_store %arg6[%c0_68, %c0_69, %c0_70], %67 {strides = array<i32>} : memref<1x1x16xf32, #tpu.memory_space<vmem>>, vector<1x1x16xf32>,
    %68 = arith.mulf %62, %55 : vector<80x16xf32>
    %cst_71 = arith.constant dense<0.000000e+00> : vector<16xf32>
    %69 = vector.multi_reduction <add>, %68, %cst_71 [0] : vector<80x16xf32> to vector<16xf32>
    %70 = vector.shape_cast %69 : vector<16xf32> to vector<1x16xf32>
    %c0_72 = arith.constant 0 : index
    %c0_73 = arith.constant 0 : index
    %c0_74 = arith.constant 0 : index
    %71 = vector.load %arg7[%c0_72, %c0_73, %c0_74] : memref<1x1x16xf32, #tpu.memory_space<vmem>>, vector<1x1x16xf32>
    %72 = vector.shape_cast %71 : vector<1x1x16xf32> to vector<1x16xf32>
    %73 = vector.shape_cast %70 : vector<1x16xf32> to vector<1x1x16xf32>
    tpu.vector_store %arg7[%c0_72, %c0_73, %c0_74], %73 {strides = array<i32>} : memref<1x1x16xf32, #tpu.memory_space<vmem>>, vector<1x1x16xf32>,
    return
  }
  func.func @transform_0(%arg0: i32) -> (i32, i32, i32, i32) {
    %c0_i32 = arith.constant 0 : i32
    %c0_i32_0 = arith.constant 0 : i32
    %c0_i32_1 = arith.constant 0 : i32
    %c0_i32_2 = arith.constant 0 : i32
    return %arg0, %c0_i32, %c0_i32_0, %c0_i32_1 : i32, i32, i32, i32
  }
  func.func @transform_1(%arg0: i32) -> (i32, i32, i32) {
    %c0_i32 = arith.constant 0 : i32
    %c0_i32_0 = arith.constant 0 : i32
    %c0_i32_1 = arith.constant 0 : i32
    %c0_i32_2 = arith.constant 0 : i32
    return %c0_i32, %c0_i32_0, %c0_i32_1 : i32, i32, i32
  }
  func.func @transform_2(%arg0: i32) -> (i32, i32) {
    %c0_i32 = arith.constant 0 : i32
    %c0_i32_0 = arith.constant 0 : i32
    %c0_i32_1 = arith.constant 0 : i32
    return %c0_i32, %c0_i32_0 : i32, i32
  }
  func.func @transform_3(%arg0: i32) -> (i32, i32) {
    %c0_i32 = arith.constant 0 : i32
    %c0_i32_0 = arith.constant 0 : i32
    %c0_i32_1 = arith.constant 0 : i32
    return %c0_i32, %c0_i32_0 : i32, i32
  }
  func.func @transform_4(%arg0: i32) -> (i32, i32, i32) {
    %c0_i32 = arith.constant 0 : i32
    %c0_i32_0 = arith.constant 0 : i32
    %c0_i32_1 = arith.constant 0 : i32
    return %arg0, %c0_i32, %c0_i32_0 : i32, i32, i32
  }
  func.func @transform_5(%arg0: i32) -> (i32, i32, i32) {
    %c0_i32 = arith.constant 0 : i32
    %c0_i32_0 = arith.constant 0 : i32
    %c0_i32_1 = arith.constant 0 : i32
    return %arg0, %c0_i32, %c0_i32_0 : i32, i32, i32
  }
  func.func @transform_6(%arg0: i32) -> (i32, i32, i32) {
    %c0_i32 = arith.constant 0 : i32
    %c0_i32_0 = arith.constant 0 : i32
    %c0_i32_1 = arith.constant 0 : i32
    return %arg0, %c0_i32, %c0_i32_0 : i32, i32, i32
  }
}

module attributes {stable_mosaic.version = 11 : i64} {
  func.func @kernel(%arg0: i32, %arg1: memref<1x80x16xbf16, #tpu.memory_space<vmem>>, %arg2: memref<2x16xf32, #tpu.memory_space<vmem>>, %arg3: memref<9x16x16xbf16, #tpu.memory_space<vmem>>, %arg4: memref<1x16xf32, #tpu.memory_space<vmem>>, %arg5: memref<80x1xf32, #tpu.memory_space<vmem>>, %arg6: memref<1x80x16xbf16, #tpu.memory_space<vmem>>, %arg7: memref<1x1x16xf32, #tpu.memory_space<vmem>>, %arg8: memref<1x1x16xf32, #tpu.memory_space<vmem>>, %arg9: memref<112x16xbf16, #tpu.memory_space<vmem>>) attributes {dimension_semantics = [#tpu.dimension_semantics<parallel>], iteration_bounds = array<i64: 2>, scalar_prefetch = 0 : i64, scratch_operands = 1 : i64, tpu.core_type = #tpu.core_type<tc>, window_params = [{transform_indices = @transform_0, window_bounds = array<i64: 1, 80, 16>}, {pipeline_mode = #tpu.pipeline_mode<synchronous>, transform_indices = @transform_1, window_bounds = array<i64: 2, 16>}, {pipeline_mode = #tpu.pipeline_mode<synchronous>, transform_indices = @transform_2, window_bounds = array<i64: 9, 16, 16>}, {pipeline_mode = #tpu.pipeline_mode<synchronous>, transform_indices = @transform_3, window_bounds = array<i64: 1, 16>}, {pipeline_mode = #tpu.pipeline_mode<synchronous>, transform_indices = @transform_4, window_bounds = array<i64: 80, 1>}, {transform_indices = @transform_5, window_bounds = array<i64: 1, 80, 16>}, {transform_indices = @transform_6, window_bounds = array<i64: 1, 1, 16>}, {transform_indices = @transform_7, window_bounds = array<i64: 1, 1, 16>}]} {
    %c0 = arith.constant 0 : index
    %c0_0 = arith.constant 0 : index
    %0 = vector.load %arg2[%c0, %c0_0] : memref<2x16xf32, #tpu.memory_space<vmem>>, vector<2x16xf32>
    %c0_1 = arith.constant 0 : index
    %c0_2 = arith.constant 0 : index
    %c0_3 = arith.constant 0 : index
    %1 = vector.load %arg1[%c0_1, %c0_2, %c0_3] : memref<1x80x16xbf16, #tpu.memory_space<vmem>>, vector<1x80x16xbf16>
    %2 = vector.shape_cast %1 : vector<1x80x16xbf16> to vector<80x16xbf16>
    %3 = arith.extf %2 : vector<80x16xbf16> to vector<80x16xf32>
    %4 = vector.extract_strided_slice %0 {offsets = [0, 0], sizes = [1, 16], strides = [1, 1]} : vector<2x16xf32> to vector<1x16xf32>
    %5 = vector.broadcast %4 : vector<1x16xf32> to vector<80x16xf32>
    %6 = arith.mulf %3, %5 : vector<80x16xf32>
    %7 = vector.extract_strided_slice %0 {offsets = [1, 0], sizes = [1, 16], strides = [1, 1]} : vector<2x16xf32> to vector<1x16xf32>
    %8 = vector.broadcast %7 : vector<1x16xf32> to vector<80x16xf32>
    %9 = arith.addf %6, %8 : vector<80x16xf32>
    %cst = arith.constant 0.000000e+00 : f32
    %10 = vector.broadcast %cst : f32 to vector<80x16xf32>
    %11 = arith.cmpf ogt, %9, %10 : vector<80x16xf32>
    %cst_4 = arith.constant 0.000000e+00 : f32
    %12 = vector.broadcast %cst_4 : f32 to vector<80x16xf32>
    %13 = arith.minimumf %9, %12 : vector<80x16xf32>
    %14 = math.exp %13 : vector<80x16xf32>
    %cst_5 = arith.constant 1.000000e+00 : f32
    %15 = vector.broadcast %cst_5 : f32 to vector<80x16xf32>
    %16 = arith.subf %14, %15 : vector<80x16xf32>
    %17 = arith.select %11, %9, %16 : vector<80x16xi1>, vector<80x16xf32>
    %c0_6 = arith.constant 0 : index
    %c0_7 = arith.constant 0 : index
    %18 = vector.load %arg5[%c0_6, %c0_7] : memref<80x1xf32, #tpu.memory_space<vmem>>, vector<80x1xf32>
    %19 = vector.broadcast %18 : vector<80x1xf32> to vector<80x16xf32>
    %20 = arith.mulf %17, %19 : vector<80x16xf32>
    %cst_8 = arith.constant 0.000000e+00 : bf16
    %21 = vector.broadcast %cst_8 : bf16 to vector<112x16xbf16>
    %c0_9 = arith.constant 0 : index
    %c0_10 = arith.constant 0 : index
    %22 = vector.load %arg9[%c0_9, %c0_10] : memref<112x16xbf16, #tpu.memory_space<vmem>>, vector<112x16xbf16>
    tpu.vector_store %arg9[%c0_9, %c0_10], %21 {strides = array<i32>} : memref<112x16xbf16, #tpu.memory_space<vmem>>, vector<112x16xbf16>,
    %23 = arith.truncf %20 : vector<80x16xf32> to vector<80x16xbf16>
    %c16 = arith.constant 16 : index
    %c0_11 = arith.constant 0 : index
    %24 = vector.load %arg9[%c16, %c0_11] : memref<112x16xbf16, #tpu.memory_space<vmem>>, vector<80x16xbf16>
    tpu.vector_store %arg9[%c16, %c0_11], %23 {strides = array<i32>} : memref<112x16xbf16, #tpu.memory_space<vmem>>, vector<80x16xbf16>,
    %c5 = arith.constant 5 : index
    %c0_12 = arith.constant 0 : index
    %25 = vector.load %arg9[%c5, %c0_12] : memref<112x16xbf16, #tpu.memory_space<vmem>>, vector<80x16xbf16>
    %c0_13 = arith.constant 0 : index
    %c0_14 = arith.constant 0 : index
    %c0_15 = arith.constant 0 : index
    %26 = vector.load %arg3[%c0_13, %c0_14, %c0_15] : memref<9x16x16xbf16, #tpu.memory_space<vmem>>, vector<1x16x16xbf16>
    %27 = vector.shape_cast %26 : vector<1x16x16xbf16> to vector<16x16xbf16>
    %cst_16 = arith.constant dense<0.000000e+00> : vector<80x16xf32>
    %28 = tpu.matmul %25, %27, %cst_16 {dimension_numbers = #tpu.dot_dimension_numbers<[1], [0], [0], [1], [0, 0, 1, 1], [], []>} : vector<80x16xbf16>, vector<16x16xbf16>, vector<80x16xf32> -> vector<80x16xf32>
    %c6 = arith.constant 6 : index
    %c0_17 = arith.constant 0 : index
    %29 = vector.load %arg9[%c6, %c0_17] : memref<112x16xbf16, #tpu.memory_space<vmem>>, vector<80x16xbf16>
    %c1 = arith.constant 1 : index
    %c0_18 = arith.constant 0 : index
    %c0_19 = arith.constant 0 : index
    %30 = vector.load %arg3[%c1, %c0_18, %c0_19] : memref<9x16x16xbf16, #tpu.memory_space<vmem>>, vector<1x16x16xbf16>
    %31 = vector.shape_cast %30 : vector<1x16x16xbf16> to vector<16x16xbf16>
    %cst_20 = arith.constant dense<0.000000e+00> : vector<80x16xf32>
    %32 = tpu.matmul %29, %31, %cst_20 {dimension_numbers = #tpu.dot_dimension_numbers<[1], [0], [0], [1], [0, 0, 1, 1], [], []>} : vector<80x16xbf16>, vector<16x16xbf16>, vector<80x16xf32> -> vector<80x16xf32>
    %33 = arith.addf %28, %32 : vector<80x16xf32>
    %c7 = arith.constant 7 : index
    %c0_21 = arith.constant 0 : index
    %34 = vector.load %arg9[%c7, %c0_21] : memref<112x16xbf16, #tpu.memory_space<vmem>>, vector<80x16xbf16>
    %c2 = arith.constant 2 : index
    %c0_22 = arith.constant 0 : index
    %c0_23 = arith.constant 0 : index
    %35 = vector.load %arg3[%c2, %c0_22, %c0_23] : memref<9x16x16xbf16, #tpu.memory_space<vmem>>, vector<1x16x16xbf16>
    %36 = vector.shape_cast %35 : vector<1x16x16xbf16> to vector<16x16xbf16>
    %cst_24 = arith.constant dense<0.000000e+00> : vector<80x16xf32>
    %37 = tpu.matmul %34, %36, %cst_24 {dimension_numbers = #tpu.dot_dimension_numbers<[1], [0], [0], [1], [0, 0, 1, 1], [], []>} : vector<80x16xbf16>, vector<16x16xbf16>, vector<80x16xf32> -> vector<80x16xf32>
    %38 = arith.addf %33, %37 : vector<80x16xf32>
    %c15 = arith.constant 15 : index
    %c0_25 = arith.constant 0 : index
    %39 = vector.load %arg9[%c15, %c0_25] : memref<112x16xbf16, #tpu.memory_space<vmem>>, vector<80x16xbf16>
    %c3 = arith.constant 3 : index
    %c0_26 = arith.constant 0 : index
    %c0_27 = arith.constant 0 : index
    %40 = vector.load %arg3[%c3, %c0_26, %c0_27] : memref<9x16x16xbf16, #tpu.memory_space<vmem>>, vector<1x16x16xbf16>
    %41 = vector.shape_cast %40 : vector<1x16x16xbf16> to vector<16x16xbf16>
    %cst_28 = arith.constant dense<0.000000e+00> : vector<80x16xf32>
    %42 = tpu.matmul %39, %41, %cst_28 {dimension_numbers = #tpu.dot_dimension_numbers<[1], [0], [0], [1], [0, 0, 1, 1], [], []>} : vector<80x16xbf16>, vector<16x16xbf16>, vector<80x16xf32> -> vector<80x16xf32>
    %43 = arith.addf %38, %42 : vector<80x16xf32>
    %c16_29 = arith.constant 16 : index
    %c0_30 = arith.constant 0 : index
    %44 = vector.load %arg9[%c16_29, %c0_30] : memref<112x16xbf16, #tpu.memory_space<vmem>>, vector<80x16xbf16>
    %c4 = arith.constant 4 : index
    %c0_31 = arith.constant 0 : index
    %c0_32 = arith.constant 0 : index
    %45 = vector.load %arg3[%c4, %c0_31, %c0_32] : memref<9x16x16xbf16, #tpu.memory_space<vmem>>, vector<1x16x16xbf16>
    %46 = vector.shape_cast %45 : vector<1x16x16xbf16> to vector<16x16xbf16>
    %cst_33 = arith.constant dense<0.000000e+00> : vector<80x16xf32>
    %47 = tpu.matmul %44, %46, %cst_33 {dimension_numbers = #tpu.dot_dimension_numbers<[1], [0], [0], [1], [0, 0, 1, 1], [], []>} : vector<80x16xbf16>, vector<16x16xbf16>, vector<80x16xf32> -> vector<80x16xf32>
    %48 = arith.addf %43, %47 : vector<80x16xf32>
    %c17 = arith.constant 17 : index
    %c0_34 = arith.constant 0 : index
    %49 = vector.load %arg9[%c17, %c0_34] : memref<112x16xbf16, #tpu.memory_space<vmem>>, vector<80x16xbf16>
    %c5_35 = arith.constant 5 : index
    %c0_36 = arith.constant 0 : index
    %c0_37 = arith.constant 0 : index
    %50 = vector.load %arg3[%c5_35, %c0_36, %c0_37] : memref<9x16x16xbf16, #tpu.memory_space<vmem>>, vector<1x16x16xbf16>
    %51 = vector.shape_cast %50 : vector<1x16x16xbf16> to vector<16x16xbf16>
    %cst_38 = arith.constant dense<0.000000e+00> : vector<80x16xf32>
    %52 = tpu.matmul %49, %51, %cst_38 {dimension_numbers = #tpu.dot_dimension_numbers<[1], [0], [0], [1], [0, 0, 1, 1], [], []>} : vector<80x16xbf16>, vector<16x16xbf16>, vector<80x16xf32> -> vector<80x16xf32>
    %53 = arith.addf %48, %52 : vector<80x16xf32>
    %c25 = arith.constant 25 : index
    %c0_39 = arith.constant 0 : index
    %54 = vector.load %arg9[%c25, %c0_39] : memref<112x16xbf16, #tpu.memory_space<vmem>>, vector<80x16xbf16>
    %c6_40 = arith.constant 6 : index
    %c0_41 = arith.constant 0 : index
    %c0_42 = arith.constant 0 : index
    %55 = vector.load %arg3[%c6_40, %c0_41, %c0_42] : memref<9x16x16xbf16, #tpu.memory_space<vmem>>, vector<1x16x16xbf16>
    %56 = vector.shape_cast %55 : vector<1x16x16xbf16> to vector<16x16xbf16>
    %cst_43 = arith.constant dense<0.000000e+00> : vector<80x16xf32>
    %57 = tpu.matmul %54, %56, %cst_43 {dimension_numbers = #tpu.dot_dimension_numbers<[1], [0], [0], [1], [0, 0, 1, 1], [], []>} : vector<80x16xbf16>, vector<16x16xbf16>, vector<80x16xf32> -> vector<80x16xf32>
    %58 = arith.addf %53, %57 : vector<80x16xf32>
    %c26 = arith.constant 26 : index
    %c0_44 = arith.constant 0 : index
    %59 = vector.load %arg9[%c26, %c0_44] : memref<112x16xbf16, #tpu.memory_space<vmem>>, vector<80x16xbf16>
    %c7_45 = arith.constant 7 : index
    %c0_46 = arith.constant 0 : index
    %c0_47 = arith.constant 0 : index
    %60 = vector.load %arg3[%c7_45, %c0_46, %c0_47] : memref<9x16x16xbf16, #tpu.memory_space<vmem>>, vector<1x16x16xbf16>
    %61 = vector.shape_cast %60 : vector<1x16x16xbf16> to vector<16x16xbf16>
    %cst_48 = arith.constant dense<0.000000e+00> : vector<80x16xf32>
    %62 = tpu.matmul %59, %61, %cst_48 {dimension_numbers = #tpu.dot_dimension_numbers<[1], [0], [0], [1], [0, 0, 1, 1], [], []>} : vector<80x16xbf16>, vector<16x16xbf16>, vector<80x16xf32> -> vector<80x16xf32>
    %63 = arith.addf %58, %62 : vector<80x16xf32>
    %c27 = arith.constant 27 : index
    %c0_49 = arith.constant 0 : index
    %64 = vector.load %arg9[%c27, %c0_49] : memref<112x16xbf16, #tpu.memory_space<vmem>>, vector<80x16xbf16>
    %c8 = arith.constant 8 : index
    %c0_50 = arith.constant 0 : index
    %c0_51 = arith.constant 0 : index
    %65 = vector.load %arg3[%c8, %c0_50, %c0_51] : memref<9x16x16xbf16, #tpu.memory_space<vmem>>, vector<1x16x16xbf16>
    %66 = vector.shape_cast %65 : vector<1x16x16xbf16> to vector<16x16xbf16>
    %cst_52 = arith.constant dense<0.000000e+00> : vector<80x16xf32>
    %67 = tpu.matmul %64, %66, %cst_52 {dimension_numbers = #tpu.dot_dimension_numbers<[1], [0], [0], [1], [0, 0, 1, 1], [], []>} : vector<80x16xbf16>, vector<16x16xbf16>, vector<80x16xf32> -> vector<80x16xf32>
    %68 = arith.addf %63, %67 : vector<80x16xf32>
    %c0_53 = arith.constant 0 : index
    %c0_54 = arith.constant 0 : index
    %69 = vector.load %arg4[%c0_53, %c0_54] : memref<1x16xf32, #tpu.memory_space<vmem>>, vector<1x16xf32>
    %70 = vector.broadcast %69 : vector<1x16xf32> to vector<80x16xf32>
    %71 = arith.addf %68, %70 : vector<80x16xf32>
    %72 = arith.truncf %71 : vector<80x16xf32> to vector<80x16xbf16>
    %c0_55 = arith.constant 0 : index
    %c0_56 = arith.constant 0 : index
    %c0_57 = arith.constant 0 : index
    %73 = vector.load %arg6[%c0_55, %c0_56, %c0_57] : memref<1x80x16xbf16, #tpu.memory_space<vmem>>, vector<1x80x16xbf16>
    %74 = vector.shape_cast %73 : vector<1x80x16xbf16> to vector<80x16xbf16>
    %75 = vector.shape_cast %72 : vector<80x16xbf16> to vector<1x80x16xbf16>
    tpu.vector_store %arg6[%c0_55, %c0_56, %c0_57], %75 {strides = array<i32>} : memref<1x80x16xbf16, #tpu.memory_space<vmem>>, vector<1x80x16xbf16>,
    %c0_58 = arith.constant 0 : index
    %c0_59 = arith.constant 0 : index
    %76 = vector.load %arg5[%c0_58, %c0_59] : memref<80x1xf32, #tpu.memory_space<vmem>>, vector<80x1xf32>
    %77 = vector.broadcast %76 : vector<80x1xf32> to vector<80x16xf32>
    %78 = arith.mulf %71, %77 : vector<80x16xf32>
    %cst_60 = arith.constant dense<0.000000e+00> : vector<16xf32>
    %79 = vector.multi_reduction <add>, %78, %cst_60 [0] : vector<80x16xf32> to vector<16xf32>
    %80 = vector.shape_cast %79 : vector<16xf32> to vector<1x16xf32>
    %c0_61 = arith.constant 0 : index
    %c0_62 = arith.constant 0 : index
    %c0_63 = arith.constant 0 : index
    %81 = vector.load %arg7[%c0_61, %c0_62, %c0_63] : memref<1x1x16xf32, #tpu.memory_space<vmem>>, vector<1x1x16xf32>
    %82 = vector.shape_cast %81 : vector<1x1x16xf32> to vector<1x16xf32>
    %83 = vector.shape_cast %80 : vector<1x16xf32> to vector<1x1x16xf32>
    tpu.vector_store %arg7[%c0_61, %c0_62, %c0_63], %83 {strides = array<i32>} : memref<1x1x16xf32, #tpu.memory_space<vmem>>, vector<1x1x16xf32>,
    %84 = arith.mulf %78, %71 : vector<80x16xf32>
    %cst_64 = arith.constant dense<0.000000e+00> : vector<16xf32>
    %85 = vector.multi_reduction <add>, %84, %cst_64 [0] : vector<80x16xf32> to vector<16xf32>
    %86 = vector.shape_cast %85 : vector<16xf32> to vector<1x16xf32>
    %c0_65 = arith.constant 0 : index
    %c0_66 = arith.constant 0 : index
    %c0_67 = arith.constant 0 : index
    %87 = vector.load %arg8[%c0_65, %c0_66, %c0_67] : memref<1x1x16xf32, #tpu.memory_space<vmem>>, vector<1x1x16xf32>
    %88 = vector.shape_cast %87 : vector<1x1x16xf32> to vector<1x16xf32>
    %89 = vector.shape_cast %86 : vector<1x16xf32> to vector<1x1x16xf32>
    tpu.vector_store %arg8[%c0_65, %c0_66, %c0_67], %89 {strides = array<i32>} : memref<1x1x16xf32, #tpu.memory_space<vmem>>, vector<1x1x16xf32>,
    return
  }
  func.func @transform_0(%arg0: i32) -> (i32, i32, i32) {
    %c0_i32 = arith.constant 0 : i32
    %c0_i32_0 = arith.constant 0 : i32
    %c0_i32_1 = arith.constant 0 : i32
    return %arg0, %c0_i32, %c0_i32_0 : i32, i32, i32
  }
  func.func @transform_1(%arg0: i32) -> (i32, i32) {
    %c0_i32 = arith.constant 0 : i32
    %c0_i32_0 = arith.constant 0 : i32
    %c0_i32_1 = arith.constant 0 : i32
    return %c0_i32, %c0_i32_0 : i32, i32
  }
  func.func @transform_2(%arg0: i32) -> (i32, i32, i32) {
    %c0_i32 = arith.constant 0 : i32
    %c0_i32_0 = arith.constant 0 : i32
    %c0_i32_1 = arith.constant 0 : i32
    %c0_i32_2 = arith.constant 0 : i32
    return %c0_i32, %c0_i32_0, %c0_i32_1 : i32, i32, i32
  }
  func.func @transform_3(%arg0: i32) -> (i32, i32) {
    %c0_i32 = arith.constant 0 : i32
    %c0_i32_0 = arith.constant 0 : i32
    %c0_i32_1 = arith.constant 0 : i32
    return %c0_i32, %c0_i32_0 : i32, i32
  }
  func.func @transform_4(%arg0: i32) -> (i32, i32) {
    %c0_i32 = arith.constant 0 : i32
    %c0_i32_0 = arith.constant 0 : i32
    %c0_i32_1 = arith.constant 0 : i32
    return %c0_i32, %c0_i32_0 : i32, i32
  }
  func.func @transform_5(%arg0: i32) -> (i32, i32, i32) {
    %c0_i32 = arith.constant 0 : i32
    %c0_i32_0 = arith.constant 0 : i32
    %c0_i32_1 = arith.constant 0 : i32
    return %arg0, %c0_i32, %c0_i32_0 : i32, i32, i32
  }
  func.func @transform_6(%arg0: i32) -> (i32, i32, i32) {
    %c0_i32 = arith.constant 0 : i32
    %c0_i32_0 = arith.constant 0 : i32
    %c0_i32_1 = arith.constant 0 : i32
    return %arg0, %c0_i32, %c0_i32_0 : i32, i32, i32
  }
  func.func @transform_7(%arg0: i32) -> (i32, i32, i32) {
    %c0_i32 = arith.constant 0 : i32
    %c0_i32_0 = arith.constant 0 : i32
    %c0_i32_1 = arith.constant 0 : i32
    return %arg0, %c0_i32, %c0_i32_0 : i32, i32, i32
  }
}

module attributes {stable_mosaic.version = 11 : i64} {
  func.func @kernel(%arg0: i32, %arg1: memref<1x80x16xbf16, #tpu.memory_space<vmem>>, %arg2: memref<2x16xf32, #tpu.memory_space<vmem>>, %arg3: memref<1x1x110x16xbf16, #tpu.memory_space<vmem>>, %arg4: memref<16x16xbf16, #tpu.memory_space<vmem>>, %arg5: memref<1x16xf32, #tpu.memory_space<vmem>>, %arg6: memref<80x1xf32, #tpu.memory_space<vmem>>, %arg7: memref<1x80x16xbf16, #tpu.memory_space<vmem>>, %arg8: memref<1x1x16xf32, #tpu.memory_space<vmem>>, %arg9: memref<1x1x16xf32, #tpu.memory_space<vmem>>) attributes {dimension_semantics = [#tpu.dimension_semantics<parallel>], iteration_bounds = array<i64: 2>, scalar_prefetch = 0 : i64, scratch_operands = 0 : i64, tpu.core_type = #tpu.core_type<tc>, window_params = [{transform_indices = @transform_0, window_bounds = array<i64: 1, 80, 16>}, {pipeline_mode = #tpu.pipeline_mode<synchronous>, transform_indices = @transform_1, window_bounds = array<i64: 2, 16>}, {transform_indices = @transform_2, window_bounds = array<i64: 1, 1, 110, 16>}, {pipeline_mode = #tpu.pipeline_mode<synchronous>, transform_indices = @transform_3, window_bounds = array<i64: 16, 16>}, {pipeline_mode = #tpu.pipeline_mode<synchronous>, transform_indices = @transform_4, window_bounds = array<i64: 1, 16>}, {pipeline_mode = #tpu.pipeline_mode<synchronous>, transform_indices = @transform_5, window_bounds = array<i64: 80, 1>}, {transform_indices = @transform_6, window_bounds = array<i64: 1, 80, 16>}, {transform_indices = @transform_7, window_bounds = array<i64: 1, 1, 16>}, {transform_indices = @transform_8, window_bounds = array<i64: 1, 1, 16>}]} {
    %c0 = arith.constant 0 : index
    %c0_0 = arith.constant 0 : index
    %0 = vector.load %arg2[%c0, %c0_0] : memref<2x16xf32, #tpu.memory_space<vmem>>, vector<2x16xf32>
    %c0_1 = arith.constant 0 : index
    %c0_2 = arith.constant 0 : index
    %c0_3 = arith.constant 0 : index
    %1 = vector.load %arg1[%c0_1, %c0_2, %c0_3] : memref<1x80x16xbf16, #tpu.memory_space<vmem>>, vector<1x80x16xbf16>
    %2 = vector.shape_cast %1 : vector<1x80x16xbf16> to vector<80x16xbf16>
    %3 = arith.extf %2 : vector<80x16xbf16> to vector<80x16xf32>
    %4 = vector.extract_strided_slice %0 {offsets = [0, 0], sizes = [1, 16], strides = [1, 1]} : vector<2x16xf32> to vector<1x16xf32>
    %5 = vector.broadcast %4 : vector<1x16xf32> to vector<80x16xf32>
    %6 = arith.mulf %3, %5 : vector<80x16xf32>
    %7 = vector.extract_strided_slice %0 {offsets = [1, 0], sizes = [1, 16], strides = [1, 1]} : vector<2x16xf32> to vector<1x16xf32>
    %8 = vector.broadcast %7 : vector<1x16xf32> to vector<80x16xf32>
    %9 = arith.addf %6, %8 : vector<80x16xf32>
    %cst = arith.constant 0.000000e+00 : f32
    %10 = vector.broadcast %cst : f32 to vector<80x16xf32>
    %11 = arith.cmpf ogt, %9, %10 : vector<80x16xf32>
    %cst_4 = arith.constant 0.000000e+00 : f32
    %12 = vector.broadcast %cst_4 : f32 to vector<80x16xf32>
    %13 = arith.minimumf %9, %12 : vector<80x16xf32>
    %14 = math.exp %13 : vector<80x16xf32>
    %cst_5 = arith.constant 1.000000e+00 : f32
    %15 = vector.broadcast %cst_5 : f32 to vector<80x16xf32>
    %16 = arith.subf %14, %15 : vector<80x16xf32>
    %17 = arith.select %11, %9, %16 : vector<80x16xi1>, vector<80x16xf32>
    %c0_6 = arith.constant 0 : index
    %c0_7 = arith.constant 0 : index
    %c0_8 = arith.constant 0 : index
    %c0_9 = arith.constant 0 : index
    %18 = vector.load %arg3[%c0_6, %c0_7, %c0_8, %c0_9] : memref<1x1x110x16xbf16, #tpu.memory_space<vmem>>, vector<1x1x80x16xbf16>
    %19 = vector.shape_cast %18 : vector<1x1x80x16xbf16> to vector<80x16xbf16>
    %c0_10 = arith.constant 0 : index
    %c0_11 = arith.constant 0 : index
    %20 = vector.load %arg4[%c0_10, %c0_11] : memref<16x16xbf16, #tpu.memory_space<vmem>>, vector<16x16xbf16>
    %cst_12 = arith.constant dense<0.000000e+00> : vector<80x16xf32>
    %21 = tpu.matmul %19, %20, %cst_12 {dimension_numbers = #tpu.dot_dimension_numbers<[1], [0], [0], [1], [0, 0, 1, 1], [], []>} : vector<80x16xbf16>, vector<16x16xbf16>, vector<80x16xf32> -> vector<80x16xf32>
    %c0_13 = arith.constant 0 : index
    %c0_14 = arith.constant 0 : index
    %22 = vector.load %arg5[%c0_13, %c0_14] : memref<1x16xf32, #tpu.memory_space<vmem>>, vector<1x16xf32>
    %23 = vector.broadcast %22 : vector<1x16xf32> to vector<80x16xf32>
    %24 = arith.addf %21, %23 : vector<80x16xf32>
    %25 = arith.addf %17, %24 : vector<80x16xf32>
    %26 = arith.truncf %25 : vector<80x16xf32> to vector<80x16xbf16>
    %c0_15 = arith.constant 0 : index
    %c0_16 = arith.constant 0 : index
    %c0_17 = arith.constant 0 : index
    %27 = vector.load %arg7[%c0_15, %c0_16, %c0_17] : memref<1x80x16xbf16, #tpu.memory_space<vmem>>, vector<1x80x16xbf16>
    %28 = vector.shape_cast %27 : vector<1x80x16xbf16> to vector<80x16xbf16>
    %29 = vector.shape_cast %26 : vector<80x16xbf16> to vector<1x80x16xbf16>
    tpu.vector_store %arg7[%c0_15, %c0_16, %c0_17], %29 {strides = array<i32>} : memref<1x80x16xbf16, #tpu.memory_space<vmem>>, vector<1x80x16xbf16>,
    %c0_18 = arith.constant 0 : index
    %c0_19 = arith.constant 0 : index
    %30 = vector.load %arg6[%c0_18, %c0_19] : memref<80x1xf32, #tpu.memory_space<vmem>>, vector<80x1xf32>
    %31 = vector.broadcast %30 : vector<80x1xf32> to vector<80x16xf32>
    %32 = arith.mulf %25, %31 : vector<80x16xf32>
    %cst_20 = arith.constant dense<0.000000e+00> : vector<16xf32>
    %33 = vector.multi_reduction <add>, %32, %cst_20 [0] : vector<80x16xf32> to vector<16xf32>
    %34 = vector.shape_cast %33 : vector<16xf32> to vector<1x16xf32>
    %c0_21 = arith.constant 0 : index
    %c0_22 = arith.constant 0 : index
    %c0_23 = arith.constant 0 : index
    %35 = vector.load %arg8[%c0_21, %c0_22, %c0_23] : memref<1x1x16xf32, #tpu.memory_space<vmem>>, vector<1x1x16xf32>
    %36 = vector.shape_cast %35 : vector<1x1x16xf32> to vector<1x16xf32>
    %37 = vector.shape_cast %34 : vector<1x16xf32> to vector<1x1x16xf32>
    tpu.vector_store %arg8[%c0_21, %c0_22, %c0_23], %37 {strides = array<i32>} : memref<1x1x16xf32, #tpu.memory_space<vmem>>, vector<1x1x16xf32>,
    %38 = arith.mulf %32, %25 : vector<80x16xf32>
    %cst_24 = arith.constant dense<0.000000e+00> : vector<16xf32>
    %39 = vector.multi_reduction <add>, %38, %cst_24 [0] : vector<80x16xf32> to vector<16xf32>
    %40 = vector.shape_cast %39 : vector<16xf32> to vector<1x16xf32>
    %c0_25 = arith.constant 0 : index
    %c0_26 = arith.constant 0 : index
    %c0_27 = arith.constant 0 : index
    %41 = vector.load %arg9[%c0_25, %c0_26, %c0_27] : memref<1x1x16xf32, #tpu.memory_space<vmem>>, vector<1x1x16xf32>
    %42 = vector.shape_cast %41 : vector<1x1x16xf32> to vector<1x16xf32>
    %43 = vector.shape_cast %40 : vector<1x16xf32> to vector<1x1x16xf32>
    tpu.vector_store %arg9[%c0_25, %c0_26, %c0_27], %43 {strides = array<i32>} : memref<1x1x16xf32, #tpu.memory_space<vmem>>, vector<1x1x16xf32>,
    return
  }
  func.func @transform_0(%arg0: i32) -> (i32, i32, i32) {
    %c0_i32 = arith.constant 0 : i32
    %c0_i32_0 = arith.constant 0 : i32
    %c0_i32_1 = arith.constant 0 : i32
    return %arg0, %c0_i32, %c0_i32_0 : i32, i32, i32
  }
  func.func @transform_1(%arg0: i32) -> (i32, i32) {
    %c0_i32 = arith.constant 0 : i32
    %c0_i32_0 = arith.constant 0 : i32
    %c0_i32_1 = arith.constant 0 : i32
    return %c0_i32, %c0_i32_0 : i32, i32
  }
  func.func @transform_2(%arg0: i32) -> (i32, i32, i32, i32) {
    %c3_i32 = arith.constant 3 : i32
    %c0_i32 = arith.constant 0 : i32
    %c0_i32_0 = arith.constant 0 : i32
    %c0_i32_1 = arith.constant 0 : i32
    return %arg0, %c3_i32, %c0_i32, %c0_i32_0 : i32, i32, i32, i32
  }
  func.func @transform_3(%arg0: i32) -> (i32, i32) {
    %c0_i32 = arith.constant 0 : i32
    %c0_i32_0 = arith.constant 0 : i32
    %c0_i32_1 = arith.constant 0 : i32
    return %c0_i32, %c0_i32_0 : i32, i32
  }
  func.func @transform_4(%arg0: i32) -> (i32, i32) {
    %c0_i32 = arith.constant 0 : i32
    %c0_i32_0 = arith.constant 0 : i32
    %c0_i32_1 = arith.constant 0 : i32
    return %c0_i32, %c0_i32_0 : i32, i32
  }
  func.func @transform_5(%arg0: i32) -> (i32, i32) {
    %c0_i32 = arith.constant 0 : i32
    %c0_i32_0 = arith.constant 0 : i32
    %c0_i32_1 = arith.constant 0 : i32
    return %c0_i32, %c0_i32_0 : i32, i32
  }
  func.func @transform_6(%arg0: i32) -> (i32, i32, i32) {
    %c0_i32 = arith.constant 0 : i32
    %c0_i32_0 = arith.constant 0 : i32
    %c0_i32_1 = arith.constant 0 : i32
    return %arg0, %c0_i32, %c0_i32_0 : i32, i32, i32
  }
  func.func @transform_7(%arg0: i32) -> (i32, i32, i32) {
    %c0_i32 = arith.constant 0 : i32
    %c0_i32_0 = arith.constant 0 : i32
    %c0_i32_1 = arith.constant 0 : i32
    return %arg0, %c0_i32, %c0_i32_0 : i32, i32, i32
  }
  func.func @transform_8(%arg0: i32) -> (i32, i32, i32) {
    %c0_i32 = arith.constant 0 : i32
    %c0_i32_0 = arith.constant 0 : i32
    %c0_i32_1 = arith.constant 0 : i32
    return %arg0, %c0_i32, %c0_i32_0 : i32, i32, i32
  }
}

module attributes {stable_mosaic.version = 11 : i64} {
  func.func @kernel(%arg0: i32, %arg1: memref<1x80x16xbf16, #tpu.memory_space<vmem>>, %arg2: memref<2x16xf32, #tpu.memory_space<vmem>>, %arg3: memref<1x80x16xf32, #tpu.memory_space<vmem>>) attributes {dimension_semantics = [#tpu.dimension_semantics<parallel>], iteration_bounds = array<i64: 2>, scalar_prefetch = 0 : i64, scratch_operands = 0 : i64, tpu.core_type = #tpu.core_type<tc>, window_params = [{transform_indices = @transform_0, window_bounds = array<i64: 1, 80, 16>}, {pipeline_mode = #tpu.pipeline_mode<synchronous>, transform_indices = @transform_1, window_bounds = array<i64: 2, 16>}, {transform_indices = @transform_2, window_bounds = array<i64: 1, 80, 16>}]} {
    %c0 = arith.constant 0 : index
    %c0_0 = arith.constant 0 : index
    %0 = vector.load %arg2[%c0, %c0_0] : memref<2x16xf32, #tpu.memory_space<vmem>>, vector<2x16xf32>
    %c0_1 = arith.constant 0 : index
    %c0_2 = arith.constant 0 : index
    %c0_3 = arith.constant 0 : index
    %1 = vector.load %arg1[%c0_1, %c0_2, %c0_3] : memref<1x80x16xbf16, #tpu.memory_space<vmem>>, vector<1x80x16xbf16>
    %2 = vector.shape_cast %1 : vector<1x80x16xbf16> to vector<80x16xbf16>
    %3 = arith.extf %2 : vector<80x16xbf16> to vector<80x16xf32>
    %4 = vector.extract_strided_slice %0 {offsets = [0, 0], sizes = [1, 16], strides = [1, 1]} : vector<2x16xf32> to vector<1x16xf32>
    %5 = vector.broadcast %4 : vector<1x16xf32> to vector<80x16xf32>
    %6 = arith.mulf %3, %5 : vector<80x16xf32>
    %7 = vector.extract_strided_slice %0 {offsets = [1, 0], sizes = [1, 16], strides = [1, 1]} : vector<2x16xf32> to vector<1x16xf32>
    %8 = vector.broadcast %7 : vector<1x16xf32> to vector<80x16xf32>
    %9 = arith.addf %6, %8 : vector<80x16xf32>
    %cst = arith.constant 0.000000e+00 : f32
    %10 = vector.broadcast %cst : f32 to vector<80x16xf32>
    %11 = arith.cmpf ogt, %9, %10 : vector<80x16xf32>
    %cst_4 = arith.constant 0.000000e+00 : f32
    %12 = vector.broadcast %cst_4 : f32 to vector<80x16xf32>
    %13 = arith.minimumf %9, %12 : vector<80x16xf32>
    %14 = math.exp %13 : vector<80x16xf32>
    %cst_5 = arith.constant 1.000000e+00 : f32
    %15 = vector.broadcast %cst_5 : f32 to vector<80x16xf32>
    %16 = arith.subf %14, %15 : vector<80x16xf32>
    %17 = arith.select %11, %9, %16 : vector<80x16xi1>, vector<80x16xf32>
    %c0_6 = arith.constant 0 : index
    %c0_7 = arith.constant 0 : index
    %c0_8 = arith.constant 0 : index
    %18 = vector.load %arg3[%c0_6, %c0_7, %c0_8] : memref<1x80x16xf32, #tpu.memory_space<vmem>>, vector<1x80x16xf32>
    %19 = vector.shape_cast %18 : vector<1x80x16xf32> to vector<80x16xf32>
    %20 = vector.shape_cast %17 : vector<80x16xf32> to vector<1x80x16xf32>
    tpu.vector_store %arg3[%c0_6, %c0_7, %c0_8], %20 {strides = array<i32>} : memref<1x80x16xf32, #tpu.memory_space<vmem>>, vector<1x80x16xf32>,
    return
  }
  func.func @transform_0(%arg0: i32) -> (i32, i32, i32) {
    %c0_i32 = arith.constant 0 : i32
    %c0_i32_0 = arith.constant 0 : i32
    %c0_i32_1 = arith.constant 0 : i32
    return %arg0, %c0_i32, %c0_i32_0 : i32, i32, i32
  }
  func.func @transform_1(%arg0: i32) -> (i32, i32) {
    %c0_i32 = arith.constant 0 : i32
    %c0_i32_0 = arith.constant 0 : i32
    %c0_i32_1 = arith.constant 0 : i32
    return %c0_i32, %c0_i32_0 : i32, i32
  }
  func.func @transform_2(%arg0: i32) -> (i32, i32, i32) {
    %c0_i32 = arith.constant 0 : i32
    %c0_i32_0 = arith.constant 0 : i32
    %c0_i32_1 = arith.constant 0 : i32
    return %arg0, %c0_i32, %c0_i32_0 : i32, i32, i32
  }
}

</mosaic_0001>

<llo_original>
// kernel: resconv_basic_forward.7
$region0: #{resconv_basic_forward.7}
  #allocation0 [shape = 'u32[]', space=smem, size = 0x4, offset = 0x4, fixed_abs, tag = 'smem constant byte address 0x4 - core index']
  #allocation1 [shape = 'u32[72,128]{1,0:T(1,128)}', space=vmem, size = 0x9000, scoped, tag = 'internal scratch']
  %s0 = inlined_call_operand.vmem [shape: bf16[2,80,16], index: 0, kind: input, shape index: {}]
  %s1 = inlined_call_operand.vmem [shape: f32[2,16], index: 1, kind: input, shape index: {}]
  %s2 = inlined_call_operand.vmem [shape: f32[2,80,16], index: 2, kind: output, shape index: {}]
  %s3 = sld [smem:[#allocation0]]
  $region41: #{resconv_basic_forward.7} parent=0
    _
  %s5 = ssub.s32 1, %s3
  %s6 = scalar_select 0, %s5, %s3
  loop: start=0, step=1, limit=4
  $region2: #{resconv_basic_forward.7} parent=0 // loop_pre_header
    _
  $region3: #{resconv_basic_forward.7} parent=0 // loop_header
    %s8 = sphi 0, %s12
    %p9 = scmp.ge.s32.totalorder %s8, 4
    %s18 = sphi 0, %s20
    %s21 = sphi 0, %s18
    %s22 = sphi 0, %s21
    %s38 = sphi 0, %s22
    %s42 = sphi 0, %s42
    %s44 = sphi 0, %s42
    %s45 = sphi 0, %s44
    %s59 = sphi 0, %s45
    %s65 = sphi 0, %s67
    %s68 = sphi 0, %s65
    %s69 = sphi 0, %s68
    %s85 = sphi 0, %s69
  $region4: #{resconv_basic_forward.7} parent=0 // loop_header_branch
    %11 = sbr.rel (%p9) target = $region8
  $region5: #{resconv_basic_forward.7} parent=0 // loop_body
    %s13 = ssub.s32 %s8, 1
    %s14 = ssub.s32 %s8, 2
    %s15 = sadd.s32 %s8, 1
    %s16 = ssub.s32 %s8, %s15
    %p17 = scmp.eq.s32.totalorder %s16, 0
    %s19 = sadd.s32 %s18, 1
    %s20 = scalar_select %p17, %s18, %s19
    %p23 = pneg %p17
    %p24 = scmp.eq.s32.totalorder %s8, 1
    %p25 = por %p23, %p24
    %p26 = scmp.ne.s32.totalorder %s18, %s21
    %p27 = scmp.eq.s32.totalorder %s8, 0
    %p28 = por %p26, %p27
    %p29 = scmp.ne.s32.totalorder %s18, %s21
    %p30 = scmp.eq.s32.totalorder %s13, 1
    %p31 = por %p29, %p30
    %p32 = scmp.ne.s32.totalorder %s21, %s22
    %p33 = scmp.eq.s32.totalorder %s13, 0
    %p34 = por %p32, %p33
    %p35 = scmp.ne.s32.totalorder %s21, %s22
    %p36 = scmp.eq.s32.totalorder %s14, 1
    %p37 = por %p35, %p36
    %p39 = scmp.ne.s32.totalorder %s22, %s38
    %p40 = scmp.eq.s32.totalorder %s14, 0
    %p41 = por %p39, %p40
    %s43 = sadd.s32 %s42, 1
    %p46 = scmp.eq.s32.totalorder %s8, 1
    %p47 = scmp.ne.s32.totalorder %s42, %s44
    %p48 = scmp.eq.s32.totalorder %s8, 0
    %p49 = por %p47, %p48
    %p50 = scmp.ne.s32.totalorder %s42, %s44
    %p51 = scmp.eq.s32.totalorder %s13, 1
    %p52 = por %p50, %p51
    %p53 = scmp.ne.s32.totalorder %s44, %s45
    %p54 = scmp.eq.s32.totalorder %s13, 0
    %p55 = por %p53, %p54
    %p56 = scmp.ne.s32.totalorder %s44, %s45
    %p57 = scmp.eq.s32.totalorder %s14, 1
    %p58 = por %p56, %p57
    %p60 = scmp.ne.s32.totalorder %s45, %s59
    %p61 = scmp.eq.s32.totalorder %s14, 0
    %p62 = por %p60, %p61
    %s63 = ssub.s32 %s8, %s15
    %p64 = scmp.eq.s32.totalorder %s63, 0
    %s66 = sadd.s32 %s65, 1
    %s67 = scalar_select %p64, %s65, %s66
    %p70 = pneg %p64
    %p71 = scmp.eq.s32.totalorder %s8, 1
    %p72 = por %p70, %p71
    %p73 = scmp.ne.s32.totalorder %s65, %s68
    %p74 = scmp.eq.s32.totalorder %s8, 0
    %p75 = por %p73, %p74
    %p76 = scmp.ne.s32.totalorder %s65, %s68
    %p77 = scmp.eq.s32.totalorder %s13, 1
    %p78 = por %p76, %p77
    %p79 = scmp.ne.s32.totalorder %s68, %s69
    %p80 = scmp.eq.s32.totalorder %s13, 0
    %p81 = por %p79, %p80
    %p82 = scmp.ne.s32.totalorder %s68, %s69
    %p83 = scmp.eq.s32.totalorder %s14, 1
    %p84 = por %p82, %p83
    %p86 = scmp.ne.s32.totalorder %s69, %s85
    %p87 = scmp.eq.s32.totalorder %s14, 0
    %p88 = por %p86, %p87
    %p89 = scmp.le.s32.totalorder 1, %s8
    %p90 = scmp.lt.s32.totalorder %s8, 3
    %p91 = pnand %p89, %p90
    %p92 = pneg %p91
    // Predicated region
    $region9: #{resconv_basic_forward.7} parent=5 // pred_check
      _
    $region10: #{resconv_basic_forward.7} parent=5 // pred_check_branch
      %94 = sbr.rel (%p91) target = $region12
    $region11: #{resconv_basic_forward.7} parent=5 // pred_region
      %s95 = ssub.s32 %s8, 1
      // Predicated region
      $region13: #{resconv_basic_forward.7} parent=11 // pred_check
        %p96 = pneg %p55
      $region14: #{resconv_basic_forward.7} parent=11 // pred_check_branch
        %98 = sbr.rel (%p96) target = $region16
      $region15: #{resconv_basic_forward.7} parent=11 // pred_region
        _
      $region16: #{resconv_basic_forward.7} parent=11 // pred_fallthru
        _
    $region12: #{resconv_basic_forward.7} parent=5 // pred_fallthru
      _
    %p99 = scmp.lt.s32.totalorder %s8, 2
    // Predicated region
    $region17: #{resconv_basic_forward.7} parent=5 // pred_check
      %p100 = pneg %p99
    $region18: #{resconv_basic_forward.7} parent=5 // pred_check_branch
      %102 = sbr.rel (%p100) target = $region20
    $region19: #{resconv_basic_forward.7} parent=5 // pred_region
      // Predicated region
      $region21: #{resconv_basic_forward.7} parent=19 // pred_check
        %p103 = pneg %p28
      $region22: #{resconv_basic_forward.7} parent=19 // pred_check_branch
        %105 = sbr.rel (%p103) target = $region24
      $region23: #{resconv_basic_forward.7} parent=19 // pred_region
        %p106 = scmp.lt.s32.totalorder %s8, 1
        %s107 = scalar_select %p106, %s8, 1
        %s108 = smul.addr %s107, 10
        %s109 = smul.addr %s108, 4
        %s110 = scalar_lea.vmem %s0, %s109
      $region24: #{resconv_basic_forward.7} parent=19 // pred_fallthru
        _
    $region20: #{resconv_basic_forward.7} parent=5 // pred_fallthru
      _
    %p111 = scmp.le.s32.totalorder 1, %s8
    %p112 = scmp.lt.s32.totalorder %s8, 3
    %p113 = pnand %p111, %p112
    %p114 = pneg %p113
    // Predicated region
    $region25: #{resconv_basic_forward.7} parent=5 // pred_check
      _
    $region26: #{resconv_basic_forward.7} parent=5 // pred_check_branch
      %116 = sbr.rel (%p113) target = $region28
    $region27: #{resconv_basic_forward.7} parent=5 // pred_region
      %s117 = ssub.s32 %s8, 1
      %p118 = scmp.lt.s32.totalorder %s13, 1
      %s119 = scalar_select %p118, %s13, 1
      %s120 = smul.addr %s119, 10
      %s121 = smul.addr %s120, 4
      %s122 = scalar_lea.vmem %s0, %s121
      %p123 = pneg %p34
      %p124 = pneg %p31
      %p125 = pneg %p55
      %p126 = pneg %p52
      %p127 = pneg %p81
      %p128 = pneg %p78
      %p129 = scmp.lt.s32.totalorder %s13, 1
      %s130 = scalar_select %p129, %s13, 1
      %s131 = smul.addr %s130, 10
      %s132 = smul.addr %s131, 8
      %s133 = scalar_lea.vmem %s2, %s132
      %p134 = scmp.lt.s32.totalorder %s13, 1
      %s135 = scalar_select %p134, %s13, 1
      %s136 = smul.addr %s135, 10
      %s137 = smul.addr %s136, 4
      %s138 = scalar_lea.vmem %s0, %s137
      %p139 = scmp.lt.s32.totalorder %s13, 1
      %s140 = scalar_select %p139, %s13, 1
      %s141 = smul.addr %s140, 10
      %s142 = smul.addr %s141, 8
      %s143 = scalar_lea.vmem %s2, %s142
      %v144 = vld [vmem:[%s1] sm:$0x3]
      %v145 = vld [vmem:[%s138] sm:$0xf]
      %v146 = vld [vmem:[%s138 + $0x4] sm:$0xf]
      %v147 = vld [vmem:[%s138 + $0x8] sm:$0xf]
      %v148 = vld [vmem:[%s138 + $0xc] sm:$0xf]
      %v149 = vld [vmem:[%s138 + $0x10] sm:$0xf]
      %v150 = vld [vmem:[%s138 + $0x14] sm:$0xf]
      %v151 = vld [vmem:[%s138 + $0x18] sm:$0xf]
      %v152 = vld [vmem:[%s138 + $0x1c] sm:$0xf]
      %v153 = vld [vmem:[%s138 + $0x20] sm:$0xf]
      %v154 = vld [vmem:[%s138 + $0x24] sm:$0xf]
      %v155 = vunpack.c.l.bf16 %v145
      %v156 = vunpack.c.l.bf16 %v146
      %v157 = vunpack.c.l.bf16 %v147
      %v158 = vunpack.c.l.bf16 %v148
      %v159 = vunpack.c.l.bf16 %v149
      %v160 = vunpack.c.l.bf16 %v150
      %v161 = vunpack.c.l.bf16 %v151
      %v162 = vunpack.c.l.bf16 %v152
      %v163 = vunpack.c.l.bf16 %v153
      %v164 = vunpack.c.l.bf16 %v154
      %v165 = vperm.slane %v144, 0
      %v166 = vmul.f32 %v155, %v165
      %v167 = vmul.f32 %v156, %v165
      %v168 = vmul.f32 %v157, %v165
      %v169 = vmul.f32 %v158, %v165
      %v170 = vmul.f32 %v159, %v165
      %v171 = vmul.f32 %v160, %v165
      %v172 = vmul.f32 %v161, %v165
      %v173 = vmul.f32 %v162, %v165
      %v174 = vmul.f32 %v163, %v165
      %v175 = vmul.f32 %v164, %v165
      %v176 = vperm.slane %v144, 1
      %v177 = vadd.f32 %v166, %v176
      %v178 = vadd.f32 %v167, %v176
      %v179 = vadd.f32 %v168, %v176
      %v180 = vadd.f32 %v169, %v176
      %v181 = vadd.f32 %v170, %v176
      %v182 = vadd.f32 %v171, %v176
      %v183 = vadd.f32 %v172, %v176
      %v184 = vadd.f32 %v173, %v176
      %v185 = vadd.f32 %v174, %v176
      %v186 = vadd.f32 %v175, %v176
      %vm187 = vcmp.gt.f32.partialorder %v177, 0.0
      %vm188 = vcmp.gt.f32.partialorder %v178, 0.0
      %vm189 = vcmp.gt.f32.partialorder %v179, 0.0
      %vm190 = vcmp.gt.f32.partialorder %v180, 0.0
      %vm191 = vcmp.gt.f32.partialorder %v181, 0.0
      %vm192 = vcmp.gt.f32.partialorder %v182, 0.0
      %vm193 = vcmp.gt.f32.partialorder %v183, 0.0
      %vm194 = vcmp.gt.f32.partialorder %v184, 0.0
      %vm195 = vcmp.gt.f32.partialorder %v185, 0.0
      %vm196 = vcmp.gt.f32.partialorder %v186, 0.0
      %v197 = vmin.f32 %v177, 0.0
      %v198 = vmin.f32 %v178, 0.0
      %v199 = vmin.f32 %v179, 0.0
      %v200 = vmin.f32 %v180, 0.0
      %v201 = vmin.f32 %v181, 0.0
      %v202 = vmin.f32 %v182, 0.0
      %v203 = vmin.f32 %v183, 0.0
      %v204 = vmin.f32 %v184, 0.0
      %v205 = vmin.f32 %v185, 0.0
      %v206 = vmin.f32 %v186, 0.0
      %v207 = vmul.f32 %v197, 1.442695
      %v208 = vpow.pop %v207
      %v209 = vmul.f32 %v198, 1.442695
      %v210 = vpow.pop %v209
      %v211 = vmul.f32 %v199, 1.442695
      %v212 = vpow.pop %v211
      %v213 = vmul.f32 %v200, 1.442695
      %v214 = vpow.pop %v213
      %v215 = vmul.f32 %v201, 1.442695
      %v216 = vpow.pop %v215
      %v217 = vmul.f32 %v202, 1.442695
      %v218 = vpow.pop %v217
      %v219 = vmul.f32 %v203, 1.442695
      %v220 = vpow.pop %v219
      %v221 = vmul.f32 %v204, 1.442695
      %v222 = vpow.pop %v221
      %v223 = vmul.f32 %v205, 1.442695
      %v224 = vpow.pop %v223
      %v225 = vmul.f32 %v206, 1.442695
      %v226 = vpow.pop %v225
      %v227 = vsub.f32 %v208, 1.0
      %v228 = vsub.f32 %v210, 1.0
      %v229 = vsub.f32 %v212, 1.0
      %v230 = vsub.f32 %v214, 1.0
      %v231 = vsub.f32 %v216, 1.0
      %v232 = vsub.f32 %v218, 1.0
      %v233 = vsub.f32 %v220, 1.0
      %v234 = vsub.f32 %v222, 1.0
      %v235 = vsub.f32 %v224, 1.0
      %v236 = vsub.f32 %v226, 1.0
      %v237 = vsel %vm187, %v177, %v227
      %v238 = vsel %vm188, %v178, %v228
      %v239 = vsel %vm189, %v179, %v229
      %v240 = vsel %vm190, %v180, %v230
      %v241 = vsel %vm191, %v181, %v231
      %v242 = vsel %vm192, %v182, %v232
      %v243 = vsel %vm193, %v183, %v233
      %v244 = vsel %vm194, %v184, %v234
      %v245 = vsel %vm195, %v185, %v235
      %v246 = vsel %vm196, %v186, %v236
      %vm247 = vcmask 130048
      %248 = vst.msk [vmem:[%s143] sm:$0xff] %vm247, %v237
      %249 = vst.msk [vmem:[%s143 + $0x8] sm:$0xff] %vm247, %v238
      %250 = vst.msk [vmem:[%s143 + $0x10] sm:$0xff] %vm247, %v239
      %251 = vst.msk [vmem:[%s143 + $0x18] sm:$0xff] %vm247, %v240
      %252 = vst.msk [vmem:[%s143 + $0x20] sm:$0xff] %vm247, %v241
      %253 = vst.msk [vmem:[%s143 + $0x28] sm:$0xff] %vm247, %v242
      %254 = vst.msk [vmem:[%s143 + $0x30] sm:$0xff] %vm247, %v243
      %255 = vst.msk [vmem:[%s143 + $0x38] sm:$0xff] %vm247, %v244
      %256 = vst.msk [vmem:[%s143 + $0x40] sm:$0xff] %vm247, %v245
      %257 = vst.msk [vmem:[%s143 + $0x48] sm:$0xff] %vm247, %v246
      %p258 = scmp.lt.s32.totalorder %s13, 1
      %s259 = scalar_select %p258, %s13, 1
      %s260 = smul.addr %s259, 10
      %s261 = smul.addr %s260, 8
      %s262 = scalar_lea.vmem %s2, %s261
      // Predicated region
      $region29: #{resconv_basic_forward.7} parent=27 // pred_check
        %p263 = pneg %p78
      $region30: #{resconv_basic_forward.7} parent=27 // pred_check_branch
        %265 = sbr.rel (%p263) target = $region32
      $region31: #{resconv_basic_forward.7} parent=27 // pred_region
        _
      $region32: #{resconv_basic_forward.7} parent=27 // pred_fallthru
        _
    $region28: #{resconv_basic_forward.7} parent=5 // pred_fallthru
      _
    %p266 = scmp.le.s32.totalorder 2, %s8
    // Predicated region
    $region33: #{resconv_basic_forward.7} parent=5 // pred_check
      %p267 = pneg %p266
    $region34: #{resconv_basic_forward.7} parent=5 // pred_check_branch
      %269 = sbr.rel (%p267) target = $region36
    $region35: #{resconv_basic_forward.7} parent=5 // pred_region
      %s270 = ssub.s32 %s8, 2
      // Predicated region
      $region37: #{resconv_basic_forward.7} parent=35 // pred_check
        %p271 = pneg %p84
      $region38: #{resconv_basic_forward.7} parent=35 // pred_check_branch
        %273 = sbr.rel (%p271) target = $region40
      $region39: #{resconv_basic_forward.7} parent=35 // pred_region
        %p274 = scmp.lt.s32.totalorder %s14, 1
        %s275 = scalar_select %p274, %s14, 1
        %s276 = smul.addr %s275, 10
        %s277 = smul.addr %s276, 8
        %s278 = scalar_lea.vmem %s2, %s277
      $region40: #{resconv_basic_forward.7} parent=35 // pred_fallthru
        _
    $region36: #{resconv_basic_forward.7} parent=5 // pred_fallthru
      _
  $region6: #{resconv_basic_forward.7} parent=0 // loop_footer
    %s12 = sadd.s32 1, %s8
  $region7: #{resconv_basic_forward.7} parent=0 // loop_footer_branch
    %7 = sbr.rel target = $region3
  $region8: #{resconv_basic_forward.7} parent=0 // loop_exit
    _

// kernel: resconv_basic_forward.6
$region0: #{resconv_basic_forward.6}
  #allocation0 [shape = 'u32[]', space=smem, size = 0x4, offset = 0x4, fixed_abs, tag = 'smem constant byte address 0x4 - core index']
  #allocation1 [shape = 'u32[72,128]{1,0:T(1,128)}', space=vmem, size = 0x9000, scoped, tag = 'internal scratch']
  %s0 = inlined_call_operand.vmem [shape: bf16[2,80,16], index: 0, kind: input, shape index: {}]
  %s1 = inlined_call_operand.vmem [shape: f32[2,16], index: 1, kind: input, shape index: {}]
  %s2 = inlined_call_operand.vmem [shape: bf16[2,4,110,16], index: 2, kind: input, shape index: {}]
  %s3 = inlined_call_operand.vmem [shape: bf16[16,16], index: 3, kind: input, shape index: {}]
  %s4 = inlined_call_operand.vmem [shape: f32[1,16], index: 4, kind: input, shape index: {}]
  %s5 = inlined_call_operand.vmem [shape: f32[80,1], index: 5, kind: input, shape index: {}]
  %s6 = inlined_call_operand.vmem [shape: bf16[2,80,16], index: 6, kind: output, shape index: {0}]
  %s7 = inlined_call_operand.vmem [shape: f32[2,1,16], index: 7, kind: output, shape index: {1}]
  %s8 = inlined_call_operand.vmem [shape: f32[2,1,16], index: 8, kind: output, shape index: {2}]
  %9 = xla_tuple %s6, %s7, %s8
  %s10 = sld [smem:[#allocation0]]
  $region73: #{resconv_basic_forward.6} parent=0
    _
  %s12 = ssub.s32 1, %s10
  %s13 = scalar_select 0, %s12, %s10
  loop: start=0, step=1, limit=4
  $region2: #{resconv_basic_forward.6} parent=0 // loop_pre_header
    _
  $region3: #{resconv_basic_forward.6} parent=0 // loop_header
    %s15 = sphi 0, %s19
    %p16 = scmp.ge.s32.totalorder %s15, 4
    %s25 = sphi 0, %s27
    %s28 = sphi 0, %s25
    %s29 = sphi 0, %s28
    %s45 = sphi 0, %s29
    %s49 = sphi 0, %s49
    %s51 = sphi 0, %s49
    %s52 = sphi 0, %s51
    %s66 = sphi 0, %s52
    %s72 = sphi 0, %s74
    %s75 = sphi 0, %s72
    %s76 = sphi 0, %s75
    %s92 = sphi 0, %s76
    %s96 = sphi 0, %s96
    %s98 = sphi 0, %s96
    %s99 = sphi 0, %s98
    %s113 = sphi 0, %s99
    %s117 = sphi 0, %s117
    %s119 = sphi 0, %s117
    %s120 = sphi 0, %s119
    %s134 = sphi 0, %s120
    %s138 = sphi 0, %s138
    %s140 = sphi 0, %s138
    %s141 = sphi 0, %s140
    %s155 = sphi 0, %s141
    %s161 = sphi 0, %s163
    %s164 = sphi 0, %s161
    %s165 = sphi 0, %s164
    %s181 = sphi 0, %s165
    %s187 = sphi 0, %s189
    %s190 = sphi 0, %s187
    %s191 = sphi 0, %s190
    %s207 = sphi 0, %s191
    %s213 = sphi 0, %s215
    %s216 = sphi 0, %s213
    %s217 = sphi 0, %s216
    %s233 = sphi 0, %s217
  $region4: #{resconv_basic_forward.6} parent=0 // loop_header_branch
    %18 = sbr.rel (%p16) target = $region8
  $region5: #{resconv_basic_forward.6} parent=0 // loop_body
    %s20 = ssub.s32 %s15, 1
    %s21 = ssub.s32 %s15, 2
    %s22 = sadd.s32 %s15, 1
    %s23 = ssub.s32 %s15, %s22
    %p24 = scmp.eq.s32.totalorder %s23, 0
    %s26 = sadd.s32 %s25, 1
    %s27 = scalar_select %p24, %s25, %s26
    %p30 = pneg %p24
    %p31 = scmp.eq.s32.totalorder %s15, 1
    %p32 = por %p30, %p31
    %p33 = scmp.ne.s32.totalorder %s25, %s28
    %p34 = scmp.eq.s32.totalorder %s15, 0
    %p35 = por %p33, %p34
    %p36 = scmp.ne.s32.totalorder %s25, %s28
    %p37 = scmp.eq.s32.totalorder %s20, 1
    %p38 = por %p36, %p37
    %p39 = scmp.ne.s32.totalorder %s28, %s29
    %p40 = scmp.eq.s32.totalorder %s20, 0
    %p41 = por %p39, %p40
    %p42 = scmp.ne.s32.totalorder %s28, %s29
    %p43 = scmp.eq.s32.totalorder %s21, 1
    %p44 = por %p42, %p43
    %p46 = scmp.ne.s32.totalorder %s29, %s45
    %p47 = scmp.eq.s32.totalorder %s21, 0
    %p48 = por %p46, %p47
    %s50 = sadd.s32 %s49, 1
    %p53 = scmp.eq.s32.totalorder %s15, 1
    %p54 = scmp.ne.s32.totalorder %s49, %s51
    %p55 = scmp.eq.s32.totalorder %s15, 0
    %p56 = por %p54, %p55
    %p57 = scmp.ne.s32.totalorder %s49, %s51
    %p58 = scmp.eq.s32.totalorder %s20, 1
    %p59 = por %p57, %p58
    %p60 = scmp.ne.s32.totalorder %s51, %s52
    %p61 = scmp.eq.s32.totalorder %s20, 0
    %p62 = por %p60, %p61
    %p63 = scmp.ne.s32.totalorder %s51, %s52
    %p64 = scmp.eq.s32.totalorder %s21, 1
    %p65 = por %p63, %p64
    %p67 = scmp.ne.s32.totalorder %s52, %s66
    %p68 = scmp.eq.s32.totalorder %s21, 0
    %p69 = por %p67, %p68
    %s70 = ssub.s32 %s15, %s22
    %p71 = scmp.eq.s32.totalorder %s70, 0
    %s73 = sadd.s32 %s72, 1
    %s74 = scalar_select %p71, %s72, %s73
    %p77 = pneg %p71
    %p78 = scmp.eq.s32.totalorder %s15, 1
    %p79 = por %p77, %p78
    %p80 = scmp.ne.s32.totalorder %s72, %s75
    %p81 = scmp.eq.s32.totalorder %s15, 0
    %p82 = por %p80, %p81
    %p83 = scmp.ne.s32.totalorder %s72, %s75
    %p84 = scmp.eq.s32.totalorder %s20, 1
    %p85 = por %p83, %p84
    %p86 = scmp.ne.s32.totalorder %s75, %s76
    %p87 = scmp.eq.s32.totalorder %s20, 0
    %p88 = por %p86, %p87
    %p89 = scmp.ne.s32.totalorder %s75, %s76
    %p90 = scmp.eq.s32.totalorder %s21, 1
    %p91 = por %p89, %p90
    %p93 = scmp.ne.s32.totalorder %s76, %s92
    %p94 = scmp.eq.s32.totalorder %s21, 0
    %p95 = por %p93, %p94
    %s97 = sadd.s32 %s96, 1
    %p100 = scmp.eq.s32.totalorder %s15, 1
    %p101 = scmp.ne.s32.totalorder %s96, %s98
    %p102 = scmp.eq.s32.totalorder %s15, 0
    %p103 = por %p101, %p102
    %p104 = scmp.ne.s32.totalorder %s96, %s98
    %p105 = scmp.eq.s32.totalorder %s20, 1
    %p106 = por %p104, %p105
    %p107 = scmp.ne.s32.totalorder %s98, %s99
    %p108 = scmp.eq.s32.totalorder %s20, 0
    %p109 = por %p107, %p108
    %p110 = scmp.ne.s32.totalorder %s98, %s99
    %p111 = scmp.eq.s32.totalorder %s21, 1
    %p112 = por %p110, %p111
    %p114 = scmp.ne.s32.totalorder %s99, %s113
    %p115 = scmp.eq.s32.totalorder %s21, 0
    %p116 = por %p114, %p115
    %s118 = sadd.s32 %s117, 1
    %p121 = scmp.eq.s32.totalorder %s15, 1
    %p122 = scmp.ne.s32.totalorder %s117, %s119
    %p123 = scmp.eq.s32.totalorder %s15, 0
    %p124 = por %p122, %p123
    %p125 = scmp.ne.s32.totalorder %s117, %s119
    %p126 = scmp.eq.s32.totalorder %s20, 1
    %p127 = por %p125, %p126
    %p128 = scmp.ne.s32.totalorder %s119, %s120
    %p129 = scmp.eq.s32.totalorder %s20, 0
    %p130 = por %p128, %p129
    %p131 = scmp.ne.s32.totalorder %s119, %s120
    %p132 = scmp.eq.s32.totalorder %s21, 1
    %p133 = por %p131, %p132
    %p135 = scmp.ne.s32.totalorder %s120, %s134
    %p136 = scmp.eq.s32.totalorder %s21, 0
    %p137 = por %p135, %p136
    %s139 = sadd.s32 %s138, 1
    %p142 = scmp.eq.s32.totalorder %s15, 1
    %p143 = scmp.ne.s32.totalorder %s138, %s140
    %p144 = scmp.eq.s32.totalorder %s15, 0
    %p145 = por %p143, %p144
    %p146 = scmp.ne.s32.totalorder %s138, %s140
    %p147 = scmp.eq.s32.totalorder %s20, 1
    %p148 = por %p146, %p147
    %p149 = scmp.ne.s32.totalorder %s140, %s141
    %p150 = scmp.eq.s32.totalorder %s20, 0
    %p151 = por %p149, %p150
    %p152 = scmp.ne.s32.totalorder %s140, %s141
    %p153 = scmp.eq.s32.totalorder %s21, 1
    %p154 = por %p152, %p153
    %p156 = scmp.ne.s32.totalorder %s141, %s155
    %p157 = scmp.eq.s32.totalorder %s21, 0
    %p158 = por %p156, %p157
    %s159 = ssub.s32 %s15, %s22
    %p160 = scmp.eq.s32.totalorder %s159, 0
    %s162 = sadd.s32 %s161, 1
    %s163 = scalar_select %p160, %s161, %s162
    %p166 = pneg %p160
    %p167 = scmp.eq.s32.totalorder %s15, 1
    %p168 = por %p166, %p167
    %p169 = scmp.ne.s32.totalorder %s161, %s164
    %p170 = scmp.eq.s32.totalorder %s15, 0
    %p171 = por %p169, %p170
    %p172 = scmp.ne.s32.totalorder %s161, %s164
    %p173 = scmp.eq.s32.totalorder %s20, 1
    %p174 = por %p172, %p173
    %p175 = scmp.ne.s32.totalorder %s164, %s165
    %p176 = scmp.eq.s32.totalorder %s20, 0
    %p177 = por %p175, %p176
    %p178 = scmp.ne.s32.totalorder %s164, %s165
    %p179 = scmp.eq.s32.totalorder %s21, 1
    %p180 = por %p178, %p179
    %p182 = scmp.ne.s32.totalorder %s165, %s181
    %p183 = scmp.eq.s32.totalorder %s21, 0
    %p184 = por %p182, %p183
    %s185 = ssub.s32 %s15, %s22
    %p186 = scmp.eq.s32.totalorder %s185, 0
    %s188 = sadd.s32 %s187, 1
    %s189 = scalar_select %p186, %s187, %s188
    %p192 = pneg %p186
    %p193 = scmp.eq.s32.totalorder %s15, 1
    %p194 = por %p192, %p193
    %p195 = scmp.ne.s32.totalorder %s187, %s190
    %p196 = scmp.eq.s32.totalorder %s15, 0
    %p197 = por %p195, %p196
    %p198 = scmp.ne.s32.totalorder %s187, %s190
    %p199 = scmp.eq.s32.totalorder %s20, 1
    %p200 = por %p198, %p199
    %p201 = scmp.ne.s32.totalorder %s190, %s191
    %p202 = scmp.eq.s32.totalorder %s20, 0
    %p203 = por %p201, %p202
    %p204 = scmp.ne.s32.totalorder %s190, %s191
    %p205 = scmp.eq.s32.totalorder %s21, 1
    %p206 = por %p204, %p205
    %p208 = scmp.ne.s32.totalorder %s191, %s207
    %p209 = scmp.eq.s32.totalorder %s21, 0
    %p210 = por %p208, %p209
    %s211 = ssub.s32 %s15, %s22
    %p212 = scmp.eq.s32.totalorder %s211, 0
    %s214 = sadd.s32 %s213, 1
    %s215 = scalar_select %p212, %s213, %s214
    %p218 = pneg %p212
    %p219 = scmp.eq.s32.totalorder %s15, 1
    %p220 = por %p218, %p219
    %p221 = scmp.ne.s32.totalorder %s213, %s216
    %p222 = scmp.eq.s32.totalorder %s15, 0
    %p223 = por %p221, %p222
    %p224 = scmp.ne.s32.totalorder %s213, %s216
    %p225 = scmp.eq.s32.totalorder %s20, 1
    %p226 = por %p224, %p225
    %p227 = scmp.ne.s32.totalorder %s216, %s217
    %p228 = scmp.eq.s32.totalorder %s20, 0
    %p229 = por %p227, %p228
    %p230 = scmp.ne.s32.totalorder %s216, %s217
    %p231 = scmp.eq.s32.totalorder %s21, 1
    %p232 = por %p230, %p231
    %p234 = scmp.ne.s32.totalorder %s217, %s233
    %p235 = scmp.eq.s32.totalorder %s21, 0
    %p236 = por %p234, %p235
    %p237 = scmp.le.s32.totalorder 1, %s15
    %p238 = scmp.lt.s32.totalorder %s15, 3
    %p239 = pnand %p237, %p238
    %p240 = pneg %p239
    // Predicated region
    $region9: #{resconv_basic_forward.6} parent=5 // pred_check
      _
    $region10: #{resconv_basic_forward.6} parent=5 // pred_check_branch
      %242 = sbr.rel (%p239) target = $region12
    $region11: #{resconv_basic_forward.6} parent=5 // pred_region
      %s243 = ssub.s32 %s15, 1
      // Predicated region
      $region13: #{resconv_basic_forward.6} parent=11 // pred_check
        %p244 = pneg %p62
      $region14: #{resconv_basic_forward.6} parent=11 // pred_check_branch
        %246 = sbr.rel (%p244) target = $region16
      $region15: #{resconv_basic_forward.6} parent=11 // pred_region
        _
      $region16: #{resconv_basic_forward.6} parent=11 // pred_fallthru
        _
      // Predicated region
      $region17: #{resconv_basic_forward.6} parent=11 // pred_check
        %p247 = pneg %p109
      $region18: #{resconv_basic_forward.6} parent=11 // pred_check_branch
        %249 = sbr.rel (%p247) target = $region20
      $region19: #{resconv_basic_forward.6} parent=11 // pred_region
        _
      $region20: #{resconv_basic_forward.6} parent=11 // pred_fallthru
        _
      // Predicated region
      $region21: #{resconv_basic_forward.6} parent=11 // pred_check
        %p250 = pneg %p130
      $region22: #{resconv_basic_forward.6} parent=11 // pred_check_branch
        %252 = sbr.rel (%p250) target = $region24
      $region23: #{resconv_basic_forward.6} parent=11 // pred_region
        _
      $region24: #{resconv_basic_forward.6} parent=11 // pred_fallthru
        _
      // Predicated region
      $region25: #{resconv_basic_forward.6} parent=11 // pred_check
        %p253 = pneg %p151
      $region26: #{resconv_basic_forward.6} parent=11 // pred_check_branch
        %255 = sbr.rel (%p253) target = $region28
      $region27: #{resconv_basic_forward.6} parent=11 // pred_region
        _
      $region28: #{resconv_basic_forward.6} parent=11 // pred_fallthru
        _
    $region12: #{resconv_basic_forward.6} parent=5 // pred_fallthru
      _
    %p256 = scmp.lt.s32.totalorder %s15, 2
    // Predicated region
    $region29: #{resconv_basic_forward.6} parent=5 // pred_check
      %p257 = pneg %p256
    $region30: #{resconv_basic_forward.6} parent=5 // pred_check_branch
      %259 = sbr.rel (%p257) target = $region32
    $region31: #{resconv_basic_forward.6} parent=5 // pred_region
      // Predicated region
      $region33: #{resconv_basic_forward.6} parent=31 // pred_check
        %p260 = pneg %p35
      $region34: #{resconv_basic_forward.6} parent=31 // pred_check_branch
        %262 = sbr.rel (%p260) target = $region36
      $region35: #{resconv_basic_forward.6} parent=31 // pred_region
        %p263 = scmp.lt.s32.totalorder %s15, 1
        %s264 = scalar_select %p263, %s15, 1
        %s265 = smul.addr %s264, 10
        %s266 = smul.addr %s265, 4
        %s267 = scalar_lea.vmem %s0, %s266
      $region36: #{resconv_basic_forward.6} parent=31 // pred_fallthru
        _
      // Predicated region
      $region37: #{resconv_basic_forward.6} parent=31 // pred_check
        %p268 = pneg %p82
      $region38: #{resconv_basic_forward.6} parent=31 // pred_check_branch
        %270 = sbr.rel (%p268) target = $region40
      $region39: #{resconv_basic_forward.6} parent=31 // pred_region
        %p271 = scmp.lt.s32.totalorder %s15, 1
        %s272 = scalar_select %p271, %s15, 1
        %s273 = smul.addr %s272, 56
        %s274 = sadd.s32 42, %s273
        %s275 = smul.addr %s274, 4
        %s276 = scalar_lea.vmem %s2, %s275
      $region40: #{resconv_basic_forward.6} parent=31 // pred_fallthru
        _
    $region32: #{resconv_basic_forward.6} parent=5 // pred_fallthru
      _
    %p277 = scmp.le.s32.totalorder 1, %s15
    %p278 = scmp.lt.s32.totalorder %s15, 3
    %p279 = pnand %p277, %p278
    %p280 = pneg %p279
    // Predicated region
    $region41: #{resconv_basic_forward.6} parent=5 // pred_check
      _
    $region42: #{resconv_basic_forward.6} parent=5 // pred_check_branch
      %282 = sbr.rel (%p279) target = $region44
    $region43: #{resconv_basic_forward.6} parent=5 // pred_region
      %s283 = ssub.s32 %s15, 1
      %p284 = scmp.lt.s32.totalorder %s20, 1
      %s285 = scalar_select %p284, %s20, 1
      %s286 = smul.addr %s285, 10
      %s287 = smul.addr %s286, 4
      %s288 = scalar_lea.vmem %s0, %s287
      %p289 = pneg %p41
      %p290 = pneg %p38
      %p291 = pneg %p62
      %p292 = pneg %p59
      %p293 = scmp.lt.s32.totalorder %s20, 1
      %s294 = scalar_select %p293, %s20, 1
      %s295 = smul.addr %s294, 56
      %s296 = sadd.s32 42, %s295
      %s297 = smul.addr %s296, 4
      %s298 = scalar_lea.vmem %s2, %s297
      %p299 = pneg %p88
      %p300 = pneg %p85
      %p301 = pneg %p109
      %p302 = pneg %p106
      %p303 = pneg %p130
      %p304 = pneg %p127
      %p305 = pneg %p151
      %p306 = pneg %p148
      %p307 = pneg %p177
      %p308 = pneg %p174
      %p309 = scmp.lt.s32.totalorder %s20, 1
      %s310 = scalar_select %p309, %s20, 1
      %s311 = smul.addr %s310, 10
      %s312 = smul.addr %s311, 4
      %s313 = scalar_lea.vmem %s6, %s312
      %p314 = pneg %p203
      %p315 = pneg %p200
      %p316 = scmp.lt.s32.totalorder %s20, 1
      %s317 = scalar_select %p316, %s20, 1
      %s318 = scalar_lea.vmem %s7, %s317
      %p319 = pneg %p229
      %p320 = pneg %p226
      %p321 = scmp.lt.s32.totalorder %s20, 1
      %s322 = scalar_select %p321, %s20, 1
      %s323 = scalar_lea.vmem %s8, %s322
      %p324 = scmp.lt.s32.totalorder %s20, 1
      %s325 = scalar_select %p324, %s20, 1
      %s326 = smul.addr %s325, 10
      %s327 = smul.addr %s326, 4
      %s328 = scalar_lea.vmem %s0, %s327
      %p329 = scmp.lt.s32.totalorder %s20, 1
      %s330 = scalar_select %p329, %s20, 1
      %s331 = smul.addr %s330, 56
      %s332 = sadd.s32 42, %s331
      %s333 = smul.addr %s332, 4
      %s334 = scalar_lea.vmem %s2, %s333
      %p335 = scmp.lt.s32.totalorder %s20, 1
      %s336 = scalar_select %p335, %s20, 1
      %s337 = smul.addr %s336, 10
      %s338 = smul.addr %s337, 4
      %s339 = scalar_lea.vmem %s6, %s338
      %p340 = scmp.lt.s32.totalorder %s20, 1
      %s341 = scalar_select %p340, %s20, 1
      %s342 = scalar_lea.vmem %s7, %s341
      %p343 = scmp.lt.s32.totalorder %s20, 1
      %s344 = scalar_select %p343, %s20, 1
      %s345 = scalar_lea.vmem %s8, %s344
      %v347 = vld [vmem:[%s1] sm:$0x3]
      %v348 = vld [vmem:[%s328] sm:$0xf]
      %v349 = vld [vmem:[%s328 + $0x4] sm:$0xf]
      %v350 = vld [vmem:[%s328 + $0x8] sm:$0xf]
      %v351 = vld [vmem:[%s328 + $0xc] sm:$0xf]
      %v352 = vld [vmem:[%s328 + $0x10] sm:$0xf]
      %v353 = vld [vmem:[%s328 + $0x14] sm:$0xf]
      %v354 = vld [vmem:[%s328 + $0x18] sm:$0xf]
      %v355 = vld [vmem:[%s328 + $0x1c] sm:$0xf]
      %v356 = vld [vmem:[%s328 + $0x20] sm:$0xf]
      %v357 = vld [vmem:[%s328 + $0x24] sm:$0xf]
      %v358 = vunpack.c.l.bf16 %v348
      %v359 = vunpack.c.l.bf16 %v349
      %v360 = vunpack.c.l.bf16 %v350
      %v361 = vunpack.c.l.bf16 %v351
      %v362 = vunpack.c.l.bf16 %v352
      %v363 = vunpack.c.l.bf16 %v353
      %v364 = vunpack.c.l.bf16 %v354
      %v365 = vunpack.c.l.bf16 %v355
      %v366 = vunpack.c.l.bf16 %v356
      %v367 = vunpack.c.l.bf16 %v357
      %v368 = vperm.slane %v347, 0
      %v369 = vmul.f32 %v358, %v368
      %v370 = vmul.f32 %v359, %v368
      %v371 = vmul.f32 %v360, %v368
      %v372 = vmul.f32 %v361, %v368
      %v373 = vmul.f32 %v362, %v368
      %v374 = vmul.f32 %v363, %v368
      %v375 = vmul.f32 %v364, %v368
      %v376 = vmul.f32 %v365, %v368
      %v377 = vmul.f32 %v366, %v368
      %v378 = vmul.f32 %v367, %v368
      %v379 = vperm.slane %v347, 1
      %v380 = vadd.f32 %v369, %v379
      %v381 = vadd.f32 %v370, %v379
      %v382 = vadd.f32 %v371, %v379
      %v383 = vadd.f32 %v372, %v379
      %v384 = vadd.f32 %v373, %v379
      %v385 = vadd.f32 %v374, %v379
      %v386 = vadd.f32 %v375, %v379
      %v387 = vadd.f32 %v376, %v379
      %v388 = vadd.f32 %v377, %v379
      %v389 = vadd.f32 %v378, %v379
      %vm390 = vcmp.gt.f32.partialorder %v380, 0.0
      %vm391 = vcmp.gt.f32.partialorder %v381, 0.0
      %vm392 = vcmp.gt.f32.partialorder %v382, 0.0
      %vm393 = vcmp.gt.f32.partialorder %v383, 0.0
      %vm394 = vcmp.gt.f32.partialorder %v384, 0.0
      %vm395 = vcmp.gt.f32.partialorder %v385, 0.0
      %vm396 = vcmp.gt.f32.partialorder %v386, 0.0
      %vm397 = vcmp.gt.f32.partialorder %v387, 0.0
      %vm398 = vcmp.gt.f32.partialorder %v388, 0.0
      %vm399 = vcmp.gt.f32.partialorder %v389, 0.0
      %v400 = vmin.f32 %v380, 0.0
      %v401 = vmin.f32 %v381, 0.0
      %v402 = vmin.f32 %v382, 0.0
      %v403 = vmin.f32 %v383, 0.0
      %v404 = vmin.f32 %v384, 0.0
      %v405 = vmin.f32 %v385, 0.0
      %v406 = vmin.f32 %v386, 0.0
      %v407 = vmin.f32 %v387, 0.0
      %v408 = vmin.f32 %v388, 0.0
      %v409 = vmin.f32 %v389, 0.0
      %v410 = vmul.f32 %v400, 1.442695
      %v411 = vpow.pop %v410
      %v412 = vmul.f32 %v401, 1.442695
      %v413 = vpow.pop %v412
      %v414 = vmul.f32 %v402, 1.442695
      %v415 = vpow.pop %v414
      %v416 = vmul.f32 %v403, 1.442695
      %v417 = vpow.pop %v416
      %v418 = vmul.f32 %v404, 1.442695
      %v419 = vpow.pop %v418
      %v420 = vmul.f32 %v405, 1.442695
      %v421 = vpow.pop %v420
      %v422 = vmul.f32 %v406, 1.442695
      %v423 = vpow.pop %v422
      %v424 = vmul.f32 %v407, 1.442695
      %v425 = vpow.pop %v424
      %v426 = vmul.f32 %v408, 1.442695
      %v427 = vpow.pop %v426
      %v428 = vmul.f32 %v409, 1.442695
      %v429 = vpow.pop %v428
      %v430 = vsub.f32 %v411, 1.0
      %v431 = vsub.f32 %v413, 1.0
      %v432 = vsub.f32 %v415, 1.0
      %v433 = vsub.f32 %v417, 1.0
      %v434 = vsub.f32 %v419, 1.0
      %v435 = vsub.f32 %v421, 1.0
      %v436 = vsub.f32 %v423, 1.0
      %v437 = vsub.f32 %v425, 1.0
      %v438 = vsub.f32 %v427, 1.0
      %v439 = vsub.f32 %v429, 1.0
      %v440 = vsel %vm390, %v380, %v430
      %v441 = vsel %vm391, %v381, %v431
      %v442 = vsel %vm392, %v382, %v432
      %v443 = vsel %vm393, %v383, %v433
      %v444 = vsel %vm394, %v384, %v434
      %v445 = vsel %vm395, %v385, %v435
      %v446 = vsel %vm396, %v386, %v436
      %v447 = vsel %vm397, %v387, %v437
      %v448 = vsel %vm398, %v388, %v438
      %v449 = vsel %vm399, %v389, %v439
      %v450 = vld [vmem:[%s334] sm:$0xf]
      %v451 = vld [vmem:[%s334 + $0x4] sm:$0xf]
      %v452 = vld [vmem:[%s334 + $0x8] sm:$0xf]
      %v453 = vld [vmem:[%s334 + $0xc] sm:$0xf]
      %v454 = vld [vmem:[%s334 + $0x10] sm:$0xf]
      %v455 = vld [vmem:[%s334 + $0x14] sm:$0xf]
      %v456 = vld [vmem:[%s334 + $0x18] sm:$0xf]
      %v457 = vld [vmem:[%s334 + $0x1c] sm:$0xf]
      %v458 = vld [vmem:[%s334 + $0x20] sm:$0xf]
      %v459 = vld [vmem:[%s334 + $0x24] sm:$0xf]
      %v460 = vld [vmem:[%s3] sm:$0xf]
      %v461 = vld [vmem:[%s3 + $0x4] sm:$0xf]
      %v462 = vld [vmem:[%s4] sm:$0x1]
      %v464 = vperm.slane %v462, 0
      %v476 = vunpack.c.l.b16 %v450
      %v477 = vunpack.c.l.b16 %v451
      %v478 = vunpack.c.l.b16 %v452
      %v479 = vunpack.c.l.b16 %v453
      %v480 = vunpack.c.l.b16 %v454
      %v481 = vunpack.c.l.b16 %v455
      %v482 = vunpack.c.l.b16 %v456
      %v483 = vunpack.c.l.b16 %v457
      %v484 = vunpack.c.l.b16 %v458
      %v485 = vunpack.c.l.b16 %v459
      %v486 = vpack.c.b16 %v477, %v476
      %v487 = vpack.c.b16 %v479, %v478
      %v488 = vpack.c.b16 %v481, %v480
      %v489 = vpack.c.b16 %v483, %v482
      %v490 = vpack.c.b16 %v485, %v484
      %v493 = vunpack.c.l.b16 %v460
      %v494 = vunpack.c.l.b16 %v461
      %v495 = vpack.c.b16 %v494, %v493
      %vm497 = vcmask 130048
      %v499 = vsel %vm497, %v486, 0
      %v502 = vsel %vm497, %v487, 0
      %v505 = vsel %vm497, %v488, 0
      %v508 = vsel %vm497, %v489, 0
      %v511 = vsel %vm497, %v490, 0
      %513 = vmatpush.bf16.msra.mxu0 0
      %514 = vmatpush.bf16.msra.mxu0 0
      %515 = vmatpush.bf16.msra.mxu0 0
      %516 = vmatpush.bf16.msra.mxu0 0
      %517 = vmatpush.bf16.msra.mxu0 0
      %518 = vmatpush.bf16.msra.mxu0 0
      %519 = vmatpush.bf16.msra.mxu0 0
      %520 = vmatpush.bf16.msra.mxu0 %v495
      %521 = vmatmul.bf16.gmra.mxu0 %v499
      %v522 = vpop.f32.mrf.mxu0
      %v523 = vadd.f32 %v464, %v522
      %v524 = vpop.f32.mrf.mxu0
      %v525 = vadd.f32 %v464, %v524
      %526 = vmatmul.bf16.gmra.mxu0 %v502
      %v527 = vpop.f32.mrf.mxu0
      %v528 = vadd.f32 %v464, %v527
      %v529 = vpop.f32.mrf.mxu0
      %v530 = vadd.f32 %v464, %v529
      %531 = vmatmul.bf16.gmra.mxu0 %v505
      %v532 = vpop.f32.mrf.mxu0
      %v533 = vadd.f32 %v464, %v532
      %v534 = vpop.f32.mrf.mxu0
      %v535 = vadd.f32 %v464, %v534
      %536 = vmatmul.bf16.gmra.mxu0 %v508
      %v537 = vpop.f32.mrf.mxu0
      %v538 = vadd.f32 %v464, %v537
      %v539 = vpop.f32.mrf.mxu0
      %v540 = vadd.f32 %v464, %v539
      %541 = vmatmul.bf16.gmra.mxu0 %v511
      %v542 = vpop.f32.mrf.mxu0
      %v543 = vadd.f32 %v464, %v542
      %v544 = vpop.f32.mrf.mxu0
      %v545 = vadd.f32 %v464, %v544
      %546 = vdwg.mxu0
      %v547 = vadd.f32 %v440, %v523
      %v548 = vadd.f32 %v441, %v525
      %v549 = vadd.f32 %v442, %v528
      %v550 = vadd.f32 %v443, %v530
      %v551 = vadd.f32 %v444, %v533
      %v552 = vadd.f32 %v445, %v535
      %v553 = vadd.f32 %v446, %v538
      %v554 = vadd.f32 %v447, %v540
      %v555 = vadd.f32 %v448, %v543
      %v556 = vadd.f32 %v449, %v545
      %v557 = vpack.c.bf16 %v547, %v547
      %v558 = vpack.c.bf16 %v548, %v548
      %v559 = vpack.c.bf16 %v549, %v549
      %v560 = vpack.c.bf16 %v550, %v550
      %v561 = vpack.c.bf16 %v551, %v551
      %v562 = vpack.c.bf16 %v552, %v552
      %v563 = vpack.c.bf16 %v553, %v553
      %v564 = vpack.c.bf16 %v554, %v554
      %v565 = vpack.c.bf16 %v555, %v555
      %v566 = vpack.c.bf16 %v556, %v556
      %vm567 = vcmask 125952
      %568 = vst.msk [vmem:[%s339] sm:$0xf] %vm567, %v557
      %569 = vst.msk [vmem:[%s339 + $0x4] sm:$0xf] %vm567, %v558
      %570 = vst.msk [vmem:[%s339 + $0x8] sm:$0xf] %vm567, %v559
      %571 = vst.msk [vmem:[%s339 + $0xc] sm:$0xf] %vm567, %v560
      %572 = vst.msk [vmem:[%s339 + $0x10] sm:$0xf] %vm567, %v561
      %573 = vst.msk [vmem:[%s339 + $0x14] sm:$0xf] %vm567, %v562
      %574 = vst.msk [vmem:[%s339 + $0x18] sm:$0xf] %vm567, %v563
      %575 = vst.msk [vmem:[%s339 + $0x1c] sm:$0xf] %vm567, %v564
      %576 = vst.msk [vmem:[%s339 + $0x20] sm:$0xf] %vm567, %v565
      %577 = vst.msk [vmem:[%s339 + $0x24] sm:$0xf] %vm567, %v566
      %v578 = vld [vmem:[%s5] sm:$0xff]
      %v579 = vld [vmem:[%s5 + $0x8] sm:$0xff]
      %v580 = vld [vmem:[%s5 + $0x10] sm:$0xff]
      %v581 = vld [vmem:[%s5 + $0x18] sm:$0xff]
      %v582 = vld [vmem:[%s5 + $0x20] sm:$0xff]
      %v583 = vld [vmem:[%s5 + $0x28] sm:$0xff]
      %v584 = vld [vmem:[%s5 + $0x30] sm:$0xff]
      %v585 = vld [vmem:[%s5 + $0x38] sm:$0xff]
      %v586 = vld [vmem:[%s5 + $0x40] sm:$0xff]
      %v587 = vld [vmem:[%s5 + $0x48] sm:$0xff]
      %589 = vset.pattern.permute.xlu0 0
      %590 = vperm.xlu0 %589, %v578
      %v591 = vpop.permute.xlu0 %590
      %594 = vset.pattern.permute.xlu0 0
      %595 = vperm.xlu0 %594, %v579
      %v596 = vpop.permute.xlu0 %595
      %599 = vset.pattern.permute.xlu0 0
      %600 = vperm.xlu0 %599, %v580
      %v601 = vpop.permute.xlu0 %600
      %604 = vset.pattern.permute.xlu0 0
      %605 = vperm.xlu0 %604, %v581
      %v606 = vpop.permute.xlu0 %605
      %609 = vset.pattern.permute.xlu0 0
      %610 = vperm.xlu0 %609, %v582
      %v611 = vpop.permute.xlu0 %610
      %614 = vset.pattern.permute.xlu0 0
      %615 = vperm.xlu0 %614, %v583
      %v616 = vpop.permute.xlu0 %615
      %619 = vset.pattern.permute.xlu0 0
      %620 = vperm.xlu0 %619, %v584
      %v621 = vpop.permute.xlu0 %620
      %624 = vset.pattern.permute.xlu0 0
      %625 = vperm.xlu0 %624, %v585
      %v626 = vpop.permute.xlu0 %625
      %629 = vset.pattern.permute.xlu0 0
      %630 = vperm.xlu0 %629, %v586
      %v631 = vpop.permute.xlu0 %630
      %634 = vset.pattern.permute.xlu0 0
      %635 = vperm.xlu0 %634, %v587
      %v636 = vpop.permute.xlu0 %635
      %v638 = vmul.f32 %v547, %v591
      %v639 = vmul.f32 %v548, %v596
      %v640 = vmul.f32 %v549, %v601
      %v641 = vmul.f32 %v550, %v606
      %v642 = vmul.f32 %v551, %v611
      %v643 = vmul.f32 %v552, %v616
      %v644 = vmul.f32 %v553, %v621
      %v645 = vmul.f32 %v554, %v626
      %v646 = vmul.f32 %v555, %v631
      %v647 = vmul.f32 %v556, %v636
      %v648 = vsel %vm497, %v638, 0.0
      %v649 = vsel %vm497, %v639, 0.0
      %v650 = vadd.f32 %v648, %v649
      %v651 = vsel %vm497, %v640, 0.0
      %v652 = vadd.f32 %v650, %v651
      %v653 = vsel %vm497, %v641, 0.0
      %v654 = vadd.f32 %v652, %v653
      %v655 = vsel %vm497, %v642, 0.0
      %v656 = vadd.f32 %v654, %v655
      %v657 = vsel %vm497, %v643, 0.0
      %v658 = vadd.f32 %v656, %v657
      %v659 = vsel %vm497, %v644, 0.0
      %v660 = vadd.f32 %v658, %v659
      %v661 = vsel %vm497, %v645, 0.0
      %v662 = vadd.f32 %v660, %v661
      %v663 = vsel %vm497, %v646, 0.0
      %v664 = vadd.f32 %v662, %v663
      %v665 = vsel %vm497, %v647, 0.0
      %v666 = vadd.f32 %v664, %v665
      %v667 = vrot.slane %v666, 4
      %v668 = vadd.f32 %v666, %v667
      %v669 = vrot.slane %v668, 2
      %v670 = vadd.f32 %v668, %v669
      %v671 = vrot.slane %v670, 1
      %v672 = vadd.f32 %v670, %v671
      %vm673 = vcmask 122880
      %674 = vst.msk [vmem:[%s342] sm:$0x1] %vm673, %v672
      %v675 = vmul.f32 %v638, %v547
      %v676 = vmul.f32 %v639, %v548
      %v677 = vmul.f32 %v640, %v549
      %v678 = vmul.f32 %v641, %v550
      %v679 = vmul.f32 %v642, %v551
      %v680 = vmul.f32 %v643, %v552
      %v681 = vmul.f32 %v644, %v553
      %v682 = vmul.f32 %v645, %v554
      %v683 = vmul.f32 %v646, %v555
      %v684 = vmul.f32 %v647, %v556
      %v685 = vsel %vm497, %v675, 0.0
      %v686 = vsel %vm497, %v676, 0.0
      %v687 = vadd.f32 %v685, %v686
      %v688 = vsel %vm497, %v677, 0.0
      %v689 = vadd.f32 %v687, %v688
      %v690 = vsel %vm497, %v678, 0.0
      %v691 = vadd.f32 %v689, %v690
      %v692 = vsel %vm497, %v679, 0.0
      %v693 = vadd.f32 %v691, %v692
      %v694 = vsel %vm497, %v680, 0.0
      %v695 = vadd.f32 %v693, %v694
      %v696 = vsel %vm497, %v681, 0.0
      %v697 = vadd.f32 %v695, %v696
      %v698 = vsel %vm497, %v682, 0.0
      %v699 = vadd.f32 %v697, %v698
      %v700 = vsel %vm497, %v683, 0.0
      %v701 = vadd.f32 %v699, %v700
      %v702 = vsel %vm497, %v684, 0.0
      %v703 = vadd.f32 %v701, %v702
      %v704 = vrot.slane %v703, 4
      %v705 = vadd.f32 %v703, %v704
      %v706 = vrot.slane %v705, 2
      %v707 = vadd.f32 %v705, %v706
      %v708 = vrot.slane %v707, 1
      %v709 = vadd.f32 %v707, %v708
      %710 = vst.msk [vmem:[%s345] sm:$0x1] %vm673, %v709
      %p711 = scmp.lt.s32.totalorder %s20, 1
      %s712 = scalar_select %p711, %s20, 1
      %s713 = smul.addr %s712, 10
      %s714 = smul.addr %s713, 4
      %s715 = scalar_lea.vmem %s6, %s714
      %p716 = scmp.lt.s32.totalorder %s20, 1
      %s717 = scalar_select %p716, %s20, 1
      %s718 = scalar_lea.vmem %s7, %s717
      %p719 = scmp.lt.s32.totalorder %s20, 1
      %s720 = scalar_select %p719, %s20, 1
      %s721 = scalar_lea.vmem %s8, %s720
      // Predicated region
      $region45: #{resconv_basic_forward.6} parent=43 // pred_check
        %p722 = pneg %p174
      $region46: #{resconv_basic_forward.6} parent=43 // pred_check_branch
        %724 = sbr.rel (%p722) target = $region48
      $region47: #{resconv_basic_forward.6} parent=43 // pred_region
        _
      $region48: #{resconv_basic_forward.6} parent=43 // pred_fallthru
        _
      // Predicated region
      $region49: #{resconv_basic_forward.6} parent=43 // pred_check
        %p725 = pneg %p200
      $region50: #{resconv_basic_forward.6} parent=43 // pred_check_branch
        %727 = sbr.rel (%p725) target = $region52
      $region51: #{resconv_basic_forward.6} parent=43 // pred_region
        _
      $region52: #{resconv_basic_forward.6} parent=43 // pred_fallthru
        _
      // Predicated region
      $region53: #{resconv_basic_forward.6} parent=43 // pred_check
        %p728 = pneg %p226
      $region54: #{resconv_basic_forward.6} parent=43 // pred_check_branch
        %730 = sbr.rel (%p728) target = $region56
      $region55: #{resconv_basic_forward.6} parent=43 // pred_region
        _
      $region56: #{resconv_basic_forward.6} parent=43 // pred_fallthru
        _
    $region44: #{resconv_basic_forward.6} parent=5 // pred_fallthru
      _
    %p731 = scmp.le.s32.totalorder 2, %s15
    // Predicated region
    $region57: #{resconv_basic_forward.6} parent=5 // pred_check
      %p732 = pneg %p731
    $region58: #{resconv_basic_forward.6} parent=5 // pred_check_branch
      %734 = sbr.rel (%p732) target = $region60
    $region59: #{resconv_basic_forward.6} parent=5 // pred_region
      %s735 = ssub.s32 %s15, 2
      // Predicated region
      $region61: #{resconv_basic_forward.6} parent=59 // pred_check
        %p736 = pneg %p180
      $region62: #{resconv_basic_forward.6} parent=59 // pred_check_branch
        %738 = sbr.rel (%p736) target = $region64
      $region63: #{resconv_basic_forward.6} parent=59 // pred_region
        %p739 = scmp.lt.s32.totalorder %s21, 1
        %s740 = scalar_select %p739, %s21, 1
        %s741 = smul.addr %s740, 10
        %s742 = smul.addr %s741, 4
        %s743 = scalar_lea.vmem %s6, %s742
      $region64: #{resconv_basic_forward.6} parent=59 // pred_fallthru
        _
      // Predicated region
      $region65: #{resconv_basic_forward.6} parent=59 // pred_check
        %p744 = pneg %p206
      $region66: #{resconv_basic_forward.6} parent=59 // pred_check_branch
        %746 = sbr.rel (%p744) target = $region68
      $region67: #{resconv_basic_forward.6} parent=59 // pred_region
        %p747 = scmp.lt.s32.totalorder %s21, 1
        %s748 = scalar_select %p747, %s21, 1
        %s749 = scalar_lea.vmem %s7, %s748
      $region68: #{resconv_basic_forward.6} parent=59 // pred_fallthru
        _
      // Predicated region
      $region69: #{resconv_basic_forward.6} parent=59 // pred_check
        %p750 = pneg %p232
      $region70: #{resconv_basic_forward.6} parent=59 // pred_check_branch
        %752 = sbr.rel (%p750) target = $region72
      $region71: #{resconv_basic_forward.6} parent=59 // pred_region
        %p753 = scmp.lt.s32.totalorder %s21, 1
        %s754 = scalar_select %p753, %s21, 1
        %s755 = scalar_lea.vmem %s8, %s754
      $region72: #{resconv_basic_forward.6} parent=59 // pred_fallthru
        _
    $region60: #{resconv_basic_forward.6} parent=5 // pred_fallthru
      _
  $region6: #{resconv_basic_forward.6} parent=0 // loop_footer
    %s19 = sadd.s32 1, %s15
  $region7: #{resconv_basic_forward.6} parent=0 // loop_footer_branch
    %14 = sbr.rel target = $region3
  $region8: #{resconv_basic_forward.6} parent=0 // loop_exit
    _

// kernel: resconv_basic_forward.5
$region0: #{resconv_basic_forward.5}
  #allocation0 [shape = 'u32[]', space=smem, size = 0x4, offset = 0x4, fixed_abs, tag = 'smem constant byte address 0x4 - core index']
  #allocation1 [shape = 'u32[72,128]{1,0:T(1,128)}', space=vmem, size = 0x9000, scoped, tag = 'internal scratch']
  #allocation2 [shape = 'bf16[112,16]{1,0:T(8,128)(2,1)}', space=vmem, size = 0x7000, scoped, tag = 'scratch operand']
  %s0 = inlined_call_operand.vmem [shape: bf16[2,80,16], index: 0, kind: input, shape index: {}]
  %s1 = inlined_call_operand.vmem [shape: f32[2,16], index: 1, kind: input, shape index: {}]
  %s2 = inlined_call_operand.vmem [shape: bf16[9,16,16], index: 2, kind: input, shape index: {}]
  %s3 = inlined_call_operand.vmem [shape: f32[1,16], index: 3, kind: input, shape index: {}]
  %s4 = inlined_call_operand.vmem [shape: f32[80,1], index: 4, kind: input, shape index: {}]
  %s5 = inlined_call_operand.vmem [shape: bf16[2,80,16], index: 5, kind: output, shape index: {0}]
  %s6 = inlined_call_operand.vmem [shape: f32[2,1,16], index: 6, kind: output, shape index: {1}]
  %s7 = inlined_call_operand.vmem [shape: f32[2,1,16], index: 7, kind: output, shape index: {2}]
  %8 = xla_tuple %s5, %s6, %s7
  %s9 = sld [smem:[#allocation0]]
  $region69: #{resconv_basic_forward.5} parent=0
    _
  %s11 = ssub.s32 1, %s9
  %s12 = scalar_select 0, %s11, %s9
  loop: start=0, step=1, limit=4
  $region2: #{resconv_basic_forward.5} parent=0 // loop_pre_header
    _
  $region3: #{resconv_basic_forward.5} parent=0 // loop_header
    %s14 = sphi 0, %s18
    %p15 = scmp.ge.s32.totalorder %s14, 4
    %s24 = sphi 0, %s26
    %s27 = sphi 0, %s24
    %s28 = sphi 0, %s27
    %s44 = sphi 0, %s28
    %s48 = sphi 0, %s48
    %s50 = sphi 0, %s48
    %s51 = sphi 0, %s50
    %s65 = sphi 0, %s51
    %s69 = sphi 0, %s69
    %s71 = sphi 0, %s69
    %s72 = sphi 0, %s71
    %s86 = sphi 0, %s72
    %s90 = sphi 0, %s90
    %s92 = sphi 0, %s90
    %s93 = sphi 0, %s92
    %s107 = sphi 0, %s93
    %s111 = sphi 0, %s111
    %s113 = sphi 0, %s111
    %s114 = sphi 0, %s113
    %s128 = sphi 0, %s114
    %s134 = sphi 0, %s136
    %s137 = sphi 0, %s134
    %s138 = sphi 0, %s137
    %s154 = sphi 0, %s138
    %s160 = sphi 0, %s162
    %s163 = sphi 0, %s160
    %s164 = sphi 0, %s163
    %s180 = sphi 0, %s164
    %s186 = sphi 0, %s188
    %s189 = sphi 0, %s186
    %s190 = sphi 0, %s189
    %s206 = sphi 0, %s190
  $region4: #{resconv_basic_forward.5} parent=0 // loop_header_branch
    %17 = sbr.rel (%p15) target = $region8
  $region5: #{resconv_basic_forward.5} parent=0 // loop_body
    %s19 = ssub.s32 %s14, 1
    %s20 = ssub.s32 %s14, 2
    %s21 = sadd.s32 %s14, 1
    %s22 = ssub.s32 %s14, %s21
    %p23 = scmp.eq.s32.totalorder %s22, 0
    %s25 = sadd.s32 %s24, 1
    %s26 = scalar_select %p23, %s24, %s25
    %p29 = pneg %p23
    %p30 = scmp.eq.s32.totalorder %s14, 1
    %p31 = por %p29, %p30
    %p32 = scmp.ne.s32.totalorder %s24, %s27
    %p33 = scmp.eq.s32.totalorder %s14, 0
    %p34 = por %p32, %p33
    %p35 = scmp.ne.s32.totalorder %s24, %s27
    %p36 = scmp.eq.s32.totalorder %s19, 1
    %p37 = por %p35, %p36
    %p38 = scmp.ne.s32.totalorder %s27, %s28
    %p39 = scmp.eq.s32.totalorder %s19, 0
    %p40 = por %p38, %p39
    %p41 = scmp.ne.s32.totalorder %s27, %s28
    %p42 = scmp.eq.s32.totalorder %s20, 1
    %p43 = por %p41, %p42
    %p45 = scmp.ne.s32.totalorder %s28, %s44
    %p46 = scmp.eq.s32.totalorder %s20, 0
    %p47 = por %p45, %p46
    %s49 = sadd.s32 %s48, 1
    %p52 = scmp.eq.s32.totalorder %s14, 1
    %p53 = scmp.ne.s32.totalorder %s48, %s50
    %p54 = scmp.eq.s32.totalorder %s14, 0
    %p55 = por %p53, %p54
    %p56 = scmp.ne.s32.totalorder %s48, %s50
    %p57 = scmp.eq.s32.totalorder %s19, 1
    %p58 = por %p56, %p57
    %p59 = scmp.ne.s32.totalorder %s50, %s51
    %p60 = scmp.eq.s32.totalorder %s19, 0
    %p61 = por %p59, %p60
    %p62 = scmp.ne.s32.totalorder %s50, %s51
    %p63 = scmp.eq.s32.totalorder %s20, 1
    %p64 = por %p62, %p63
    %p66 = scmp.ne.s32.totalorder %s51, %s65
    %p67 = scmp.eq.s32.totalorder %s20, 0
    %p68 = por %p66, %p67
    %s70 = sadd.s32 %s69, 1
    %p73 = scmp.eq.s32.totalorder %s14, 1
    %p74 = scmp.ne.s32.totalorder %s69, %s71
    %p75 = scmp.eq.s32.totalorder %s14, 0
    %p76 = por %p74, %p75
    %p77 = scmp.ne.s32.totalorder %s69, %s71
    %p78 = scmp.eq.s32.totalorder %s19, 1
    %p79 = por %p77, %p78
    %p80 = scmp.ne.s32.totalorder %s71, %s72
    %p81 = scmp.eq.s32.totalorder %s19, 0
    %p82 = por %p80, %p81
    %p83 = scmp.ne.s32.totalorder %s71, %s72
    %p84 = scmp.eq.s32.totalorder %s20, 1
    %p85 = por %p83, %p84
    %p87 = scmp.ne.s32.totalorder %s72, %s86
    %p88 = scmp.eq.s32.totalorder %s20, 0
    %p89 = por %p87, %p88
    %s91 = sadd.s32 %s90, 1
    %p94 = scmp.eq.s32.totalorder %s14, 1
    %p95 = scmp.ne.s32.totalorder %s90, %s92
    %p96 = scmp.eq.s32.totalorder %s14, 0
    %p97 = por %p95, %p96
    %p98 = scmp.ne.s32.totalorder %s90, %s92
    %p99 = scmp.eq.s32.totalorder %s19, 1
    %p100 = por %p98, %p99
    %p101 = scmp.ne.s32.totalorder %s92, %s93
    %p102 = scmp.eq.s32.totalorder %s19, 0
    %p103 = por %p101, %p102
    %p104 = scmp.ne.s32.totalorder %s92, %s93
    %p105 = scmp.eq.s32.totalorder %s20, 1
    %p106 = por %p104, %p105
    %p108 = scmp.ne.s32.totalorder %s93, %s107
    %p109 = scmp.eq.s32.totalorder %s20, 0
    %p110 = por %p108, %p109
    %s112 = sadd.s32 %s111, 1
    %p115 = scmp.eq.s32.totalorder %s14, 1
    %p116 = scmp.ne.s32.totalorder %s111, %s113
    %p117 = scmp.eq.s32.totalorder %s14, 0
    %p118 = por %p116, %p117
    %p119 = scmp.ne.s32.totalorder %s111, %s113
    %p120 = scmp.eq.s32.totalorder %s19, 1
    %p121 = por %p119, %p120
    %p122 = scmp.ne.s32.totalorder %s113, %s114
    %p123 = scmp.eq.s32.totalorder %s19, 0
    %p124 = por %p122, %p123
    %p125 = scmp.ne.s32.totalorder %s113, %s114
    %p126 = scmp.eq.s32.totalorder %s20, 1
    %p127 = por %p125, %p126
    %p129 = scmp.ne.s32.totalorder %s114, %s128
    %p130 = scmp.eq.s32.totalorder %s20, 0
    %p131 = por %p129, %p130
    %s132 = ssub.s32 %s14, %s21
    %p133 = scmp.eq.s32.totalorder %s132, 0
    %s135 = sadd.s32 %s134, 1
    %s136 = scalar_select %p133, %s134, %s135
    %p139 = pneg %p133
    %p140 = scmp.eq.s32.totalorder %s14, 1
    %p141 = por %p139, %p140
    %p142 = scmp.ne.s32.totalorder %s134, %s137
    %p143 = scmp.eq.s32.totalorder %s14, 0
    %p144 = por %p142, %p143
    %p145 = scmp.ne.s32.totalorder %s134, %s137
    %p146 = scmp.eq.s32.totalorder %s19, 1
    %p147 = por %p145, %p146
    %p148 = scmp.ne.s32.totalorder %s137, %s138
    %p149 = scmp.eq.s32.totalorder %s19, 0
    %p150 = por %p148, %p149
    %p151 = scmp.ne.s32.totalorder %s137, %s138
    %p152 = scmp.eq.s32.totalorder %s20, 1
    %p153 = por %p151, %p152
    %p155 = scmp.ne.s32.totalorder %s138, %s154
    %p156 = scmp.eq.s32.totalorder %s20, 0
    %p157 = por %p155, %p156
    %s158 = ssub.s32 %s14, %s21
    %p159 = scmp.eq.s32.totalorder %s158, 0
    %s161 = sadd.s32 %s160, 1
    %s162 = scalar_select %p159, %s160, %s161
    %p165 = pneg %p159
    %p166 = scmp.eq.s32.totalorder %s14, 1
    %p167 = por %p165, %p166
    %p168 = scmp.ne.s32.totalorder %s160, %s163
    %p169 = scmp.eq.s32.totalorder %s14, 0
    %p170 = por %p168, %p169
    %p171 = scmp.ne.s32.totalorder %s160, %s163
    %p172 = scmp.eq.s32.totalorder %s19, 1
    %p173 = por %p171, %p172
    %p174 = scmp.ne.s32.totalorder %s163, %s164
    %p175 = scmp.eq.s32.totalorder %s19, 0
    %p176 = por %p174, %p175
    %p177 = scmp.ne.s32.totalorder %s163, %s164
    %p178 = scmp.eq.s32.totalorder %s20, 1
    %p179 = por %p177, %p178
    %p181 = scmp.ne.s32.totalorder %s164, %s180
    %p182 = scmp.eq.s32.totalorder %s20, 0
    %p183 = por %p181, %p182
    %s184 = ssub.s32 %s14, %s21
    %p185 = scmp.eq.s32.totalorder %s184, 0
    %s187 = sadd.s32 %s186, 1
    %s188 = scalar_select %p185, %s186, %s187
    %p191 = pneg %p185
    %p192 = scmp.eq.s32.totalorder %s14, 1
    %p193 = por %p191, %p192
    %p194 = scmp.ne.s32.totalorder %s186, %s189
    %p195 = scmp.eq.s32.totalorder %s14, 0
    %p196 = por %p194, %p195
    %p197 = scmp.ne.s32.totalorder %s186, %s189
    %p198 = scmp.eq.s32.totalorder %s19, 1
    %p199 = por %p197, %p198
    %p200 = scmp.ne.s32.totalorder %s189, %s190
    %p201 = scmp.eq.s32.totalorder %s19, 0
    %p202 = por %p200, %p201
    %p203 = scmp.ne.s32.totalorder %s189, %s190
    %p204 = scmp.eq.s32.totalorder %s20, 1
    %p205 = por %p203, %p204
    %p207 = scmp.ne.s32.totalorder %s190, %s206
    %p208 = scmp.eq.s32.totalorder %s20, 0
    %p209 = por %p207, %p208
    %p210 = scmp.le.s32.totalorder 1, %s14
    %p211 = scmp.lt.s32.totalorder %s14, 3
    %p212 = pnand %p210, %p211
    %p213 = pneg %p212
    // Predicated region
    $region9: #{resconv_basic_forward.5} parent=5 // pred_check
      _
    $region10: #{resconv_basic_forward.5} parent=5 // pred_check_branch
      %215 = sbr.rel (%p212) target = $region12
    $region11: #{resconv_basic_forward.5} parent=5 // pred_region
      %s216 = ssub.s32 %s14, 1
      // Predicated region
      $region13: #{resconv_basic_forward.5} parent=11 // pred_check
        %p217 = pneg %p61
      $region14: #{resconv_basic_forward.5} parent=11 // pred_check_branch
        %219 = sbr.rel (%p217) target = $region16
      $region15: #{resconv_basic_forward.5} parent=11 // pred_region
        _
      $region16: #{resconv_basic_forward.5} parent=11 // pred_fallthru
        _
      // Predicated region
      $region17: #{resconv_basic_forward.5} parent=11 // pred_check
        %p220 = pneg %p82
      $region18: #{resconv_basic_forward.5} parent=11 // pred_check_branch
        %222 = sbr.rel (%p220) target = $region20
      $region19: #{resconv_basic_forward.5} parent=11 // pred_region
        _
      $region20: #{resconv_basic_forward.5} parent=11 // pred_fallthru
        _
      // Predicated region
      $region21: #{resconv_basic_forward.5} parent=11 // pred_check
        %p223 = pneg %p103
      $region22: #{resconv_basic_forward.5} parent=11 // pred_check_branch
        %225 = sbr.rel (%p223) target = $region24
      $region23: #{resconv_basic_forward.5} parent=11 // pred_region
        _
      $region24: #{resconv_basic_forward.5} parent=11 // pred_fallthru
        _
      // Predicated region
      $region25: #{resconv_basic_forward.5} parent=11 // pred_check
        %p226 = pneg %p124
      $region26: #{resconv_basic_forward.5} parent=11 // pred_check_branch
        %228 = sbr.rel (%p226) target = $region28
      $region27: #{resconv_basic_forward.5} parent=11 // pred_region
        _
      $region28: #{resconv_basic_forward.5} parent=11 // pred_fallthru
        _
    $region12: #{resconv_basic_forward.5} parent=5 // pred_fallthru
      _
    %p229 = scmp.lt.s32.totalorder %s14, 2
    // Predicated region
    $region29: #{resconv_basic_forward.5} parent=5 // pred_check
      %p230 = pneg %p229
    $region30: #{resconv_basic_forward.5} parent=5 // pred_check_branch
      %232 = sbr.rel (%p230) target = $region32
    $region31: #{resconv_basic_forward.5} parent=5 // pred_region
      // Predicated region
      $region33: #{resconv_basic_forward.5} parent=31 // pred_check
        %p233 = pneg %p34
      $region34: #{resconv_basic_forward.5} parent=31 // pred_check_branch
        %235 = sbr.rel (%p233) target = $region36
      $region35: #{resconv_basic_forward.5} parent=31 // pred_region
        %p236 = scmp.lt.s32.totalorder %s14, 1
        %s237 = scalar_select %p236, %s14, 1
        %s238 = smul.addr %s237, 10
        %s239 = smul.addr %s238, 4
        %s240 = scalar_lea.vmem %s0, %s239
      $region36: #{resconv_basic_forward.5} parent=31 // pred_fallthru
        _
    $region32: #{resconv_basic_forward.5} parent=5 // pred_fallthru
      _
    %p241 = scmp.le.s32.totalorder 1, %s14
    %p242 = scmp.lt.s32.totalorder %s14, 3
    %p243 = pnand %p241, %p242
    %p244 = pneg %p243
    // Predicated region
    $region37: #{resconv_basic_forward.5} parent=5 // pred_check
      _
    $region38: #{resconv_basic_forward.5} parent=5 // pred_check_branch
      %246 = sbr.rel (%p243) target = $region40
    $region39: #{resconv_basic_forward.5} parent=5 // pred_region
      %s247 = ssub.s32 %s14, 1
      %p248 = scmp.lt.s32.totalorder %s19, 1
      %s249 = scalar_select %p248, %s19, 1
      %s250 = smul.addr %s249, 10
      %s251 = smul.addr %s250, 4
      %s252 = scalar_lea.vmem %s0, %s251
      %p253 = pneg %p40
      %p254 = pneg %p37
      %p255 = pneg %p61
      %p256 = pneg %p58
      %p257 = pneg %p82
      %p258 = pneg %p79
      %p259 = pneg %p103
      %p260 = pneg %p100
      %p261 = pneg %p124
      %p262 = pneg %p121
      %p263 = pneg %p150
      %p264 = pneg %p147
      %p265 = scmp.lt.s32.totalorder %s19, 1
      %s266 = scalar_select %p265, %s19, 1
      %s267 = smul.addr %s266, 10
      %s268 = smul.addr %s267, 4
      %s269 = scalar_lea.vmem %s5, %s268
      %p270 = pneg %p176
      %p271 = pneg %p173
      %p272 = scmp.lt.s32.totalorder %s19, 1
      %s273 = scalar_select %p272, %s19, 1
      %s274 = scalar_lea.vmem %s6, %s273
      %p275 = pneg %p202
      %p276 = pneg %p199
      %p277 = scmp.lt.s32.totalorder %s19, 1
      %s278 = scalar_select %p277, %s19, 1
      %s279 = scalar_lea.vmem %s7, %s278
      %p280 = scmp.lt.s32.totalorder %s19, 1
      %s281 = scalar_select %p280, %s19, 1
      %s282 = smul.addr %s281, 10
      %s283 = smul.addr %s282, 4
      %s284 = scalar_lea.vmem %s0, %s283
      %p285 = scmp.lt.s32.totalorder %s19, 1
      %s286 = scalar_select %p285, %s19, 1
      %s287 = smul.addr %s286, 10
      %s288 = smul.addr %s287, 4
      %s289 = scalar_lea.vmem %s5, %s288
      %p290 = scmp.lt.s32.totalorder %s19, 1
      %s291 = scalar_select %p290, %s19, 1
      %s292 = scalar_lea.vmem %s6, %s291
      %p293 = scmp.lt.s32.totalorder %s19, 1
      %s294 = scalar_select %p293, %s19, 1
      %s295 = scalar_lea.vmem %s7, %s294
      %v297 = vld [vmem:[%s1] sm:$0x3]
      %v298 = vld [vmem:[%s284] sm:$0xf]
      %v299 = vld [vmem:[%s284 + $0x4] sm:$0xf]
      %v300 = vld [vmem:[%s284 + $0x8] sm:$0xf]
      %v301 = vld [vmem:[%s284 + $0xc] sm:$0xf]
      %v302 = vld [vmem:[%s284 + $0x10] sm:$0xf]
      %v303 = vld [vmem:[%s284 + $0x14] sm:$0xf]
      %v304 = vld [vmem:[%s284 + $0x18] sm:$0xf]
      %v305 = vld [vmem:[%s284 + $0x1c] sm:$0xf]
      %v306 = vld [vmem:[%s284 + $0x20] sm:$0xf]
      %v307 = vld [vmem:[%s284 + $0x24] sm:$0xf]
      %v308 = vunpack.c.l.bf16 %v298
      %v309 = vunpack.c.l.bf16 %v299
      %v310 = vunpack.c.l.bf16 %v300
      %v311 = vunpack.c.l.bf16 %v301
      %v312 = vunpack.c.l.bf16 %v302
      %v313 = vunpack.c.l.bf16 %v303
      %v314 = vunpack.c.l.bf16 %v304
      %v315 = vunpack.c.l.bf16 %v305
      %v316 = vunpack.c.l.bf16 %v306
      %v317 = vunpack.c.l.bf16 %v307
      %v318 = vperm.slane %v297, 0
      %v319 = vmul.f32 %v308, %v318
      %v320 = vmul.f32 %v309, %v318
      %v321 = vmul.f32 %v310, %v318
      %v322 = vmul.f32 %v311, %v318
      %v323 = vmul.f32 %v312, %v318
      %v324 = vmul.f32 %v313, %v318
      %v325 = vmul.f32 %v314, %v318
      %v326 = vmul.f32 %v315, %v318
      %v327 = vmul.f32 %v316, %v318
      %v328 = vmul.f32 %v317, %v318
      %v329 = vperm.slane %v297, 1
      %v330 = vadd.f32 %v319, %v329
      %v331 = vadd.f32 %v320, %v329
      %v332 = vadd.f32 %v321, %v329
      %v333 = vadd.f32 %v322, %v329
      %v334 = vadd.f32 %v323, %v329
      %v335 = vadd.f32 %v324, %v329
      %v336 = vadd.f32 %v325, %v329
      %v337 = vadd.f32 %v326, %v329
      %v338 = vadd.f32 %v327, %v329
      %v339 = vadd.f32 %v328, %v329
      %vm340 = vcmp.gt.f32.partialorder %v330, 0.0
      %vm341 = vcmp.gt.f32.partialorder %v331, 0.0
      %vm342 = vcmp.gt.f32.partialorder %v332, 0.0
      %vm343 = vcmp.gt.f32.partialorder %v333, 0.0
      %vm344 = vcmp.gt.f32.partialorder %v334, 0.0
      %vm345 = vcmp.gt.f32.partialorder %v335, 0.0
      %vm346 = vcmp.gt.f32.partialorder %v336, 0.0
      %vm347 = vcmp.gt.f32.partialorder %v337, 0.0
      %vm348 = vcmp.gt.f32.partialorder %v338, 0.0
      %vm349 = vcmp.gt.f32.partialorder %v339, 0.0
      %v350 = vmin.f32 %v330, 0.0
      %v351 = vmin.f32 %v331, 0.0
      %v352 = vmin.f32 %v332, 0.0
      %v353 = vmin.f32 %v333, 0.0
      %v354 = vmin.f32 %v334, 0.0
      %v355 = vmin.f32 %v335, 0.0
      %v356 = vmin.f32 %v336, 0.0
      %v357 = vmin.f32 %v337, 0.0
      %v358 = vmin.f32 %v338, 0.0
      %v359 = vmin.f32 %v339, 0.0
      %v360 = vmul.f32 %v350, 1.442695
      %v361 = vpow.pop %v360
      %v362 = vmul.f32 %v351, 1.442695
      %v363 = vpow.pop %v362
      %v364 = vmul.f32 %v352, 1.442695
      %v365 = vpow.pop %v364
      %v366 = vmul.f32 %v353, 1.442695
      %v367 = vpow.pop %v366
      %v368 = vmul.f32 %v354, 1.442695
      %v369 = vpow.pop %v368
      %v370 = vmul.f32 %v355, 1.442695
      %v371 = vpow.pop %v370
      %v372 = vmul.f32 %v356, 1.442695
      %v373 = vpow.pop %v372
      %v374 = vmul.f32 %v357, 1.442695
      %v375 = vpow.pop %v374
      %v376 = vmul.f32 %v358, 1.442695
      %v377 = vpow.pop %v376
      %v378 = vmul.f32 %v359, 1.442695
      %v379 = vpow.pop %v378
      %v380 = vsub.f32 %v361, 1.0
      %v381 = vsub.f32 %v363, 1.0
      %v382 = vsub.f32 %v365, 1.0
      %v383 = vsub.f32 %v367, 1.0
      %v384 = vsub.f32 %v369, 1.0
      %v385 = vsub.f32 %v371, 1.0
      %v386 = vsub.f32 %v373, 1.0
      %v387 = vsub.f32 %v375, 1.0
      %v388 = vsub.f32 %v377, 1.0
      %v389 = vsub.f32 %v379, 1.0
      %v390 = vsel %vm340, %v330, %v380
      %v391 = vsel %vm341, %v331, %v381
      %v392 = vsel %vm342, %v332, %v382
      %v393 = vsel %vm343, %v333, %v383
      %v394 = vsel %vm344, %v334, %v384
      %v395 = vsel %vm345, %v335, %v385
      %v396 = vsel %vm346, %v336, %v386
      %v397 = vsel %vm347, %v337, %v387
      %v398 = vsel %vm348, %v338, %v388
      %v399 = vsel %vm349, %v339, %v389
      %v400 = vld [vmem:[%s4] sm:$0xff]
      %v401 = vld [vmem:[%s4 + $0x8] sm:$0xff]
      %v402 = vld [vmem:[%s4 + $0x10] sm:$0xff]
      %v403 = vld [vmem:[%s4 + $0x18] sm:$0xff]
      %v404 = vld [vmem:[%s4 + $0x20] sm:$0xff]
      %v405 = vld [vmem:[%s4 + $0x28] sm:$0xff]
      %v406 = vld [vmem:[%s4 + $0x30] sm:$0xff]
      %v407 = vld [vmem:[%s4 + $0x38] sm:$0xff]
      %v408 = vld [vmem:[%s4 + $0x40] sm:$0xff]
      %v409 = vld [vmem:[%s4 + $0x48] sm:$0xff]
      %411 = vset.pattern.permute.xlu0 0
      %412 = vperm.xlu0 %411, %v400
      %v413 = vpop.permute.xlu0 %412
      %416 = vset.pattern.permute.xlu0 0
      %417 = vperm.xlu0 %416, %v401
      %v418 = vpop.permute.xlu0 %417
      %421 = vset.pattern.permute.xlu0 0
      %422 = vperm.xlu0 %421, %v402
      %v423 = vpop.permute.xlu0 %422
      %426 = vset.pattern.permute.xlu0 0
      %427 = vperm.xlu0 %426, %v403
      %v428 = vpop.permute.xlu0 %427
      %431 = vset.pattern.permute.xlu0 0
      %432 = vperm.xlu0 %431, %v404
      %v433 = vpop.permute.xlu0 %432
      %436 = vset.pattern.permute.xlu0 0
      %437 = vperm.xlu0 %436, %v405
      %v438 = vpop.permute.xlu0 %437
      %441 = vset.pattern.permute.xlu0 0
      %442 = vperm.xlu0 %441, %v406
      %v443 = vpop.permute.xlu0 %442
      %446 = vset.pattern.permute.xlu0 0
      %447 = vperm.xlu0 %446, %v407
      %v448 = vpop.permute.xlu0 %447
      %451 = vset.pattern.permute.xlu0 0
      %452 = vperm.xlu0 %451, %v408
      %v453 = vpop.permute.xlu0 %452
      %456 = vset.pattern.permute.xlu0 0
      %457 = vperm.xlu0 %456, %v409
      %v458 = vpop.permute.xlu0 %457
      %v460 = vmul.f32 %v390, %v413
      %v461 = vmul.f32 %v391, %v418
      %v462 = vmul.f32 %v392, %v423
      %v463 = vmul.f32 %v393, %v428
      %v464 = vmul.f32 %v394, %v433
      %v465 = vmul.f32 %v395, %v438
      %v466 = vmul.f32 %v396, %v443
      %v467 = vmul.f32 %v397, %v448
      %v468 = vmul.f32 %v398, %v453
      %v469 = vmul.f32 %v399, %v458
      %vm470 = vcmask 125952
      %471 = vst.msk [vmem:[#allocation2] sm:$0xf] %vm470, 0
      %472 = vst.msk [vmem:[#allocation2 + $0x4] sm:$0xf] %vm470, 0
      %473 = vst.msk [vmem:[#allocation2 + $0x8] sm:$0xf] %vm470, 0
      %474 = vst.msk [vmem:[#allocation2 + $0xc] sm:$0xf] %vm470, 0
      %475 = vst.msk [vmem:[#allocation2 + $0x10] sm:$0xf] %vm470, 0
      %476 = vst.msk [vmem:[#allocation2 + $0x14] sm:$0xf] %vm470, 0
      %477 = vst.msk [vmem:[#allocation2 + $0x18] sm:$0xf] %vm470, 0
      %478 = vst.msk [vmem:[#allocation2 + $0x1c] sm:$0xf] %vm470, 0
      %479 = vst.msk [vmem:[#allocation2 + $0x20] sm:$0xf] %vm470, 0
      %480 = vst.msk [vmem:[#allocation2 + $0x24] sm:$0xf] %vm470, 0
      %481 = vst.msk [vmem:[#allocation2 + $0x28] sm:$0xf] %vm470, 0
      %482 = vst.msk [vmem:[#allocation2 + $0x2c] sm:$0xf] %vm470, 0
      %483 = vst.msk [vmem:[#allocation2 + $0x30] sm:$0xf] %vm470, 0
      %484 = vst.msk [vmem:[#allocation2 + $0x34] sm:$0xf] %vm470, 0
      %v485 = vpack.c.bf16 %v460, %v460
      %v486 = vpack.c.bf16 %v461, %v461
      %v487 = vpack.c.bf16 %v462, %v462
      %v488 = vpack.c.bf16 %v463, %v463
      %v489 = vpack.c.bf16 %v464, %v464
      %v490 = vpack.c.bf16 %v465, %v465
      %v491 = vpack.c.bf16 %v466, %v466
      %v492 = vpack.c.bf16 %v467, %v467
      %v493 = vpack.c.bf16 %v468, %v468
      %v494 = vpack.c.bf16 %v469, %v469
      %495 = vst.msk [vmem:[#allocation2 + $0x8] sm:$0xf] %vm470, %v485
      %496 = vst.msk [vmem:[#allocation2 + $0xc] sm:$0xf] %vm470, %v486
      %497 = vst.msk [vmem:[#allocation2 + $0x10] sm:$0xf] %vm470, %v487
      %498 = vst.msk [vmem:[#allocation2 + $0x14] sm:$0xf] %vm470, %v488
      %499 = vst.msk [vmem:[#allocation2 + $0x18] sm:$0xf] %vm470, %v489
      %500 = vst.msk [vmem:[#allocation2 + $0x1c] sm:$0xf] %vm470, %v490
      %501 = vst.msk [vmem:[#allocation2 + $0x20] sm:$0xf] %vm470, %v491
      %502 = vst.msk [vmem:[#allocation2 + $0x24] sm:$0xf] %vm470, %v492
      %503 = vst.msk [vmem:[#allocation2 + $0x28] sm:$0xf] %vm470, %v493
      %504 = vst.msk [vmem:[#allocation2 + $0x2c] sm:$0xf] %vm470, %v494
      %v505 = vld [vmem:[#allocation2] sm:$0xc]
      %v506 = vld [vmem:[#allocation2 + $0x4] sm:$0xf]
      %v507 = vld [vmem:[#allocation2 + $0x8] sm:$0xf]
      %v508 = vld [vmem:[#allocation2 + $0xc] sm:$0xf]
      %v509 = vld [vmem:[#allocation2 + $0x10] sm:$0xf]
      %v510 = vld [vmem:[#allocation2 + $0x14] sm:$0xf]
      %v511 = vld [vmem:[#allocation2 + $0x18] sm:$0xf]
      %v512 = vld [vmem:[#allocation2 + $0x1c] sm:$0xf]
      %v513 = vld [vmem:[#allocation2 + $0x20] sm:$0xf]
      %v514 = vld [vmem:[#allocation2 + $0x24] sm:$0xf]
      %v515 = vld [vmem:[#allocation2 + $0x28] sm:$0x7]
      %v516 = vld [vmem:[%s2] sm:$0xf]
      %v517 = vld [vmem:[%s2 + $0x4] sm:$0xf]
      %v518 = vld [vmem:[#allocation2] sm:$0x8]
      %s519 = scalar_lea.vmem %s2, 8
      %v520 = vld [vmem:[%s519] sm:$0xf]
      %v521 = vld [vmem:[%s519 + $0x4] sm:$0xf]
      %v533 = vunpack.c.l.b16 %v518
      %v534 = vunpack.c.l.b16 %v506
      %v535 = vunpack.c.l.b16 %v507
      %v536 = vunpack.c.l.b16 %v508
      %v537 = vunpack.c.l.b16 %v509
      %v538 = vunpack.c.l.b16 %v510
      %v539 = vunpack.c.l.b16 %v511
      %v540 = vunpack.c.l.b16 %v512
      %v541 = vunpack.c.l.b16 %v513
      %v542 = vunpack.c.l.b16 %v514
      %v543 = vunpack.c.l.b16 %v515
      %v544 = vpack.c.b16 %v534, %v533
      %v545 = vpack.c.b16 %v536, %v535
      %v546 = vpack.c.b16 %v538, %v537
      %v547 = vpack.c.b16 %v540, %v539
      %v548 = vpack.c.b16 %v542, %v541
      %v549 = vpack.c.b16 %v543, %v543
      %vm550 = vcmask 1044480
      %v551 = vrot.slane %v544, 3
      %v552 = vrot.slane %v545, 3
      %v553 = vsel %vm550, %v551, %v552
      %v554 = vrot.slane %v546, 3
      %v555 = vsel %vm550, %v552, %v554
      %v556 = vrot.slane %v547, 3
      %v557 = vsel %vm550, %v554, %v556
      %v558 = vrot.slane %v548, 3
      %v559 = vsel %vm550, %v556, %v558
      %v560 = vrot.slane %v549, 3
      %v561 = vsel %vm550, %v558, %v560
      %v564 = vunpack.c.l.b16 %v520
      %v565 = vunpack.c.l.b16 %v521
      %v566 = vpack.c.b16 %v565, %v564
      %vm568 = vcmask 130048
      %v570 = vsel %vm568, %v553, 0
      %v573 = vsel %vm568, %v555, 0
      %v576 = vsel %vm568, %v557, 0
      %v579 = vsel %vm568, %v559, 0
      %v582 = vsel %vm568, %v561, 0
      %584 = vmatpush.bf16.msra.mxu0 0
      %585 = vmatpush.bf16.msra.mxu0 0
      %586 = vmatpush.bf16.msra.mxu0 0
      %587 = vmatpush.bf16.msra.mxu0 0
      %588 = vmatpush.bf16.msra.mxu0 0
      %589 = vmatpush.bf16.msra.mxu0 0
      %590 = vmatpush.bf16.msra.mxu0 0
      %591 = vmatpush.bf16.msra.mxu0 %v566
      %592 = vmatmul.bf16.gmra.mxu0 %v570
      %v593 = vpop.f32.mrf.mxu0
      %v594 = vadd.f32 0.0, %v593
      %v595 = vpop.f32.mrf.mxu0
      %v596 = vadd.f32 0.0, %v595
      %597 = vmatmul.bf16.gmra.mxu0 %v573
      %v598 = vpop.f32.mrf.mxu0
      %v599 = vadd.f32 0.0, %v598
      %v600 = vpop.f32.mrf.mxu0
      %v601 = vadd.f32 0.0, %v600
      %602 = vmatmul.bf16.gmra.mxu0 %v576
      %v603 = vpop.f32.mrf.mxu0
      %v604 = vadd.f32 0.0, %v603
      %v605 = vpop.f32.mrf.mxu0
      %v606 = vadd.f32 0.0, %v605
      %607 = vmatmul.bf16.gmra.mxu0 %v579
      %v608 = vpop.f32.mrf.mxu0
      %v609 = vadd.f32 0.0, %v608
      %v610 = vpop.f32.mrf.mxu0
      %v611 = vadd.f32 0.0, %v610
      %612 = vmatmul.bf16.gmra.mxu0 %v582
      %v613 = vpop.f32.mrf.mxu0
      %v614 = vadd.f32 0.0, %v613
      %v615 = vpop.f32.mrf.mxu0
      %v616 = vadd.f32 0.0, %v615
      %617 = vdwg.mxu0
      %v619 = vunpack.c.l.b16 %v505
      %v620 = vpack.c.b16 %v534, %v619
      %vm621 = vsmask.f32 5376
      %v623 = vshrl.u32 %v620, 16
      %v625 = vrot.slane %v623, 2
      %v626 = vshll.u32 %v620, 16
      %v628 = vrot.slane %v626, 3
      %v629 = vor.u32 %v625, %v628
      %v631 = vshrl.u32 %v545, 16
      %v633 = vrot.slane %v631, 2
      %v634 = vshll.u32 %v545, 16
      %v636 = vrot.slane %v634, 3
      %v637 = vor.u32 %v633, %v636
      %v638 = vsel %vm621, %v629, %v637
      %v640 = vshrl.u32 %v546, 16
      %v642 = vrot.slane %v640, 2
      %v643 = vshll.u32 %v546, 16
      %v645 = vrot.slane %v643, 3
      %v646 = vor.u32 %v642, %v645
      %v647 = vsel %vm621, %v637, %v646
      %v649 = vshrl.u32 %v547, 16
      %v651 = vrot.slane %v649, 2
      %v652 = vshll.u32 %v547, 16
      %v654 = vrot.slane %v652, 3
      %v655 = vor.u32 %v651, %v654
      %v656 = vsel %vm621, %v646, %v655
      %v658 = vshrl.u32 %v548, 16
      %v660 = vrot.slane %v658, 2
      %v661 = vshll.u32 %v548, 16
      %v663 = vrot.slane %v661, 3
      %v664 = vor.u32 %v660, %v663
      %v665 = vsel %vm621, %v655, %v664
      %v667 = vshrl.u32 %v549, 16
      %v669 = vrot.slane %v667, 2
      %v670 = vshll.u32 %v549, 16
      %v672 = vrot.slane %v670, 3
      %v673 = vor.u32 %v669, %v672
      %v674 = vsel %vm621, %v664, %v673
      %v677 = vunpack.c.l.b16 %v516
      %v678 = vunpack.c.l.b16 %v517
      %v679 = vpack.c.b16 %v678, %v677
      %v682 = vsel %vm568, %v638, 0
      %v685 = vsel %vm568, %v647, 0
      %v688 = vsel %vm568, %v656, 0
      %v691 = vsel %vm568, %v665, 0
      %v694 = vsel %vm568, %v674, 0
      %696 = vmatpush.bf16.msra.mxu0 0
      %697 = vmatpush.bf16.msra.mxu0 0
      %698 = vmatpush.bf16.msra.mxu0 0
      %699 = vmatpush.bf16.msra.mxu0 0
      %700 = vmatpush.bf16.msra.mxu0 0
      %701 = vmatpush.bf16.msra.mxu0 0
      %702 = vmatpush.bf16.msra.mxu0 0
      %703 = vmatpush.bf16.msra.mxu0 %v679
      %704 = vmatmul.bf16.gmra.mxu0 %v682
      %v705 = vpop.f32.mrf.mxu0
      %v706 = vadd.f32 %v594, %v705
      %v707 = vpop.f32.mrf.mxu0
      %v708 = vadd.f32 %v596, %v707
      %709 = vmatmul.bf16.gmra.mxu0 %v685
      %v710 = vpop.f32.mrf.mxu0
      %v711 = vadd.f32 %v599, %v710
      %v712 = vpop.f32.mrf.mxu0
      %v713 = vadd.f32 %v601, %v712
      %714 = vmatmul.bf16.gmra.mxu0 %v688
      %v715 = vpop.f32.mrf.mxu0
      %v716 = vadd.f32 %v604, %v715
      %v717 = vpop.f32.mrf.mxu0
      %v718 = vadd.f32 %v606, %v717
      %719 = vmatmul.bf16.gmra.mxu0 %v691
      %v720 = vpop.f32.mrf.mxu0
      %v721 = vadd.f32 %v609, %v720
      %v722 = vpop.f32.mrf.mxu0
      %v723 = vadd.f32 %v611, %v722
      %724 = vmatmul.bf16.gmra.mxu0 %v694
      %v725 = vpop.f32.mrf.mxu0
      %v726 = vadd.f32 %v614, %v725
      %v727 = vpop.f32.mrf.mxu0
      %v728 = vadd.f32 %v616, %v727
      %729 = vdwg.mxu0
      %v730 = vld [vmem:[#allocation2 + $0x28] sm:$0xf]
      %s731 = scalar_lea.vmem %s2, 16
      %v732 = vld [vmem:[%s731] sm:$0xf]
      %v733 = vld [vmem:[%s731 + $0x4] sm:$0xf]
      %v735 = vunpack.c.l.b16 %v730
      %v736 = vpack.c.b16 %v735, %v735
      %vm737 = vsmask.f32 4352
      %v739 = vshrl.u32 %v544, 16
      %v741 = vrot.slane %v739, 3
      %v742 = vshll.u32 %v544, 16
      %v744 = vrot.slane %v742, 4
      %v745 = vor.u32 %v741, %v744
      %v746 = vrot.slane %v631, 3
      %v747 = vrot.slane %v634, 4
      %v748 = vor.u32 %v746, %v747
      %v749 = vsel %vm737, %v745, %v748
      %v750 = vrot.slane %v640, 3
      %v751 = vrot.slane %v643, 4
      %v752 = vor.u32 %v750, %v751
      %v753 = vsel %vm737, %v748, %v752
      %v754 = vrot.slane %v649, 3
      %v755 = vrot.slane %v652, 4
      %v756 = vor.u32 %v754, %v755
      %v757 = vsel %vm737, %v752, %v756
      %v758 = vrot.slane %v658, 3
      %v759 = vrot.slane %v661, 4
      %v760 = vor.u32 %v758, %v759
      %v761 = vsel %vm737, %v756, %v760
      %v763 = vshrl.u32 %v736, 16
      %v765 = vrot.slane %v763, 3
      %v766 = vshll.u32 %v736, 16
      %v768 = vrot.slane %v766, 4
      %v769 = vor.u32 %v765, %v768
      %v770 = vsel %vm737, %v760, %v769
      %v773 = vunpack.c.l.b16 %v732
      %v774 = vunpack.c.l.b16 %v733
      %v775 = vpack.c.b16 %v774, %v773
      %v778 = vsel %vm568, %v749, 0
      %v781 = vsel %vm568, %v753, 0
      %v784 = vsel %vm568, %v757, 0
      %v787 = vsel %vm568, %v761, 0
      %v790 = vsel %vm568, %v770, 0
      %792 = vmatpush.bf16.msra.mxu0 0
      %793 = vmatpush.bf16.msra.mxu0 0
      %794 = vmatpush.bf16.msra.mxu0 0
      %795 = vmatpush.bf16.msra.mxu0 0
      %796 = vmatpush.bf16.msra.mxu0 0
      %797 = vmatpush.bf16.msra.mxu0 0
      %798 = vmatpush.bf16.msra.mxu0 0
      %799 = vmatpush.bf16.msra.mxu0 %v775
      %800 = vmatmul.bf16.gmra.mxu0 %v778
      %v801 = vpop.f32.mrf.mxu0
      %v802 = vadd.f32 0.0, %v801
      %v803 = vpop.f32.mrf.mxu0
      %v804 = vadd.f32 0.0, %v803
      %805 = vmatmul.bf16.gmra.mxu0 %v781
      %v806 = vpop.f32.mrf.mxu0
      %v807 = vadd.f32 0.0, %v806
      %v808 = vpop.f32.mrf.mxu0
      %v809 = vadd.f32 0.0, %v808
      %810 = vmatmul.bf16.gmra.mxu0 %v784
      %v811 = vpop.f32.mrf.mxu0
      %v812 = vadd.f32 0.0, %v811
      %v813 = vpop.f32.mrf.mxu0
      %v814 = vadd.f32 0.0, %v813
      %815 = vmatmul.bf16.gmra.mxu0 %v787
      %v816 = vpop.f32.mrf.mxu0
      %v817 = vadd.f32 0.0, %v816
      %v818 = vpop.f32.mrf.mxu0
      %v819 = vadd.f32 0.0, %v818
      %820 = vmatmul.bf16.gmra.mxu0 %v790
      %v821 = vpop.f32.mrf.mxu0
      %v822 = vadd.f32 0.0, %v821
      %v823 = vpop.f32.mrf.mxu0
      %v824 = vadd.f32 0.0, %v823
      %825 = vdwg.mxu0
      %v826 = vadd.f32 %v706, %v802
      %v827 = vadd.f32 %v708, %v804
      %v828 = vadd.f32 %v711, %v807
      %v829 = vadd.f32 %v713, %v809
      %v830 = vadd.f32 %v716, %v812
      %v831 = vadd.f32 %v718, %v814
      %v832 = vadd.f32 %v721, %v817
      %v833 = vadd.f32 %v723, %v819
      %v834 = vadd.f32 %v726, %v822
      %v835 = vadd.f32 %v728, %v824
      %v836 = vld [vmem:[#allocation2 + $0x4] sm:$0x8]
      %v837 = vld [vmem:[#allocation2 + $0x8] sm:$0xf]
      %v838 = vld [vmem:[#allocation2 + $0xc] sm:$0xf]
      %v839 = vld [vmem:[#allocation2 + $0x10] sm:$0xf]
      %v840 = vld [vmem:[#allocation2 + $0x14] sm:$0xf]
      %v841 = vld [vmem:[#allocation2 + $0x18] sm:$0xf]
      %v842 = vld [vmem:[#allocation2 + $0x1c] sm:$0xf]
      %v843 = vld [vmem:[#allocation2 + $0x20] sm:$0xf]
      %v844 = vld [vmem:[#allocation2 + $0x24] sm:$0xf]
      %v845 = vld [vmem:[#allocation2 + $0x28] sm:$0xf]
      %v846 = vld [vmem:[#allocation2 + $0x2c] sm:$0xf]
      %s847 = scalar_lea.vmem %s2, 24
      %v848 = vld [vmem:[%s847] sm:$0xf]
      %v849 = vld [vmem:[%s847 + $0x4] sm:$0xf]
      %v861 = vunpack.c.l.b16 %v836
      %v862 = vunpack.c.l.b16 %v837
      %v863 = vunpack.c.l.b16 %v838
      %v864 = vunpack.c.l.b16 %v839
      %v865 = vunpack.c.l.b16 %v840
      %v866 = vunpack.c.l.b16 %v841
      %v867 = vunpack.c.l.b16 %v842
      %v868 = vunpack.c.l.b16 %v843
      %v869 = vunpack.c.l.b16 %v844
      %v870 = vunpack.c.l.b16 %v845
      %v871 = vunpack.c.l.b16 %v846
      %v872 = vpack.c.b16 %v862, %v861
      %v873 = vpack.c.b16 %v864, %v863
      %v874 = vpack.c.b16 %v866, %v865
      %v875 = vpack.c.b16 %v868, %v867
      %v876 = vpack.c.b16 %v870, %v869
      %v877 = vpack.c.b16 %v871, %v871
      %v879 = vshrl.u32 %v872, 16
      %v881 = vrot.slane %v879, 3
      %v882 = vshll.u32 %v872, 16
      %v884 = vrot.slane %v882, 4
      %v885 = vor.u32 %v881, %v884
      %v887 = vshrl.u32 %v873, 16
      %v889 = vrot.slane %v887, 3
      %v890 = vshll.u32 %v873, 16
      %v892 = vrot.slane %v890, 4
      %v893 = vor.u32 %v889, %v892
      %v894 = vsel %vm737, %v885, %v893
      %v896 = vshrl.u32 %v874, 16
      %v898 = vrot.slane %v896, 3
      %v899 = vshll.u32 %v874, 16
      %v901 = vrot.slane %v899, 4
      %v902 = vor.u32 %v898, %v901
      %v903 = vsel %vm737, %v893, %v902
      %v905 = vshrl.u32 %v875, 16
      %v907 = vrot.slane %v905, 3
      %v908 = vshll.u32 %v875, 16
      %v910 = vrot.slane %v908, 4
      %v911 = vor.u32 %v907, %v910
      %v912 = vsel %vm737, %v902, %v911
      %v914 = vshrl.u32 %v876, 16
      %v916 = vrot.slane %v914, 3
      %v917 = vshll.u32 %v876, 16
      %v919 = vrot.slane %v917, 4
      %v920 = vor.u32 %v916, %v919
      %v921 = vsel %vm737, %v911, %v920
      %v923 = vshrl.u32 %v877, 16
      %v925 = vrot.slane %v923, 3
      %v926 = vshll.u32 %v877, 16
      %v928 = vrot.slane %v926, 4
      %v929 = vor.u32 %v925, %v928
      %v930 = vsel %vm737, %v920, %v929
      %v933 = vunpack.c.l.b16 %v848
      %v934 = vunpack.c.l.b16 %v849
      %v935 = vpack.c.b16 %v934, %v933
      %v938 = vsel %vm568, %v894, 0
      %v941 = vsel %vm568, %v903, 0
      %v944 = vsel %vm568, %v912, 0
      %v947 = vsel %vm568, %v921, 0
      %v950 = vsel %vm568, %v930, 0
      %952 = vmatpush.bf16.msra.mxu0 0
      %953 = vmatpush.bf16.msra.mxu0 0
      %954 = vmatpush.bf16.msra.mxu0 0
      %955 = vmatpush.bf16.msra.mxu0 0
      %956 = vmatpush.bf16.msra.mxu0 0
      %957 = vmatpush.bf16.msra.mxu0 0
      %958 = vmatpush.bf16.msra.mxu0 0
      %959 = vmatpush.bf16.msra.mxu0 %v935
      %960 = vmatmul.bf16.gmra.mxu0 %v938
      %v961 = vpop.f32.mrf.mxu0
      %v962 = vadd.f32 0.0, %v961
      %v963 = vpop.f32.mrf.mxu0
      %v964 = vadd.f32 0.0, %v963
      %965 = vmatmul.bf16.gmra.mxu0 %v941
      %v966 = vpop.f32.mrf.mxu0
      %v967 = vadd.f32 0.0, %v966
      %v968 = vpop.f32.mrf.mxu0
      %v969 = vadd.f32 0.0, %v968
      %970 = vmatmul.bf16.gmra.mxu0 %v944
      %v971 = vpop.f32.mrf.mxu0
      %v972 = vadd.f32 0.0, %v971
      %v973 = vpop.f32.mrf.mxu0
      %v974 = vadd.f32 0.0, %v973
      %975 = vmatmul.bf16.gmra.mxu0 %v947
      %v976 = vpop.f32.mrf.mxu0
      %v977 = vadd.f32 0.0, %v976
      %v978 = vpop.f32.mrf.mxu0
      %v979 = vadd.f32 0.0, %v978
      %980 = vmatmul.bf16.gmra.mxu0 %v950
      %v981 = vpop.f32.mrf.mxu0
      %v982 = vadd.f32 0.0, %v981
      %v983 = vpop.f32.mrf.mxu0
      %v984 = vadd.f32 0.0, %v983
      %985 = vdwg.mxu0
      %v986 = vadd.f32 %v826, %v962
      %v987 = vadd.f32 %v827, %v964
      %v988 = vadd.f32 %v828, %v967
      %v989 = vadd.f32 %v829, %v969
      %v990 = vadd.f32 %v830, %v972
      %v991 = vadd.f32 %v831, %v974
      %v992 = vadd.f32 %v832, %v977
      %v993 = vadd.f32 %v833, %v979
      %v994 = vadd.f32 %v834, %v982
      %v995 = vadd.f32 %v835, %v984
      %s996 = scalar_lea.vmem %s2, 32
      %v997 = vld [vmem:[%s996] sm:$0xf]
      %v998 = vld [vmem:[%s996 + $0x4] sm:$0xf]
      %v999 = vpack.c.b16 %v863, %v862
      %v1000 = vpack.c.b16 %v865, %v864
      %v1001 = vpack.c.b16 %v867, %v866
      %v1002 = vpack.c.b16 %v869, %v868
      %v1003 = vpack.c.b16 %v871, %v870
      %v1006 = vunpack.c.l.b16 %v997
      %v1007 = vunpack.c.l.b16 %v998
      %v1008 = vpack.c.b16 %v1007, %v1006
      %v1011 = vsel %vm568, %v999, 0
      %v1014 = vsel %vm568, %v1000, 0
      %v1017 = vsel %vm568, %v1001, 0
      %v1020 = vsel %vm568, %v1002, 0
      %v1023 = vsel %vm568, %v1003, 0
      %1025 = vmatpush.bf16.msra.mxu0 0
      %1026 = vmatpush.bf16.msra.mxu0 0
      %1027 = vmatpush.bf16.msra.mxu0 0
      %1028 = vmatpush.bf16.msra.mxu0 0
      %1029 = vmatpush.bf16.msra.mxu0 0
      %1030 = vmatpush.bf16.msra.mxu0 0
      %1031 = vmatpush.bf16.msra.mxu0 0
      %1032 = vmatpush.bf16.msra.mxu0 %v1008
      %1033 = vmatmul.bf16.gmra.mxu0 %v1011
      %v1034 = vpop.f32.mrf.mxu0
      %v1035 = vadd.f32 0.0, %v1034
      %v1036 = vpop.f32.mrf.mxu0
      %v1037 = vadd.f32 0.0, %v1036
      %1038 = vmatmul.bf16.gmra.mxu0 %v1014
      %v1039 = vpop.f32.mrf.mxu0
      %v1040 = vadd.f32 0.0, %v1039
      %v1041 = vpop.f32.mrf.mxu0
      %v1042 = vadd.f32 0.0, %v1041
      %1043 = vmatmul.bf16.gmra.mxu0 %v1017
      %v1044 = vpop.f32.mrf.mxu0
      %v1045 = vadd.f32 0.0, %v1044
      %v1046 = vpop.f32.mrf.mxu0
      %v1047 = vadd.f32 0.0, %v1046
      %1048 = vmatmul.bf16.gmra.mxu0 %v1020
      %v1049 = vpop.f32.mrf.mxu0
      %v1050 = vadd.f32 0.0, %v1049
      %v1051 = vpop.f32.mrf.mxu0
      %v1052 = vadd.f32 0.0, %v1051
      %1053 = vmatmul.bf16.gmra.mxu0 %v1023
      %v1054 = vpop.f32.mrf.mxu0
      %v1055 = vadd.f32 0.0, %v1054
      %v1056 = vpop.f32.mrf.mxu0
      %v1057 = vadd.f32 0.0, %v1056
      %1058 = vdwg.mxu0
      %v1059 = vadd.f32 %v986, %v1035
      %v1060 = vadd.f32 %v987, %v1037
      %v1061 = vadd.f32 %v988, %v1040
      %v1062 = vadd.f32 %v989, %v1042
      %v1063 = vadd.f32 %v990, %v1045
      %v1064 = vadd.f32 %v991, %v1047
      %v1065 = vadd.f32 %v992, %v1050
      %v1066 = vadd.f32 %v993, %v1052
      %v1067 = vadd.f32 %v994, %v1055
      %v1068 = vadd.f32 %v995, %v1057
      %v1069 = vld [vmem:[#allocation2 + $0x8] sm:$0xf]
      %v1070 = vld [vmem:[#allocation2 + $0xc] sm:$0xf]
      %v1071 = vld [vmem:[#allocation2 + $0x10] sm:$0xf]
      %v1072 = vld [vmem:[#allocation2 + $0x14] sm:$0xf]
      %v1073 = vld [vmem:[#allocation2 + $0x18] sm:$0xf]
      %v1074 = vld [vmem:[#allocation2 + $0x1c] sm:$0xf]
      %v1075 = vld [vmem:[#allocation2 + $0x20] sm:$0xf]
      %v1076 = vld [vmem:[#allocation2 + $0x24] sm:$0xf]
      %v1077 = vld [vmem:[#allocation2 + $0x28] sm:$0xf]
      %v1078 = vld [vmem:[#allocation2 + $0x2c] sm:$0xf]
      %v1079 = vld [vmem:[#allocation2 + $0x30] sm:$0x1]
      %s1080 = scalar_lea.vmem %s2, 40
      %v1081 = vld [vmem:[%s1080] sm:$0xf]
      %v1082 = vld [vmem:[%s1080 + $0x4] sm:$0xf]
      %v1094 = vunpack.c.l.b16 %v1069
      %v1095 = vunpack.c.l.b16 %v1070
      %v1096 = vunpack.c.l.b16 %v1071
      %v1097 = vunpack.c.l.b16 %v1072
      %v1098 = vunpack.c.l.b16 %v1073
      %v1099 = vunpack.c.l.b16 %v1074
      %v1100 = vunpack.c.l.b16 %v1075
      %v1101 = vunpack.c.l.b16 %v1076
      %v1102 = vunpack.c.l.b16 %v1077
      %v1103 = vunpack.c.l.b16 %v1078
      %v1104 = vunpack.c.l.b16 %v1079
      %v1105 = vpack.c.b16 %v1095, %v1094
      %v1106 = vpack.c.b16 %v1097, %v1096
      %v1107 = vpack.c.b16 %v1099, %v1098
      %v1108 = vpack.c.b16 %v1101, %v1100
      %v1109 = vpack.c.b16 %v1103, %v1102
      %v1110 = vpack.c.b16 %v1104, %v1104
      %vm1111 = vsmask.f32 7424
      %v1113 = vshrl.u32 %v1105, 16
      %v1115 = vshll.u32 %v1105, 16
      %v1117 = vrot.slane %v1115, 1
      %v1118 = vor.u32 %v1113, %v1117
      %v1120 = vshll.u32 %v1106, 16
      %v1122 = vrot.slane %v1120, 1
      %v1123 = vsel %vm1111, %v1118, %v1122
      %v1124 = vshrl.u32 %v1106, 16
      %v1126 = vor.u32 %v1124, %v1122
      %v1128 = vshll.u32 %v1107, 16
      %v1130 = vrot.slane %v1128, 1
      %v1131 = vsel %vm1111, %v1126, %v1130
      %v1132 = vshrl.u32 %v1107, 16
      %v1134 = vor.u32 %v1132, %v1130
      %v1136 = vshll.u32 %v1108, 16
      %v1138 = vrot.slane %v1136, 1
      %v1139 = vsel %vm1111, %v1134, %v1138
      %v1140 = vshrl.u32 %v1108, 16
      %v1142 = vor.u32 %v1140, %v1138
      %v1144 = vshll.u32 %v1109, 16
      %v1146 = vrot.slane %v1144, 1
      %v1147 = vsel %vm1111, %v1142, %v1146
      %v1148 = vshrl.u32 %v1109, 16
      %v1150 = vor.u32 %v1148, %v1146
      %v1152 = vshll.u32 %v1110, 16
      %v1154 = vrot.slane %v1152, 1
      %v1155 = vsel %vm1111, %v1150, %v1154
      %v1158 = vunpack.c.l.b16 %v1081
      %v1159 = vunpack.c.l.b16 %v1082
      %v1160 = vpack.c.b16 %v1159, %v1158
      %v1163 = vsel %vm568, %v1123, 0
      %v1166 = vsel %vm568, %v1131, 0
      %v1169 = vsel %vm568, %v1139, 0
      %v1172 = vsel %vm568, %v1147, 0
      %v1175 = vsel %vm568, %v1155, 0
      %1177 = vmatpush.bf16.msra.mxu0 0
      %1178 = vmatpush.bf16.msra.mxu0 0
      %1179 = vmatpush.bf16.msra.mxu0 0
      %1180 = vmatpush.bf16.msra.mxu0 0
      %1181 = vmatpush.bf16.msra.mxu0 0
      %1182 = vmatpush.bf16.msra.mxu0 0
      %1183 = vmatpush.bf16.msra.mxu0 0
      %1184 = vmatpush.bf16.msra.mxu0 %v1160
      %1185 = vmatmul.bf16.gmra.mxu0 %v1163
      %v1186 = vpop.f32.mrf.mxu0
      %v1187 = vadd.f32 0.0, %v1186
      %v1188 = vpop.f32.mrf.mxu0
      %v1189 = vadd.f32 0.0, %v1188
      %1190 = vmatmul.bf16.gmra.mxu0 %v1166
      %v1191 = vpop.f32.mrf.mxu0
      %v1192 = vadd.f32 0.0, %v1191
      %v1193 = vpop.f32.mrf.mxu0
      %v1194 = vadd.f32 0.0, %v1193
      %1195 = vmatmul.bf16.gmra.mxu0 %v1169
      %v1196 = vpop.f32.mrf.mxu0
      %v1197 = vadd.f32 0.0, %v1196
      %v1198 = vpop.f32.mrf.mxu0
      %v1199 = vadd.f32 0.0, %v1198
      %1200 = vmatmul.bf16.gmra.mxu0 %v1172
      %v1201 = vpop.f32.mrf.mxu0
      %v1202 = vadd.f32 0.0, %v1201
      %v1203 = vpop.f32.mrf.mxu0
      %v1204 = vadd.f32 0.0, %v1203
      %1205 = vmatmul.bf16.gmra.mxu0 %v1175
      %v1206 = vpop.f32.mrf.mxu0
      %v1207 = vadd.f32 0.0, %v1206
      %v1208 = vpop.f32.mrf.mxu0
      %v1209 = vadd.f32 0.0, %v1208
      %1210 = vdwg.mxu0
      %v1211 = vadd.f32 %v1059, %v1187
      %v1212 = vadd.f32 %v1060, %v1189
      %v1213 = vadd.f32 %v1061, %v1192
      %v1214 = vadd.f32 %v1062, %v1194
      %v1215 = vadd.f32 %v1063, %v1197
      %v1216 = vadd.f32 %v1064, %v1199
      %v1217 = vadd.f32 %v1065, %v1202
      %v1218 = vadd.f32 %v1066, %v1204
      %v1219 = vadd.f32 %v1067, %v1207
      %v1220 = vadd.f32 %v1068, %v1209
      %v1221 = vld [vmem:[#allocation2 + $0xc] sm:$0xf]
      %v1222 = vld [vmem:[#allocation2 + $0x10] sm:$0xf]
      %v1223 = vld [vmem:[#allocation2 + $0x14] sm:$0xf]
      %v1224 = vld [vmem:[#allocation2 + $0x18] sm:$0xf]
      %v1225 = vld [vmem:[#allocation2 + $0x1c] sm:$0xf]
      %v1226 = vld [vmem:[#allocation2 + $0x20] sm:$0xf]
      %v1227 = vld [vmem:[#allocation2 + $0x24] sm:$0xf]
      %v1228 = vld [vmem:[#allocation2 + $0x28] sm:$0xf]
      %v1229 = vld [vmem:[#allocation2 + $0x2c] sm:$0xf]
      %v1230 = vld [vmem:[#allocation2 + $0x30] sm:$0xf]
      %v1231 = vld [vmem:[#allocation2 + $0x34] sm:$0x1]
      %s1232 = scalar_lea.vmem %s2, 48
      %v1233 = vld [vmem:[%s1232] sm:$0xf]
      %v1234 = vld [vmem:[%s1232 + $0x4] sm:$0xf]
      %v1246 = vunpack.c.l.b16 %v1221
      %v1247 = vunpack.c.l.b16 %v1222
      %v1248 = vunpack.c.l.b16 %v1223
      %v1249 = vunpack.c.l.b16 %v1224
      %v1250 = vunpack.c.l.b16 %v1225
      %v1251 = vunpack.c.l.b16 %v1226
      %v1252 = vunpack.c.l.b16 %v1227
      %v1253 = vunpack.c.l.b16 %v1228
      %v1254 = vunpack.c.l.b16 %v1229
      %v1255 = vunpack.c.l.b16 %v1230
      %v1256 = vunpack.c.l.b16 %v1231
      %v1257 = vpack.c.b16 %v1247, %v1246
      %v1258 = vpack.c.b16 %v1249, %v1248
      %v1259 = vpack.c.b16 %v1251, %v1250
      %v1260 = vpack.c.b16 %v1253, %v1252
      %v1261 = vpack.c.b16 %v1255, %v1254
      %v1262 = vpack.c.b16 %v1256, %v1256
      %v1264 = vshrl.u32 %v1257, 16
      %v1266 = vshll.u32 %v1257, 16
      %v1268 = vrot.slane %v1266, 1
      %v1269 = vor.u32 %v1264, %v1268
      %v1271 = vshll.u32 %v1258, 16
      %v1273 = vrot.slane %v1271, 1
      %v1274 = vsel %vm1111, %v1269, %v1273
      %v1275 = vshrl.u32 %v1258, 16
      %v1277 = vor.u32 %v1275, %v1273
      %v1279 = vshll.u32 %v1259, 16
      %v1281 = vrot.slane %v1279, 1
      %v1282 = vsel %vm1111, %v1277, %v1281
      %v1283 = vshrl.u32 %v1259, 16
      %v1285 = vor.u32 %v1283, %v1281
      %v1287 = vshll.u32 %v1260, 16
      %v1289 = vrot.slane %v1287, 1
      %v1290 = vsel %vm1111, %v1285, %v1289
      %v1291 = vshrl.u32 %v1260, 16
      %v1293 = vor.u32 %v1291, %v1289
      %v1295 = vshll.u32 %v1261, 16
      %v1297 = vrot.slane %v1295, 1
      %v1298 = vsel %vm1111, %v1293, %v1297
      %v1299 = vshrl.u32 %v1261, 16
      %v1301 = vor.u32 %v1299, %v1297
      %v1303 = vshll.u32 %v1262, 16
      %v1305 = vrot.slane %v1303, 1
      %v1306 = vsel %vm1111, %v1301, %v1305
      %v1309 = vunpack.c.l.b16 %v1233
      %v1310 = vunpack.c.l.b16 %v1234
      %v1311 = vpack.c.b16 %v1310, %v1309
      %v1314 = vsel %vm568, %v1274, 0
      %v1317 = vsel %vm568, %v1282, 0
      %v1320 = vsel %vm568, %v1290, 0
      %v1323 = vsel %vm568, %v1298, 0
      %v1326 = vsel %vm568, %v1306, 0
      %1328 = vmatpush.bf16.msra.mxu0 0
      %1329 = vmatpush.bf16.msra.mxu0 0
      %1330 = vmatpush.bf16.msra.mxu0 0
      %1331 = vmatpush.bf16.msra.mxu0 0
      %1332 = vmatpush.bf16.msra.mxu0 0
      %1333 = vmatpush.bf16.msra.mxu0 0
      %1334 = vmatpush.bf16.msra.mxu0 0
      %1335 = vmatpush.bf16.msra.mxu0 %v1311
      %1336 = vmatmul.bf16.gmra.mxu0 %v1314
      %v1337 = vpop.f32.mrf.mxu0
      %v1338 = vadd.f32 0.0, %v1337
      %v1339 = vpop.f32.mrf.mxu0
      %v1340 = vadd.f32 0.0, %v1339
      %1341 = vmatmul.bf16.gmra.mxu0 %v1317
      %v1342 = vpop.f32.mrf.mxu0
      %v1343 = vadd.f32 0.0, %v1342
      %v1344 = vpop.f32.mrf.mxu0
      %v1345 = vadd.f32 0.0, %v1344
      %1346 = vmatmul.bf16.gmra.mxu0 %v1320
      %v1347 = vpop.f32.mrf.mxu0
      %v1348 = vadd.f32 0.0, %v1347
      %v1349 = vpop.f32.mrf.mxu0
      %v1350 = vadd.f32 0.0, %v1349
      %1351 = vmatmul.bf16.gmra.mxu0 %v1323
      %v1352 = vpop.f32.mrf.mxu0
      %v1353 = vadd.f32 0.0, %v1352
      %v1354 = vpop.f32.mrf.mxu0
      %v1355 = vadd.f32 0.0, %v1354
      %1356 = vmatmul.bf16.gmra.mxu0 %v1326
      %v1357 = vpop.f32.mrf.mxu0
      %v1358 = vadd.f32 0.0, %v1357
      %v1359 = vpop.f32.mrf.mxu0
      %v1360 = vadd.f32 0.0, %v1359
      %1361 = vdwg.mxu0
      %v1362 = vadd.f32 %v1211, %v1338
      %v1363 = vadd.f32 %v1212, %v1340
      %v1364 = vadd.f32 %v1213, %v1343
      %v1365 = vadd.f32 %v1214, %v1345
      %v1366 = vadd.f32 %v1215, %v1348
      %v1367 = vadd.f32 %v1216, %v1350
      %v1368 = vadd.f32 %v1217, %v1353
      %v1369 = vadd.f32 %v1218, %v1355
      %v1370 = vadd.f32 %v1219, %v1358
      %v1371 = vadd.f32 %v1220, %v1360
      %v1372 = vld [vmem:[#allocation2 + $0xc] sm:$0xe]
      %s1373 = scalar_lea.vmem %s2, 56
      %v1374 = vld [vmem:[%s1373] sm:$0xf]
      %v1375 = vld [vmem:[%s1373 + $0x4] sm:$0xf]
      %v1377 = vunpack.c.l.b16 %v1372
      %v1378 = vpack.c.b16 %v1247, %v1377
      %vm1379 = vcmask 1046528
      %v1380 = vrot.slane %v1378, 1
      %v1381 = vrot.slane %v1258, 1
      %v1382 = vsel %vm1379, %v1380, %v1381
      %v1383 = vrot.slane %v1259, 1
      %v1384 = vsel %vm1379, %v1381, %v1383
      %v1385 = vrot.slane %v1260, 1
      %v1386 = vsel %vm1379, %v1383, %v1385
      %v1387 = vrot.slane %v1261, 1
      %v1388 = vsel %vm1379, %v1385, %v1387
      %v1389 = vrot.slane %v1262, 1
      %v1390 = vsel %vm1379, %v1387, %v1389
      %v1393 = vunpack.c.l.b16 %v1374
      %v1394 = vunpack.c.l.b16 %v1375
      %v1395 = vpack.c.b16 %v1394, %v1393
      %v1398 = vsel %vm568, %v1382, 0
      %v1401 = vsel %vm568, %v1384, 0
      %v1404 = vsel %vm568, %v1386, 0
      %v1407 = vsel %vm568, %v1388, 0
      %v1410 = vsel %vm568, %v1390, 0
      %1412 = vmatpush.bf16.msra.mxu0 0
      %1413 = vmatpush.bf16.msra.mxu0 0
      %1414 = vmatpush.bf16.msra.mxu0 0
      %1415 = vmatpush.bf16.msra.mxu0 0
      %1416 = vmatpush.bf16.msra.mxu0 0
      %1417 = vmatpush.bf16.msra.mxu0 0
      %1418 = vmatpush.bf16.msra.mxu0 0
      %1419 = vmatpush.bf16.msra.mxu0 %v1395
      %1420 = vmatmul.bf16.gmra.mxu0 %v1398
      %v1421 = vpop.f32.mrf.mxu0
      %v1422 = vadd.f32 0.0, %v1421
      %v1423 = vpop.f32.mrf.mxu0
      %v1424 = vadd.f32 0.0, %v1423
      %1425 = vmatmul.bf16.gmra.mxu0 %v1401
      %v1426 = vpop.f32.mrf.mxu0
      %v1427 = vadd.f32 0.0, %v1426
      %v1428 = vpop.f32.mrf.mxu0
      %v1429 = vadd.f32 0.0, %v1428
      %1430 = vmatmul.bf16.gmra.mxu0 %v1404
      %v1431 = vpop.f32.mrf.mxu0
      %v1432 = vadd.f32 0.0, %v1431
      %v1433 = vpop.f32.mrf.mxu0
      %v1434 = vadd.f32 0.0, %v1433
      %1435 = vmatmul.bf16.gmra.mxu0 %v1407
      %v1436 = vpop.f32.mrf.mxu0
      %v1437 = vadd.f32 0.0, %v1436
      %v1438 = vpop.f32.mrf.mxu0
      %v1439 = vadd.f32 0.0, %v1438
      %1440 = vmatmul.bf16.gmra.mxu0 %v1410
      %v1441 = vpop.f32.mrf.mxu0
      %v1442 = vadd.f32 0.0, %v1441
      %v1443 = vpop.f32.mrf.mxu0
      %v1444 = vadd.f32 0.0, %v1443
      %1445 = vdwg.mxu0
      %v1446 = vadd.f32 %v1362, %v1422
      %v1447 = vadd.f32 %v1363, %v1424
      %v1448 = vadd.f32 %v1364, %v1427
      %v1449 = vadd.f32 %v1365, %v1429
      %v1450 = vadd.f32 %v1366, %v1432
      %v1451 = vadd.f32 %v1367, %v1434
      %v1452 = vadd.f32 %v1368, %v1437
      %v1453 = vadd.f32 %v1369, %v1439
      %v1454 = vadd.f32 %v1370, %v1442
      %v1455 = vadd.f32 %v1371, %v1444
      %v1456 = vld [vmem:[#allocation2 + $0x34] sm:$0x3]
      %s1457 = scalar_lea.vmem %s2, 64
      %v1458 = vld [vmem:[%s1457] sm:$0xf]
      %v1459 = vld [vmem:[%s1457 + $0x4] sm:$0xf]
      %v1461 = vunpack.c.l.b16 %v1456
      %v1462 = vpack.c.b16 %v1461, %v1461
      %vm1463 = vsmask.f32 6400
      %v1465 = vshrl.u32 %v1378, 16
      %v1467 = vrot.slane %v1465, 1
      %v1468 = vshll.u32 %v1378, 16
      %v1470 = vrot.slane %v1468, 2
      %v1471 = vor.u32 %v1467, %v1470
      %v1472 = vrot.slane %v1275, 1
      %v1473 = vrot.slane %v1271, 2
      %v1474 = vor.u32 %v1472, %v1473
      %v1475 = vsel %vm1463, %v1471, %v1474
      %v1476 = vrot.slane %v1283, 1
      %v1477 = vrot.slane %v1279, 2
      %v1478 = vor.u32 %v1476, %v1477
      %v1479 = vsel %vm1463, %v1474, %v1478
      %v1480 = vrot.slane %v1291, 1
      %v1481 = vrot.slane %v1287, 2
      %v1482 = vor.u32 %v1480, %v1481
      %v1483 = vsel %vm1463, %v1478, %v1482
      %v1484 = vrot.slane %v1299, 1
      %v1485 = vrot.slane %v1295, 2
      %v1486 = vor.u32 %v1484, %v1485
      %v1487 = vsel %vm1463, %v1482, %v1486
      %v1489 = vshrl.u32 %v1462, 16
      %v1491 = vrot.slane %v1489, 1
      %v1492 = vshll.u32 %v1462, 16
      %v1494 = vrot.slane %v1492, 2
      %v1495 = vor.u32 %v1491, %v1494
      %v1496 = vsel %vm1463, %v1486, %v1495
      %v1499 = vunpack.c.l.b16 %v1458
      %v1500 = vunpack.c.l.b16 %v1459
      %v1501 = vpack.c.b16 %v1500, %v1499
      %v1504 = vsel %vm568, %v1475, 0
      %v1507 = vsel %vm568, %v1479, 0
      %v1510 = vsel %vm568, %v1483, 0
      %v1513 = vsel %vm568, %v1487, 0
      %v1516 = vsel %vm568, %v1496, 0
      %1518 = vmatpush.bf16.msra.mxu0 0
      %1519 = vmatpush.bf16.msra.mxu0 0
      %1520 = vmatpush.bf16.msra.mxu0 0
      %1521 = vmatpush.bf16.msra.mxu0 0
      %1522 = vmatpush.bf16.msra.mxu0 0
      %1523 = vmatpush.bf16.msra.mxu0 0
      %1524 = vmatpush.bf16.msra.mxu0 0
      %1525 = vmatpush.bf16.msra.mxu0 %v1501
      %1526 = vmatmul.bf16.gmra.mxu0 %v1504
      %v1527 = vpop.f32.mrf.mxu0
      %v1528 = vadd.f32 0.0, %v1527
      %v1529 = vpop.f32.mrf.mxu0
      %v1530 = vadd.f32 0.0, %v1529
      %1531 = vmatmul.bf16.gmra.mxu0 %v1507
      %v1532 = vpop.f32.mrf.mxu0
      %v1533 = vadd.f32 0.0, %v1532
      %v1534 = vpop.f32.mrf.mxu0
      %v1535 = vadd.f32 0.0, %v1534
      %1536 = vmatmul.bf16.gmra.mxu0 %v1510
      %v1537 = vpop.f32.mrf.mxu0
      %v1538 = vadd.f32 0.0, %v1537
      %v1539 = vpop.f32.mrf.mxu0
      %v1540 = vadd.f32 0.0, %v1539
      %1541 = vmatmul.bf16.gmra.mxu0 %v1513
      %v1542 = vpop.f32.mrf.mxu0
      %v1543 = vadd.f32 0.0, %v1542
      %v1544 = vpop.f32.mrf.mxu0
      %v1545 = vadd.f32 0.0, %v1544
      %1546 = vmatmul.bf16.gmra.mxu0 %v1516
      %v1547 = vpop.f32.mrf.mxu0
      %v1548 = vadd.f32 0.0, %v1547
      %v1549 = vpop.f32.mrf.mxu0
      %v1550 = vadd.f32 0.0, %v1549
      %1551 = vdwg.mxu0
      %v1552 = vadd.f32 %v1446, %v1528
      %v1553 = vadd.f32 %v1447, %v1530
      %v1554 = vadd.f32 %v1448, %v1533
      %v1555 = vadd.f32 %v1449, %v1535
      %v1556 = vadd.f32 %v1450, %v1538
      %v1557 = vadd.f32 %v1451, %v1540
      %v1558 = vadd.f32 %v1452, %v1543
      %v1559 = vadd.f32 %v1453, %v1545
      %v1560 = vadd.f32 %v1454, %v1548
      %v1561 = vadd.f32 %v1455, %v1550
      %v1562 = vld [vmem:[%s3] sm:$0x1]
      %v1564 = vperm.slane %v1562, 0
      %v1566 = vadd.f32 %v1552, %v1564
      %v1567 = vadd.f32 %v1553, %v1564
      %v1568 = vadd.f32 %v1554, %v1564
      %v1569 = vadd.f32 %v1555, %v1564
      %v1570 = vadd.f32 %v1556, %v1564
      %v1571 = vadd.f32 %v1557, %v1564
      %v1572 = vadd.f32 %v1558, %v1564
      %v1573 = vadd.f32 %v1559, %v1564
      %v1574 = vadd.f32 %v1560, %v1564
      %v1575 = vadd.f32 %v1561, %v1564
      %v1576 = vpack.c.bf16 %v1566, %v1566
      %v1577 = vpack.c.bf16 %v1567, %v1567
      %v1578 = vpack.c.bf16 %v1568, %v1568
      %v1579 = vpack.c.bf16 %v1569, %v1569
      %v1580 = vpack.c.bf16 %v1570, %v1570
      %v1581 = vpack.c.bf16 %v1571, %v1571
      %v1582 = vpack.c.bf16 %v1572, %v1572
      %v1583 = vpack.c.bf16 %v1573, %v1573
      %v1584 = vpack.c.bf16 %v1574, %v1574
      %v1585 = vpack.c.bf16 %v1575, %v1575
      %1586 = vst.msk [vmem:[%s289] sm:$0xf] %vm470, %v1576
      %1587 = vst.msk [vmem:[%s289 + $0x4] sm:$0xf] %vm470, %v1577
      %1588 = vst.msk [vmem:[%s289 + $0x8] sm:$0xf] %vm470, %v1578
      %1589 = vst.msk [vmem:[%s289 + $0xc] sm:$0xf] %vm470, %v1579
      %1590 = vst.msk [vmem:[%s289 + $0x10] sm:$0xf] %vm470, %v1580
      %1591 = vst.msk [vmem:[%s289 + $0x14] sm:$0xf] %vm470, %v1581
      %1592 = vst.msk [vmem:[%s289 + $0x18] sm:$0xf] %vm470, %v1582
      %1593 = vst.msk [vmem:[%s289 + $0x1c] sm:$0xf] %vm470, %v1583
      %1594 = vst.msk [vmem:[%s289 + $0x20] sm:$0xf] %vm470, %v1584
      %1595 = vst.msk [vmem:[%s289 + $0x24] sm:$0xf] %vm470, %v1585
      %v1596 = vld [vmem:[%s4] sm:$0xff]
      %v1597 = vld [vmem:[%s4 + $0x8] sm:$0xff]
      %v1598 = vld [vmem:[%s4 + $0x10] sm:$0xff]
      %v1599 = vld [vmem:[%s4 + $0x18] sm:$0xff]
      %v1600 = vld [vmem:[%s4 + $0x20] sm:$0xff]
      %v1601 = vld [vmem:[%s4 + $0x28] sm:$0xff]
      %v1602 = vld [vmem:[%s4 + $0x30] sm:$0xff]
      %v1603 = vld [vmem:[%s4 + $0x38] sm:$0xff]
      %v1604 = vld [vmem:[%s4 + $0x40] sm:$0xff]
      %v1605 = vld [vmem:[%s4 + $0x48] sm:$0xff]
      %1607 = vset.pattern.permute.xlu0 0
      %1608 = vperm.xlu0 %1607, %v1596
      %v1609 = vpop.permute.xlu0 %1608
      %1612 = vset.pattern.permute.xlu0 0
      %1613 = vperm.xlu0 %1612, %v1597
      %v1614 = vpop.permute.xlu0 %1613
      %1617 = vset.pattern.permute.xlu0 0
      %1618 = vperm.xlu0 %1617, %v1598
      %v1619 = vpop.permute.xlu0 %1618
      %1622 = vset.pattern.permute.xlu0 0
      %1623 = vperm.xlu0 %1622, %v1599
      %v1624 = vpop.permute.xlu0 %1623
      %1627 = vset.pattern.permute.xlu0 0
      %1628 = vperm.xlu0 %1627, %v1600
      %v1629 = vpop.permute.xlu0 %1628
      %1632 = vset.pattern.permute.xlu0 0
      %1633 = vperm.xlu0 %1632, %v1601
      %v1634 = vpop.permute.xlu0 %1633
      %1637 = vset.pattern.permute.xlu0 0
      %1638 = vperm.xlu0 %1637, %v1602
      %v1639 = vpop.permute.xlu0 %1638
      %1642 = vset.pattern.permute.xlu0 0
      %1643 = vperm.xlu0 %1642, %v1603
      %v1644 = vpop.permute.xlu0 %1643
      %1647 = vset.pattern.permute.xlu0 0
      %1648 = vperm.xlu0 %1647, %v1604
      %v1649 = vpop.permute.xlu0 %1648
      %1652 = vset.pattern.permute.xlu0 0
      %1653 = vperm.xlu0 %1652, %v1605
      %v1654 = vpop.permute.xlu0 %1653
      %v1656 = vmul.f32 %v1566, %v1609
      %v1657 = vmul.f32 %v1567, %v1614
      %v1658 = vmul.f32 %v1568, %v1619
      %v1659 = vmul.f32 %v1569, %v1624
      %v1660 = vmul.f32 %v1570, %v1629
      %v1661 = vmul.f32 %v1571, %v1634
      %v1662 = vmul.f32 %v1572, %v1639
      %v1663 = vmul.f32 %v1573, %v1644
      %v1664 = vmul.f32 %v1574, %v1649
      %v1665 = vmul.f32 %v1575, %v1654
      %v1666 = vsel %vm568, %v1656, 0.0
      %v1667 = vsel %vm568, %v1657, 0.0
      %v1668 = vadd.f32 %v1666, %v1667
      %v1669 = vsel %vm568, %v1658, 0.0
      %v1670 = vadd.f32 %v1668, %v1669
      %v1671 = vsel %vm568, %v1659, 0.0
      %v1672 = vadd.f32 %v1670, %v1671
      %v1673 = vsel %vm568, %v1660, 0.0
      %v1674 = vadd.f32 %v1672, %v1673
      %v1675 = vsel %vm568, %v1661, 0.0
      %v1676 = vadd.f32 %v1674, %v1675
      %v1677 = vsel %vm568, %v1662, 0.0
      %v1678 = vadd.f32 %v1676, %v1677
      %v1679 = vsel %vm568, %v1663, 0.0
      %v1680 = vadd.f32 %v1678, %v1679
      %v1681 = vsel %vm568, %v1664, 0.0
      %v1682 = vadd.f32 %v1680, %v1681
      %v1683 = vsel %vm568, %v1665, 0.0
      %v1684 = vadd.f32 %v1682, %v1683
      %v1685 = vrot.slane %v1684, 4
      %v1686 = vadd.f32 %v1684, %v1685
      %v1687 = vrot.slane %v1686, 2
      %v1688 = vadd.f32 %v1686, %v1687
      %v1689 = vrot.slane %v1688, 1
      %v1690 = vadd.f32 %v1688, %v1689
      %vm1691 = vcmask 122880
      %1692 = vst.msk [vmem:[%s292] sm:$0x1] %vm1691, %v1690
      %v1693 = vmul.f32 %v1656, %v1566
      %v1694 = vmul.f32 %v1657, %v1567
      %v1695 = vmul.f32 %v1658, %v1568
      %v1696 = vmul.f32 %v1659, %v1569
      %v1697 = vmul.f32 %v1660, %v1570
      %v1698 = vmul.f32 %v1661, %v1571
      %v1699 = vmul.f32 %v1662, %v1572
      %v1700 = vmul.f32 %v1663, %v1573
      %v1701 = vmul.f32 %v1664, %v1574
      %v1702 = vmul.f32 %v1665, %v1575
      %v1703 = vsel %vm568, %v1693, 0.0
      %v1704 = vsel %vm568, %v1694, 0.0
      %v1705 = vadd.f32 %v1703, %v1704
      %v1706 = vsel %vm568, %v1695, 0.0
      %v1707 = vadd.f32 %v1705, %v1706
      %v1708 = vsel %vm568, %v1696, 0.0
      %v1709 = vadd.f32 %v1707, %v1708
      %v1710 = vsel %vm568, %v1697, 0.0
      %v1711 = vadd.f32 %v1709, %v1710
      %v1712 = vsel %vm568, %v1698, 0.0
      %v1713 = vadd.f32 %v1711, %v1712
      %v1714 = vsel %vm568, %v1699, 0.0
      %v1715 = vadd.f32 %v1713, %v1714
      %v1716 = vsel %vm568, %v1700, 0.0
      %v1717 = vadd.f32 %v1715, %v1716
      %v1718 = vsel %vm568, %v1701, 0.0
      %v1719 = vadd.f32 %v1717, %v1718
      %v1720 = vsel %vm568, %v1702, 0.0
      %v1721 = vadd.f32 %v1719, %v1720
      %v1722 = vrot.slane %v1721, 4
      %v1723 = vadd.f32 %v1721, %v1722
      %v1724 = vrot.slane %v1723, 2
      %v1725 = vadd.f32 %v1723, %v1724
      %v1726 = vrot.slane %v1725, 1
      %v1727 = vadd.f32 %v1725, %v1726
      %1728 = vst.msk [vmem:[%s295] sm:$0x1] %vm1691, %v1727
      %p1729 = scmp.lt.s32.totalorder %s19, 1
      %s1730 = scalar_select %p1729, %s19, 1
      %s1731 = smul.addr %s1730, 10
      %s1732 = smul.addr %s1731, 4
      %s1733 = scalar_lea.vmem %s5, %s1732
      %p1734 = scmp.lt.s32.totalorder %s19, 1
      %s1735 = scalar_select %p1734, %s19, 1
      %s1736 = scalar_lea.vmem %s6, %s1735
      %p1737 = scmp.lt.s32.totalorder %s19, 1
      %s1738 = scalar_select %p1737, %s19, 1
      %s1739 = scalar_lea.vmem %s7, %s1738
      // Predicated region
      $region41: #{resconv_basic_forward.5} parent=39 // pred_check
        %p1740 = pneg %p147
      $region42: #{resconv_basic_forward.5} parent=39 // pred_check_branch
        %1742 = sbr.rel (%p1740) target = $region44
      $region43: #{resconv_basic_forward.5} parent=39 // pred_region
        _
      $region44: #{resconv_basic_forward.5} parent=39 // pred_fallthru
        _
      // Predicated region
      $region45: #{resconv_basic_forward.5} parent=39 // pred_check
        %p1743 = pneg %p173
      $region46: #{resconv_basic_forward.5} parent=39 // pred_check_branch
        %1745 = sbr.rel (%p1743) target = $region48
      $region47: #{resconv_basic_forward.5} parent=39 // pred_region
        _
      $region48: #{resconv_basic_forward.5} parent=39 // pred_fallthru
        _
      // Predicated region
      $region49: #{resconv_basic_forward.5} parent=39 // pred_check
        %p1746 = pneg %p199
      $region50: #{resconv_basic_forward.5} parent=39 // pred_check_branch
        %1748 = sbr.rel (%p1746) target = $region52
      $region51: #{resconv_basic_forward.5} parent=39 // pred_region
        _
      $region52: #{resconv_basic_forward.5} parent=39 // pred_fallthru
        _
    $region40: #{resconv_basic_forward.5} parent=5 // pred_fallthru
      _
    %p1749 = scmp.le.s32.totalorder 2, %s14
    // Predicated region
    $region53: #{resconv_basic_forward.5} parent=5 // pred_check
      %p1750 = pneg %p1749
    $region54: #{resconv_basic_forward.5} parent=5 // pred_check_branch
      %1752 = sbr.rel (%p1750) target = $region56
    $region55: #{resconv_basic_forward.5} parent=5 // pred_region
      %s1753 = ssub.s32 %s14, 2
      // Predicated region
      $region57: #{resconv_basic_forward.5} parent=55 // pred_check
        %p1754 = pneg %p153
      $region58: #{resconv_basic_forward.5} parent=55 // pred_check_branch
        %1756 = sbr.rel (%p1754) target = $region60
      $region59: #{resconv_basic_forward.5} parent=55 // pred_region
        %p1757 = scmp.lt.s32.totalorder %s20, 1
        %s1758 = scalar_select %p1757, %s20, 1
        %s1759 = smul.addr %s1758, 10
        %s1760 = smul.addr %s1759, 4
        %s1761 = scalar_lea.vmem %s5, %s1760
      $region60: #{resconv_basic_forward.5} parent=55 // pred_fallthru
        _
      // Predicated region
      $region61: #{resconv_basic_forward.5} parent=55 // pred_check
        %p1762 = pneg %p179
      $region62: #{resconv_basic_forward.5} parent=55 // pred_check_branch
        %1764 = sbr.rel (%p1762) target = $region64
      $region63: #{resconv_basic_forward.5} parent=55 // pred_region
        %p1765 = scmp.lt.s32.totalorder %s20, 1
        %s1766 = scalar_select %p1765, %s20, 1
        %s1767 = scalar_lea.vmem %s6, %s1766
      $region64: #{resconv_basic_forward.5} parent=55 // pred_fallthru
        _
      // Predicated region
      $region65: #{resconv_basic_forward.5} parent=55 // pred_check
        %p1768 = pneg %p205
      $region66: #{resconv_basic_forward.5} parent=55 // pred_check_branch
        %1770 = sbr.rel (%p1768) target = $region68
      $region67: #{resconv_basic_forward.5} parent=55 // pred_region
        %p1771 = scmp.lt.s32.totalorder %s20, 1
        %s1772 = scalar_select %p1771, %s20, 1
        %s1773 = scalar_lea.vmem %s7, %s1772
      $region68: #{resconv_basic_forward.5} parent=55 // pred_fallthru
        _
    $region56: #{resconv_basic_forward.5} parent=5 // pred_fallthru
      _
  $region6: #{resconv_basic_forward.5} parent=0 // loop_footer
    %s18 = sadd.s32 1, %s14
  $region7: #{resconv_basic_forward.5} parent=0 // loop_footer_branch
    %13 = sbr.rel target = $region3
  $region8: #{resconv_basic_forward.5} parent=0 // loop_exit
    _

// kernel: resconv_basic_forward.4
$region0: #{resconv_basic_forward.4}
  #allocation0 [shape = 'u32[]', space=smem, size = 0x4, offset = 0x4, fixed_abs, tag = 'smem constant byte address 0x4 - core index']
  #allocation1 [shape = 'u32[72,128]{1,0:T(1,128)}', space=vmem, size = 0x9000, scoped, tag = 'internal scratch']
  %s0 = inlined_call_operand.vmem [shape: bf16[2,4,110,16], index: 0, kind: input, shape index: {}]
  %s1 = inlined_call_operand.vmem [shape: bf16[9,16,16], index: 1, kind: input, shape index: {}]
  %s2 = inlined_call_operand.vmem [shape: f32[1,16], index: 2, kind: input, shape index: {}]
  %s3 = inlined_call_operand.vmem [shape: f32[80,1], index: 3, kind: input, shape index: {}]
  %s4 = inlined_call_operand.vmem [shape: bf16[2,80,16], index: 4, kind: output, shape index: {0}]
  %s5 = inlined_call_operand.vmem [shape: f32[2,1,16], index: 5, kind: output, shape index: {1}]
  %s6 = inlined_call_operand.vmem [shape: f32[2,1,16], index: 6, kind: output, shape index: {2}]
  %7 = xla_tuple %s4, %s5, %s6
  %s8 = sld [smem:[#allocation0]]
  $region65: #{resconv_basic_forward.4} parent=0
    _
  %s10 = ssub.s32 1, %s8
  %s11 = scalar_select 0, %s10, %s8
  loop: start=0, step=1, limit=4
  $region2: #{resconv_basic_forward.4} parent=0 // loop_pre_header
    _
  $region3: #{resconv_basic_forward.4} parent=0 // loop_header
    %s13 = sphi 0, %s17
    %p14 = scmp.ge.s32.totalorder %s13, 4
    %s23 = sphi 0, %s25
    %s26 = sphi 0, %s23
    %s27 = sphi 0, %s26
    %s43 = sphi 0, %s27
    %s47 = sphi 0, %s47
    %s49 = sphi 0, %s47
    %s50 = sphi 0, %s49
    %s64 = sphi 0, %s50
    %s68 = sphi 0, %s68
    %s70 = sphi 0, %s68
    %s71 = sphi 0, %s70
    %s85 = sphi 0, %s71
    %s89 = sphi 0, %s89
    %s91 = sphi 0, %s89
    %s92 = sphi 0, %s91
    %s106 = sphi 0, %s92
    %s112 = sphi 0, %s114
    %s115 = sphi 0, %s112
    %s116 = sphi 0, %s115
    %s132 = sphi 0, %s116
    %s138 = sphi 0, %s140
    %s141 = sphi 0, %s138
    %s142 = sphi 0, %s141
    %s158 = sphi 0, %s142
    %s164 = sphi 0, %s166
    %s167 = sphi 0, %s164
    %s168 = sphi 0, %s167
    %s184 = sphi 0, %s168
  $region4: #{resconv_basic_forward.4} parent=0 // loop_header_branch
    %16 = sbr.rel (%p14) target = $region8
  $region5: #{resconv_basic_forward.4} parent=0 // loop_body
    %s18 = ssub.s32 %s13, 1
    %s19 = ssub.s32 %s13, 2
    %s20 = sadd.s32 %s13, 1
    %s21 = ssub.s32 %s13, %s20
    %p22 = scmp.eq.s32.totalorder %s21, 0
    %s24 = sadd.s32 %s23, 1
    %s25 = scalar_select %p22, %s23, %s24
    %p28 = pneg %p22
    %p29 = scmp.eq.s32.totalorder %s13, 1
    %p30 = por %p28, %p29
    %p31 = scmp.ne.s32.totalorder %s23, %s26
    %p32 = scmp.eq.s32.totalorder %s13, 0
    %p33 = por %p31, %p32
    %p34 = scmp.ne.s32.totalorder %s23, %s26
    %p35 = scmp.eq.s32.totalorder %s18, 1
    %p36 = por %p34, %p35
    %p37 = scmp.ne.s32.totalorder %s26, %s27
    %p38 = scmp.eq.s32.totalorder %s18, 0
    %p39 = por %p37, %p38
    %p40 = scmp.ne.s32.totalorder %s26, %s27
    %p41 = scmp.eq.s32.totalorder %s19, 1
    %p42 = por %p40, %p41
    %p44 = scmp.ne.s32.totalorder %s27, %s43
    %p45 = scmp.eq.s32.totalorder %s19, 0
    %p46 = por %p44, %p45
    %s48 = sadd.s32 %s47, 1
    %p51 = scmp.eq.s32.totalorder %s13, 1
    %p52 = scmp.ne.s32.totalorder %s47, %s49
    %p53 = scmp.eq.s32.totalorder %s13, 0
    %p54 = por %p52, %p53
    %p55 = scmp.ne.s32.totalorder %s47, %s49
    %p56 = scmp.eq.s32.totalorder %s18, 1
    %p57 = por %p55, %p56
    %p58 = scmp.ne.s32.totalorder %s49, %s50
    %p59 = scmp.eq.s32.totalorder %s18, 0
    %p60 = por %p58, %p59
    %p61 = scmp.ne.s32.totalorder %s49, %s50
    %p62 = scmp.eq.s32.totalorder %s19, 1
    %p63 = por %p61, %p62
    %p65 = scmp.ne.s32.totalorder %s50, %s64
    %p66 = scmp.eq.s32.totalorder %s19, 0
    %p67 = por %p65, %p66
    %s69 = sadd.s32 %s68, 1
    %p72 = scmp.eq.s32.totalorder %s13, 1
    %p73 = scmp.ne.s32.totalorder %s68, %s70
    %p74 = scmp.eq.s32.totalorder %s13, 0
    %p75 = por %p73, %p74
    %p76 = scmp.ne.s32.totalorder %s68, %s70
    %p77 = scmp.eq.s32.totalorder %s18, 1
    %p78 = por %p76, %p77
    %p79 = scmp.ne.s32.totalorder %s70, %s71
    %p80 = scmp.eq.s32.totalorder %s18, 0
    %p81 = por %p79, %p80
    %p82 = scmp.ne.s32.totalorder %s70, %s71
    %p83 = scmp.eq.s32.totalorder %s19, 1
    %p84 = por %p82, %p83
    %p86 = scmp.ne.s32.totalorder %s71, %s85
    %p87 = scmp.eq.s32.totalorder %s19, 0
    %p88 = por %p86, %p87
    %s90 = sadd.s32 %s89, 1
    %p93 = scmp.eq.s32.totalorder %s13, 1
    %p94 = scmp.ne.s32.totalorder %s89, %s91
    %p95 = scmp.eq.s32.totalorder %s13, 0
    %p96 = por %p94, %p95
    %p97 = scmp.ne.s32.totalorder %s89, %s91
    %p98 = scmp.eq.s32.totalorder %s18, 1
    %p99 = por %p97, %p98
    %p100 = scmp.ne.s32.totalorder %s91, %s92
    %p101 = scmp.eq.s32.totalorder %s18, 0
    %p102 = por %p100, %p101
    %p103 = scmp.ne.s32.totalorder %s91, %s92
    %p104 = scmp.eq.s32.totalorder %s19, 1
    %p105 = por %p103, %p104
    %p107 = scmp.ne.s32.totalorder %s92, %s106
    %p108 = scmp.eq.s32.totalorder %s19, 0
    %p109 = por %p107, %p108
    %s110 = ssub.s32 %s13, %s20
    %p111 = scmp.eq.s32.totalorder %s110, 0
    %s113 = sadd.s32 %s112, 1
    %s114 = scalar_select %p111, %s112, %s113
    %p117 = pneg %p111
    %p118 = scmp.eq.s32.totalorder %s13, 1
    %p119 = por %p117, %p118
    %p120 = scmp.ne.s32.totalorder %s112, %s115
    %p121 = scmp.eq.s32.totalorder %s13, 0
    %p122 = por %p120, %p121
    %p123 = scmp.ne.s32.totalorder %s112, %s115
    %p124 = scmp.eq.s32.totalorder %s18, 1
    %p125 = por %p123, %p124
    %p126 = scmp.ne.s32.totalorder %s115, %s116
    %p127 = scmp.eq.s32.totalorder %s18, 0
    %p128 = por %p126, %p127
    %p129 = scmp.ne.s32.totalorder %s115, %s116
    %p130 = scmp.eq.s32.totalorder %s19, 1
    %p131 = por %p129, %p130
    %p133 = scmp.ne.s32.totalorder %s116, %s132
    %p134 = scmp.eq.s32.totalorder %s19, 0
    %p135 = por %p133, %p134
    %s136 = ssub.s32 %s13, %s20
    %p137 = scmp.eq.s32.totalorder %s136, 0
    %s139 = sadd.s32 %s138, 1
    %s140 = scalar_select %p137, %s138, %s139
    %p143 = pneg %p137
    %p144 = scmp.eq.s32.totalorder %s13, 1
    %p145 = por %p143, %p144
    %p146 = scmp.ne.s32.totalorder %s138, %s141
    %p147 = scmp.eq.s32.totalorder %s13, 0
    %p148 = por %p146, %p147
    %p149 = scmp.ne.s32.totalorder %s138, %s141
    %p150 = scmp.eq.s32.totalorder %s18, 1
    %p151 = por %p149, %p150
    %p152 = scmp.ne.s32.totalorder %s141, %s142
    %p153 = scmp.eq.s32.totalorder %s18, 0
    %p154 = por %p152, %p153
    %p155 = scmp.ne.s32.totalorder %s141, %s142
    %p156 = scmp.eq.s32.totalorder %s19, 1
    %p157 = por %p155, %p156
    %p159 = scmp.ne.s32.totalorder %s142, %s158
    %p160 = scmp.eq.s32.totalorder %s19, 0
    %p161 = por %p159, %p160
    %s162 = ssub.s32 %s13, %s20
    %p163 = scmp.eq.s32.totalorder %s162, 0
    %s165 = sadd.s32 %s164, 1
    %s166 = scalar_select %p163, %s164, %s165
    %p169 = pneg %p163
    %p170 = scmp.eq.s32.totalorder %s13, 1
    %p171 = por %p169, %p170
    %p172 = scmp.ne.s32.totalorder %s164, %s167
    %p173 = scmp.eq.s32.totalorder %s13, 0
    %p174 = por %p172, %p173
    %p175 = scmp.ne.s32.totalorder %s164, %s167
    %p176 = scmp.eq.s32.totalorder %s18, 1
    %p177 = por %p175, %p176
    %p178 = scmp.ne.s32.totalorder %s167, %s168
    %p179 = scmp.eq.s32.totalorder %s18, 0
    %p180 = por %p178, %p179
    %p181 = scmp.ne.s32.totalorder %s167, %s168
    %p182 = scmp.eq.s32.totalorder %s19, 1
    %p183 = por %p181, %p182
    %p185 = scmp.ne.s32.totalorder %s168, %s184
    %p186 = scmp.eq.s32.totalorder %s19, 0
    %p187 = por %p185, %p186
    %p188 = scmp.le.s32.totalorder 1, %s13
    %p189 = scmp.lt.s32.totalorder %s13, 3
    %p190 = pnand %p188, %p189
    %p191 = pneg %p190
    // Predicated region
    $region9: #{resconv_basic_forward.4} parent=5 // pred_check
      _
    $region10: #{resconv_basic_forward.4} parent=5 // pred_check_branch
      %193 = sbr.rel (%p190) target = $region12
    $region11: #{resconv_basic_forward.4} parent=5 // pred_region
      %s194 = ssub.s32 %s13, 1
      // Predicated region
      $region13: #{resconv_basic_forward.4} parent=11 // pred_check
        %p195 = pneg %p60
      $region14: #{resconv_basic_forward.4} parent=11 // pred_check_branch
        %197 = sbr.rel (%p195) target = $region16
      $region15: #{resconv_basic_forward.4} parent=11 // pred_region
        _
      $region16: #{resconv_basic_forward.4} parent=11 // pred_fallthru
        _
      // Predicated region
      $region17: #{resconv_basic_forward.4} parent=11 // pred_check
        %p198 = pneg %p81
      $region18: #{resconv_basic_forward.4} parent=11 // pred_check_branch
        %200 = sbr.rel (%p198) target = $region20
      $region19: #{resconv_basic_forward.4} parent=11 // pred_region
        _
      $region20: #{resconv_basic_forward.4} parent=11 // pred_fallthru
        _
      // Predicated region
      $region21: #{resconv_basic_forward.4} parent=11 // pred_check
        %p201 = pneg %p102
      $region22: #{resconv_basic_forward.4} parent=11 // pred_check_branch
        %203 = sbr.rel (%p201) target = $region24
      $region23: #{resconv_basic_forward.4} parent=11 // pred_region
        _
      $region24: #{resconv_basic_forward.4} parent=11 // pred_fallthru
        _
    $region12: #{resconv_basic_forward.4} parent=5 // pred_fallthru
      _
    %p204 = scmp.lt.s32.totalorder %s13, 2
    // Predicated region
    $region25: #{resconv_basic_forward.4} parent=5 // pred_check
      %p205 = pneg %p204
    $region26: #{resconv_basic_forward.4} parent=5 // pred_check_branch
      %207 = sbr.rel (%p205) target = $region28
    $region27: #{resconv_basic_forward.4} parent=5 // pred_region
      // Predicated region
      $region29: #{resconv_basic_forward.4} parent=27 // pred_check
        %p208 = pneg %p33
      $region30: #{resconv_basic_forward.4} parent=27 // pred_check_branch
        %210 = sbr.rel (%p208) target = $region32
      $region31: #{resconv_basic_forward.4} parent=27 // pred_region
        %p211 = scmp.lt.s32.totalorder %s13, 1
        %s212 = scalar_select %p211, %s13, 1
        %s213 = smul.addr %s212, 56
        %s214 = smul.addr %s213, 4
        %s215 = scalar_lea.vmem %s0, %s214
      $region32: #{resconv_basic_forward.4} parent=27 // pred_fallthru
        _
    $region28: #{resconv_basic_forward.4} parent=5 // pred_fallthru
      _
    %p216 = scmp.le.s32.totalorder 1, %s13
    %p217 = scmp.lt.s32.totalorder %s13, 3
    %p218 = pnand %p216, %p217
    %p219 = pneg %p218
    // Predicated region
    $region33: #{resconv_basic_forward.4} parent=5 // pred_check
      _
    $region34: #{resconv_basic_forward.4} parent=5 // pred_check_branch
      %221 = sbr.rel (%p218) target = $region36
    $region35: #{resconv_basic_forward.4} parent=5 // pred_region
      %s222 = ssub.s32 %s13, 1
      %p223 = scmp.lt.s32.totalorder %s18, 1
      %s224 = scalar_select %p223, %s18, 1
      %s225 = smul.addr %s224, 56
      %s226 = smul.addr %s225, 4
      %s227 = scalar_lea.vmem %s0, %s226
      %p228 = pneg %p39
      %p229 = pneg %p36
      %p230 = pneg %p60
      %p231 = pneg %p57
      %p232 = pneg %p81
      %p233 = pneg %p78
      %p234 = pneg %p102
      %p235 = pneg %p99
      %p236 = pneg %p128
      %p237 = pneg %p125
      %p238 = scmp.lt.s32.totalorder %s18, 1
      %s239 = scalar_select %p238, %s18, 1
      %s240 = smul.addr %s239, 10
      %s241 = smul.addr %s240, 4
      %s242 = scalar_lea.vmem %s4, %s241
      %p243 = pneg %p154
      %p244 = pneg %p151
      %p245 = scmp.lt.s32.totalorder %s18, 1
      %s246 = scalar_select %p245, %s18, 1
      %s247 = scalar_lea.vmem %s5, %s246
      %p248 = pneg %p180
      %p249 = pneg %p177
      %p250 = scmp.lt.s32.totalorder %s18, 1
      %s251 = scalar_select %p250, %s18, 1
      %s252 = scalar_lea.vmem %s6, %s251
      %p253 = scmp.lt.s32.totalorder %s18, 1
      %s254 = scalar_select %p253, %s18, 1
      %s255 = smul.addr %s254, 56
      %s256 = smul.addr %s255, 4
      %s257 = scalar_lea.vmem %s0, %s256
      %p258 = scmp.lt.s32.totalorder %s18, 1
      %s259 = scalar_select %p258, %s18, 1
      %s260 = smul.addr %s259, 10
      %s261 = smul.addr %s260, 4
      %s262 = scalar_lea.vmem %s4, %s261
      %p263 = scmp.lt.s32.totalorder %s18, 1
      %s264 = scalar_select %p263, %s18, 1
      %s265 = scalar_lea.vmem %s5, %s264
      %p266 = scmp.lt.s32.totalorder %s18, 1
      %s267 = scalar_select %p266, %s18, 1
      %s268 = scalar_lea.vmem %s6, %s267
      %v270 = vld [vmem:[%s257] sm:$0xf]
      %v271 = vld [vmem:[%s257 + $0x4] sm:$0xf]
      %v272 = vld [vmem:[%s257 + $0x8] sm:$0xf]
      %v273 = vld [vmem:[%s257 + $0xc] sm:$0xf]
      %v274 = vld [vmem:[%s257 + $0x10] sm:$0xf]
      %v275 = vld [vmem:[%s257 + $0x14] sm:$0xf]
      %v276 = vld [vmem:[%s257 + $0x18] sm:$0xf]
      %v277 = vld [vmem:[%s257 + $0x1c] sm:$0xf]
      %v278 = vld [vmem:[%s257 + $0x20] sm:$0xf]
      %v279 = vld [vmem:[%s257 + $0x24] sm:$0xf]
      %v280 = vld [vmem:[%s1] sm:$0xf]
      %v281 = vld [vmem:[%s1 + $0x4] sm:$0xf]
      %s282 = scalar_lea.vmem %s257, 56
      %v283 = vld [vmem:[%s282] sm:$0xf]
      %v284 = vld [vmem:[%s282 + $0x4] sm:$0xf]
      %v285 = vld [vmem:[%s282 + $0x8] sm:$0xf]
      %v286 = vld [vmem:[%s282 + $0xc] sm:$0xf]
      %v287 = vld [vmem:[%s282 + $0x10] sm:$0xf]
      %v288 = vld [vmem:[%s282 + $0x14] sm:$0xf]
      %v289 = vld [vmem:[%s282 + $0x18] sm:$0xf]
      %v290 = vld [vmem:[%s282 + $0x1c] sm:$0xf]
      %v291 = vld [vmem:[%s282 + $0x20] sm:$0xf]
      %v292 = vld [vmem:[%s282 + $0x24] sm:$0xf]
      %s293 = scalar_lea.vmem %s1, 8
      %v294 = vld [vmem:[%s293] sm:$0xf]
      %v295 = vld [vmem:[%s293 + $0x4] sm:$0xf]
      %v306 = vunpack.c.l.b16 %v283
      %v307 = vunpack.c.l.b16 %v284
      %v308 = vunpack.c.l.b16 %v285
      %v309 = vunpack.c.l.b16 %v286
      %v310 = vunpack.c.l.b16 %v287
      %v311 = vunpack.c.l.b16 %v288
      %v312 = vunpack.c.l.b16 %v289
      %v313 = vunpack.c.l.b16 %v290
      %v314 = vunpack.c.l.b16 %v291
      %v315 = vunpack.c.l.b16 %v292
      %v316 = vpack.c.b16 %v307, %v306
      %v317 = vpack.c.b16 %v309, %v308
      %v318 = vpack.c.b16 %v311, %v310
      %v319 = vpack.c.b16 %v313, %v312
      %v320 = vpack.c.b16 %v315, %v314
      %v323 = vunpack.c.l.b16 %v294
      %v324 = vunpack.c.l.b16 %v295
      %v325 = vpack.c.b16 %v324, %v323
      %vm327 = vcmask 130048
      %v329 = vsel %vm327, %v316, 0
      %v332 = vsel %vm327, %v317, 0
      %v335 = vsel %vm327, %v318, 0
      %v338 = vsel %vm327, %v319, 0
      %v341 = vsel %vm327, %v320, 0
      %343 = vmatpush.bf16.msra.mxu0 0
      %344 = vmatpush.bf16.msra.mxu0 0
      %345 = vmatpush.bf16.msra.mxu0 0
      %346 = vmatpush.bf16.msra.mxu0 0
      %347 = vmatpush.bf16.msra.mxu0 0
      %348 = vmatpush.bf16.msra.mxu0 0
      %349 = vmatpush.bf16.msra.mxu0 0
      %350 = vmatpush.bf16.msra.mxu0 %v325
      %351 = vmatmul.bf16.gmra.mxu0 %v329
      %v352 = vpop.f32.mrf.mxu0
      %v353 = vadd.f32 0.0, %v352
      %v354 = vpop.f32.mrf.mxu0
      %v355 = vadd.f32 0.0, %v354
      %356 = vmatmul.bf16.gmra.mxu0 %v332
      %v357 = vpop.f32.mrf.mxu0
      %v358 = vadd.f32 0.0, %v357
      %v359 = vpop.f32.mrf.mxu0
      %v360 = vadd.f32 0.0, %v359
      %361 = vmatmul.bf16.gmra.mxu0 %v335
      %v362 = vpop.f32.mrf.mxu0
      %v363 = vadd.f32 0.0, %v362
      %v364 = vpop.f32.mrf.mxu0
      %v365 = vadd.f32 0.0, %v364
      %366 = vmatmul.bf16.gmra.mxu0 %v338
      %v367 = vpop.f32.mrf.mxu0
      %v368 = vadd.f32 0.0, %v367
      %v369 = vpop.f32.mrf.mxu0
      %v370 = vadd.f32 0.0, %v369
      %371 = vmatmul.bf16.gmra.mxu0 %v341
      %v372 = vpop.f32.mrf.mxu0
      %v373 = vadd.f32 0.0, %v372
      %v374 = vpop.f32.mrf.mxu0
      %v375 = vadd.f32 0.0, %v374
      %376 = vdwg.mxu0
      %v387 = vunpack.c.l.b16 %v270
      %v388 = vunpack.c.l.b16 %v271
      %v389 = vunpack.c.l.b16 %v272
      %v390 = vunpack.c.l.b16 %v273
      %v391 = vunpack.c.l.b16 %v274
      %v392 = vunpack.c.l.b16 %v275
      %v393 = vunpack.c.l.b16 %v276
      %v394 = vunpack.c.l.b16 %v277
      %v395 = vunpack.c.l.b16 %v278
      %v396 = vunpack.c.l.b16 %v279
      %v397 = vpack.c.b16 %v388, %v387
      %v398 = vpack.c.b16 %v390, %v389
      %v399 = vpack.c.b16 %v392, %v391
      %v400 = vpack.c.b16 %v394, %v393
      %v401 = vpack.c.b16 %v396, %v395
      %v404 = vunpack.c.l.b16 %v280
      %v405 = vunpack.c.l.b16 %v281
      %v406 = vpack.c.b16 %v405, %v404
      %v409 = vsel %vm327, %v397, 0
      %v412 = vsel %vm327, %v398, 0
      %v415 = vsel %vm327, %v399, 0
      %v418 = vsel %vm327, %v400, 0
      %v421 = vsel %vm327, %v401, 0
      %423 = vmatpush.bf16.msra.mxu0 0
      %424 = vmatpush.bf16.msra.mxu0 0
      %425 = vmatpush.bf16.msra.mxu0 0
      %426 = vmatpush.bf16.msra.mxu0 0
      %427 = vmatpush.bf16.msra.mxu0 0
      %428 = vmatpush.bf16.msra.mxu0 0
      %429 = vmatpush.bf16.msra.mxu0 0
      %430 = vmatpush.bf16.msra.mxu0 %v406
      %431 = vmatmul.bf16.gmra.mxu0 %v409
      %v432 = vpop.f32.mrf.mxu0
      %v433 = vadd.f32 %v353, %v432
      %v434 = vpop.f32.mrf.mxu0
      %v435 = vadd.f32 %v355, %v434
      %436 = vmatmul.bf16.gmra.mxu0 %v412
      %v437 = vpop.f32.mrf.mxu0
      %v438 = vadd.f32 %v358, %v437
      %v439 = vpop.f32.mrf.mxu0
      %v440 = vadd.f32 %v360, %v439
      %441 = vmatmul.bf16.gmra.mxu0 %v415
      %v442 = vpop.f32.mrf.mxu0
      %v443 = vadd.f32 %v363, %v442
      %v444 = vpop.f32.mrf.mxu0
      %v445 = vadd.f32 %v365, %v444
      %446 = vmatmul.bf16.gmra.mxu0 %v418
      %v447 = vpop.f32.mrf.mxu0
      %v448 = vadd.f32 %v368, %v447
      %v449 = vpop.f32.mrf.mxu0
      %v450 = vadd.f32 %v370, %v449
      %451 = vmatmul.bf16.gmra.mxu0 %v421
      %v452 = vpop.f32.mrf.mxu0
      %v453 = vadd.f32 %v373, %v452
      %v454 = vpop.f32.mrf.mxu0
      %v455 = vadd.f32 %v375, %v454
      %456 = vdwg.mxu0
      %v457 = vld [vmem:[%s257] sm:$0xf]
      %v458 = vld [vmem:[%s257 + $0x4] sm:$0xf]
      %v459 = vld [vmem:[%s257 + $0x8] sm:$0xf]
      %v460 = vld [vmem:[%s257 + $0xc] sm:$0xf]
      %v461 = vld [vmem:[%s257 + $0x10] sm:$0xf]
      %v462 = vld [vmem:[%s257 + $0x14] sm:$0xf]
      %v463 = vld [vmem:[%s257 + $0x18] sm:$0xf]
      %v464 = vld [vmem:[%s257 + $0x1c] sm:$0xf]
      %v465 = vld [vmem:[%s257 + $0x20] sm:$0xf]
      %v466 = vld [vmem:[%s257 + $0x24] sm:$0xf]
      %v467 = vld [vmem:[%s257 + $0x28] sm:$0x1]
      %s468 = scalar_lea.vmem %s1, 16
      %v469 = vld [vmem:[%s468] sm:$0xf]
      %v470 = vld [vmem:[%s468 + $0x4] sm:$0xf]
      %v482 = vunpack.c.l.b16 %v457
      %v483 = vunpack.c.l.b16 %v458
      %v484 = vunpack.c.l.b16 %v459
      %v485 = vunpack.c.l.b16 %v460
      %v486 = vunpack.c.l.b16 %v461
      %v487 = vunpack.c.l.b16 %v462
      %v488 = vunpack.c.l.b16 %v463
      %v489 = vunpack.c.l.b16 %v464
      %v490 = vunpack.c.l.b16 %v465
      %v491 = vunpack.c.l.b16 %v466
      %v492 = vunpack.c.l.b16 %v467
      %v493 = vpack.c.b16 %v483, %v482
      %v494 = vpack.c.b16 %v485, %v484
      %v495 = vpack.c.b16 %v487, %v486
      %v496 = vpack.c.b16 %v489, %v488
      %v497 = vpack.c.b16 %v491, %v490
      %v498 = vpack.c.b16 %v492, %v492
      %vm499 = vsmask.f32 7424
      %v501 = vshrl.u32 %v493, 16
      %v503 = vshll.u32 %v493, 16
      %v505 = vrot.slane %v503, 1
      %v506 = vor.u32 %v501, %v505
      %v508 = vshll.u32 %v494, 16
      %v510 = vrot.slane %v508, 1
      %v511 = vsel %vm499, %v506, %v510
      %v512 = vshrl.u32 %v494, 16
      %v514 = vor.u32 %v512, %v510
      %v516 = vshll.u32 %v495, 16
      %v518 = vrot.slane %v516, 1
      %v519 = vsel %vm499, %v514, %v518
      %v520 = vshrl.u32 %v495, 16
      %v522 = vor.u32 %v520, %v518
      %v524 = vshll.u32 %v496, 16
      %v526 = vrot.slane %v524, 1
      %v527 = vsel %vm499, %v522, %v526
      %v528 = vshrl.u32 %v496, 16
      %v530 = vor.u32 %v528, %v526
      %v532 = vshll.u32 %v497, 16
      %v534 = vrot.slane %v532, 1
      %v535 = vsel %vm499, %v530, %v534
      %v536 = vshrl.u32 %v497, 16
      %v538 = vor.u32 %v536, %v534
      %v540 = vshll.u32 %v498, 16
      %v542 = vrot.slane %v540, 1
      %v543 = vsel %vm499, %v538, %v542
      %v546 = vunpack.c.l.b16 %v469
      %v547 = vunpack.c.l.b16 %v470
      %v548 = vpack.c.b16 %v547, %v546
      %v551 = vsel %vm327, %v511, 0
      %v554 = vsel %vm327, %v519, 0
      %v557 = vsel %vm327, %v527, 0
      %v560 = vsel %vm327, %v535, 0
      %v563 = vsel %vm327, %v543, 0
      %565 = vmatpush.bf16.msra.mxu0 0
      %566 = vmatpush.bf16.msra.mxu0 0
      %567 = vmatpush.bf16.msra.mxu0 0
      %568 = vmatpush.bf16.msra.mxu0 0
      %569 = vmatpush.bf16.msra.mxu0 0
      %570 = vmatpush.bf16.msra.mxu0 0
      %571 = vmatpush.bf16.msra.mxu0 0
      %572 = vmatpush.bf16.msra.mxu0 %v548
      %573 = vmatmul.bf16.gmra.mxu0 %v551
      %v574 = vpop.f32.mrf.mxu0
      %v575 = vadd.f32 0.0, %v574
      %v576 = vpop.f32.mrf.mxu0
      %v577 = vadd.f32 0.0, %v576
      %578 = vmatmul.bf16.gmra.mxu0 %v554
      %v579 = vpop.f32.mrf.mxu0
      %v580 = vadd.f32 0.0, %v579
      %v581 = vpop.f32.mrf.mxu0
      %v582 = vadd.f32 0.0, %v581
      %583 = vmatmul.bf16.gmra.mxu0 %v557
      %v584 = vpop.f32.mrf.mxu0
      %v585 = vadd.f32 0.0, %v584
      %v586 = vpop.f32.mrf.mxu0
      %v587 = vadd.f32 0.0, %v586
      %588 = vmatmul.bf16.gmra.mxu0 %v560
      %v589 = vpop.f32.mrf.mxu0
      %v590 = vadd.f32 0.0, %v589
      %v591 = vpop.f32.mrf.mxu0
      %v592 = vadd.f32 0.0, %v591
      %593 = vmatmul.bf16.gmra.mxu0 %v563
      %v594 = vpop.f32.mrf.mxu0
      %v595 = vadd.f32 0.0, %v594
      %v596 = vpop.f32.mrf.mxu0
      %v597 = vadd.f32 0.0, %v596
      %598 = vdwg.mxu0
      %v599 = vadd.f32 %v433, %v575
      %v600 = vadd.f32 %v435, %v577
      %v601 = vadd.f32 %v438, %v580
      %v602 = vadd.f32 %v440, %v582
      %v603 = vadd.f32 %v443, %v585
      %v604 = vadd.f32 %v445, %v587
      %v605 = vadd.f32 %v448, %v590
      %v606 = vadd.f32 %v450, %v592
      %v607 = vadd.f32 %v453, %v595
      %v608 = vadd.f32 %v455, %v597
      %s609 = scalar_lea.vmem %s257, 112
      %v610 = vld [vmem:[%s609] sm:$0xf]
      %v611 = vld [vmem:[%s609 + $0x4] sm:$0xf]
      %v612 = vld [vmem:[%s609 + $0x8] sm:$0xf]
      %v613 = vld [vmem:[%s609 + $0xc] sm:$0xf]
      %v614 = vld [vmem:[%s609 + $0x10] sm:$0xf]
      %v615 = vld [vmem:[%s609 + $0x14] sm:$0xf]
      %v616 = vld [vmem:[%s609 + $0x18] sm:$0xf]
      %v617 = vld [vmem:[%s609 + $0x1c] sm:$0xf]
      %v618 = vld [vmem:[%s609 + $0x20] sm:$0xf]
      %v619 = vld [vmem:[%s609 + $0x24] sm:$0xf]
      %s620 = scalar_lea.vmem %s1, 24
      %v621 = vld [vmem:[%s620] sm:$0xf]
      %v622 = vld [vmem:[%s620 + $0x4] sm:$0xf]
      %v633 = vunpack.c.l.b16 %v610
      %v634 = vunpack.c.l.b16 %v611
      %v635 = vunpack.c.l.b16 %v612
      %v636 = vunpack.c.l.b16 %v613
      %v637 = vunpack.c.l.b16 %v614
      %v638 = vunpack.c.l.b16 %v615
      %v639 = vunpack.c.l.b16 %v616
      %v640 = vunpack.c.l.b16 %v617
      %v641 = vunpack.c.l.b16 %v618
      %v642 = vunpack.c.l.b16 %v619
      %v643 = vpack.c.b16 %v634, %v633
      %v644 = vpack.c.b16 %v636, %v635
      %v645 = vpack.c.b16 %v638, %v637
      %v646 = vpack.c.b16 %v640, %v639
      %v647 = vpack.c.b16 %v642, %v641
      %v650 = vunpack.c.l.b16 %v621
      %v651 = vunpack.c.l.b16 %v622
      %v652 = vpack.c.b16 %v651, %v650
      %v655 = vsel %vm327, %v643, 0
      %v658 = vsel %vm327, %v644, 0
      %v661 = vsel %vm327, %v645, 0
      %v664 = vsel %vm327, %v646, 0
      %v667 = vsel %vm327, %v647, 0
      %669 = vmatpush.bf16.msra.mxu0 0
      %670 = vmatpush.bf16.msra.mxu0 0
      %671 = vmatpush.bf16.msra.mxu0 0
      %672 = vmatpush.bf16.msra.mxu0 0
      %673 = vmatpush.bf16.msra.mxu0 0
      %674 = vmatpush.bf16.msra.mxu0 0
      %675 = vmatpush.bf16.msra.mxu0 0
      %676 = vmatpush.bf16.msra.mxu0 %v652
      %677 = vmatmul.bf16.gmra.mxu0 %v655
      %v678 = vpop.f32.mrf.mxu0
      %v679 = vadd.f32 0.0, %v678
      %v680 = vpop.f32.mrf.mxu0
      %v681 = vadd.f32 0.0, %v680
      %682 = vmatmul.bf16.gmra.mxu0 %v658
      %v683 = vpop.f32.mrf.mxu0
      %v684 = vadd.f32 0.0, %v683
      %v685 = vpop.f32.mrf.mxu0
      %v686 = vadd.f32 0.0, %v685
      %687 = vmatmul.bf16.gmra.mxu0 %v661
      %v688 = vpop.f32.mrf.mxu0
      %v689 = vadd.f32 0.0, %v688
      %v690 = vpop.f32.mrf.mxu0
      %v691 = vadd.f32 0.0, %v690
      %692 = vmatmul.bf16.gmra.mxu0 %v664
      %v693 = vpop.f32.mrf.mxu0
      %v694 = vadd.f32 0.0, %v693
      %v695 = vpop.f32.mrf.mxu0
      %v696 = vadd.f32 0.0, %v695
      %697 = vmatmul.bf16.gmra.mxu0 %v667
      %v698 = vpop.f32.mrf.mxu0
      %v699 = vadd.f32 0.0, %v698
      %v700 = vpop.f32.mrf.mxu0
      %v701 = vadd.f32 0.0, %v700
      %702 = vdwg.mxu0
      %v703 = vadd.f32 %v599, %v679
      %v704 = vadd.f32 %v600, %v681
      %v705 = vadd.f32 %v601, %v684
      %v706 = vadd.f32 %v602, %v686
      %v707 = vadd.f32 %v603, %v689
      %v708 = vadd.f32 %v604, %v691
      %v709 = vadd.f32 %v605, %v694
      %v710 = vadd.f32 %v606, %v696
      %v711 = vadd.f32 %v607, %v699
      %v712 = vadd.f32 %v608, %v701
      %s713 = scalar_lea.vmem %s257, 168
      %v714 = vld [vmem:[%s713] sm:$0xf]
      %v715 = vld [vmem:[%s713 + $0x4] sm:$0xf]
      %v716 = vld [vmem:[%s713 + $0x8] sm:$0xf]
      %v717 = vld [vmem:[%s713 + $0xc] sm:$0xf]
      %v718 = vld [vmem:[%s713 + $0x10] sm:$0xf]
      %v719 = vld [vmem:[%s713 + $0x14] sm:$0xf]
      %v720 = vld [vmem:[%s713 + $0x18] sm:$0xf]
      %v721 = vld [vmem:[%s713 + $0x1c] sm:$0xf]
      %v722 = vld [vmem:[%s713 + $0x20] sm:$0xf]
      %v723 = vld [vmem:[%s713 + $0x24] sm:$0xf]
      %s724 = scalar_lea.vmem %s1, 32
      %v725 = vld [vmem:[%s724] sm:$0xf]
      %v726 = vld [vmem:[%s724 + $0x4] sm:$0xf]
      %v737 = vunpack.c.l.b16 %v714
      %v738 = vunpack.c.l.b16 %v715
      %v739 = vunpack.c.l.b16 %v716
      %v740 = vunpack.c.l.b16 %v717
      %v741 = vunpack.c.l.b16 %v718
      %v742 = vunpack.c.l.b16 %v719
      %v743 = vunpack.c.l.b16 %v720
      %v744 = vunpack.c.l.b16 %v721
      %v745 = vunpack.c.l.b16 %v722
      %v746 = vunpack.c.l.b16 %v723
      %v747 = vpack.c.b16 %v738, %v737
      %v748 = vpack.c.b16 %v740, %v739
      %v749 = vpack.c.b16 %v742, %v741
      %v750 = vpack.c.b16 %v744, %v743
      %v751 = vpack.c.b16 %v746, %v745
      %v754 = vunpack.c.l.b16 %v725
      %v755 = vunpack.c.l.b16 %v726
      %v756 = vpack.c.b16 %v755, %v754
      %v759 = vsel %vm327, %v747, 0
      %v762 = vsel %vm327, %v748, 0
      %v765 = vsel %vm327, %v749, 0
      %v768 = vsel %vm327, %v750, 0
      %v771 = vsel %vm327, %v751, 0
      %773 = vmatpush.bf16.msra.mxu0 0
      %774 = vmatpush.bf16.msra.mxu0 0
      %775 = vmatpush.bf16.msra.mxu0 0
      %776 = vmatpush.bf16.msra.mxu0 0
      %777 = vmatpush.bf16.msra.mxu0 0
      %778 = vmatpush.bf16.msra.mxu0 0
      %779 = vmatpush.bf16.msra.mxu0 0
      %780 = vmatpush.bf16.msra.mxu0 %v756
      %781 = vmatmul.bf16.gmra.mxu0 %v759
      %v782 = vpop.f32.mrf.mxu0
      %v783 = vadd.f32 0.0, %v782
      %v784 = vpop.f32.mrf.mxu0
      %v785 = vadd.f32 0.0, %v784
      %786 = vmatmul.bf16.gmra.mxu0 %v762
      %v787 = vpop.f32.mrf.mxu0
      %v788 = vadd.f32 0.0, %v787
      %v789 = vpop.f32.mrf.mxu0
      %v790 = vadd.f32 0.0, %v789
      %791 = vmatmul.bf16.gmra.mxu0 %v765
      %v792 = vpop.f32.mrf.mxu0
      %v793 = vadd.f32 0.0, %v792
      %v794 = vpop.f32.mrf.mxu0
      %v795 = vadd.f32 0.0, %v794
      %796 = vmatmul.bf16.gmra.mxu0 %v768
      %v797 = vpop.f32.mrf.mxu0
      %v798 = vadd.f32 0.0, %v797
      %v799 = vpop.f32.mrf.mxu0
      %v800 = vadd.f32 0.0, %v799
      %801 = vmatmul.bf16.gmra.mxu0 %v771
      %v802 = vpop.f32.mrf.mxu0
      %v803 = vadd.f32 0.0, %v802
      %v804 = vpop.f32.mrf.mxu0
      %v805 = vadd.f32 0.0, %v804
      %806 = vdwg.mxu0
      %v807 = vadd.f32 %v703, %v783
      %v808 = vadd.f32 %v704, %v785
      %v809 = vadd.f32 %v705, %v788
      %v810 = vadd.f32 %v706, %v790
      %v811 = vadd.f32 %v707, %v793
      %v812 = vadd.f32 %v708, %v795
      %v813 = vadd.f32 %v709, %v798
      %v814 = vadd.f32 %v710, %v800
      %v815 = vadd.f32 %v711, %v803
      %v816 = vadd.f32 %v712, %v805
      %v817 = vld [vmem:[%s609] sm:$0xf]
      %v818 = vld [vmem:[%s609 + $0x4] sm:$0xf]
      %v819 = vld [vmem:[%s609 + $0x8] sm:$0xf]
      %v820 = vld [vmem:[%s609 + $0xc] sm:$0xf]
      %v821 = vld [vmem:[%s609 + $0x10] sm:$0xf]
      %v822 = vld [vmem:[%s609 + $0x14] sm:$0xf]
      %v823 = vld [vmem:[%s609 + $0x18] sm:$0xf]
      %v824 = vld [vmem:[%s609 + $0x1c] sm:$0xf]
      %v825 = vld [vmem:[%s609 + $0x20] sm:$0xf]
      %v826 = vld [vmem:[%s609 + $0x24] sm:$0xf]
      %v827 = vld [vmem:[%s609 + $0x28] sm:$0x1]
      %s828 = scalar_lea.vmem %s1, 40
      %v829 = vld [vmem:[%s828] sm:$0xf]
      %v830 = vld [vmem:[%s828 + $0x4] sm:$0xf]
      %v842 = vunpack.c.l.b16 %v817
      %v843 = vunpack.c.l.b16 %v818
      %v844 = vunpack.c.l.b16 %v819
      %v845 = vunpack.c.l.b16 %v820
      %v846 = vunpack.c.l.b16 %v821
      %v847 = vunpack.c.l.b16 %v822
      %v848 = vunpack.c.l.b16 %v823
      %v849 = vunpack.c.l.b16 %v824
      %v850 = vunpack.c.l.b16 %v825
      %v851 = vunpack.c.l.b16 %v826
      %v852 = vunpack.c.l.b16 %v827
      %v853 = vpack.c.b16 %v843, %v842
      %v854 = vpack.c.b16 %v845, %v844
      %v855 = vpack.c.b16 %v847, %v846
      %v856 = vpack.c.b16 %v849, %v848
      %v857 = vpack.c.b16 %v851, %v850
      %v858 = vpack.c.b16 %v852, %v852
      %v860 = vshrl.u32 %v853, 16
      %v862 = vshll.u32 %v853, 16
      %v864 = vrot.slane %v862, 1
      %v865 = vor.u32 %v860, %v864
      %v867 = vshll.u32 %v854, 16
      %v869 = vrot.slane %v867, 1
      %v870 = vsel %vm499, %v865, %v869
      %v871 = vshrl.u32 %v854, 16
      %v873 = vor.u32 %v871, %v869
      %v875 = vshll.u32 %v855, 16
      %v877 = vrot.slane %v875, 1
      %v878 = vsel %vm499, %v873, %v877
      %v879 = vshrl.u32 %v855, 16
      %v881 = vor.u32 %v879, %v877
      %v883 = vshll.u32 %v856, 16
      %v885 = vrot.slane %v883, 1
      %v886 = vsel %vm499, %v881, %v885
      %v887 = vshrl.u32 %v856, 16
      %v889 = vor.u32 %v887, %v885
      %v891 = vshll.u32 %v857, 16
      %v893 = vrot.slane %v891, 1
      %v894 = vsel %vm499, %v889, %v893
      %v895 = vshrl.u32 %v857, 16
      %v897 = vor.u32 %v895, %v893
      %v899 = vshll.u32 %v858, 16
      %v901 = vrot.slane %v899, 1
      %v902 = vsel %vm499, %v897, %v901
      %v905 = vunpack.c.l.b16 %v829
      %v906 = vunpack.c.l.b16 %v830
      %v907 = vpack.c.b16 %v906, %v905
      %v910 = vsel %vm327, %v870, 0
      %v913 = vsel %vm327, %v878, 0
      %v916 = vsel %vm327, %v886, 0
      %v919 = vsel %vm327, %v894, 0
      %v922 = vsel %vm327, %v902, 0
      %924 = vmatpush.bf16.msra.mxu0 0
      %925 = vmatpush.bf16.msra.mxu0 0
      %926 = vmatpush.bf16.msra.mxu0 0
      %927 = vmatpush.bf16.msra.mxu0 0
      %928 = vmatpush.bf16.msra.mxu0 0
      %929 = vmatpush.bf16.msra.mxu0 0
      %930 = vmatpush.bf16.msra.mxu0 0
      %931 = vmatpush.bf16.msra.mxu0 %v907
      %932 = vmatmul.bf16.gmra.mxu0 %v910
      %v933 = vpop.f32.mrf.mxu0
      %v934 = vadd.f32 0.0, %v933
      %v935 = vpop.f32.mrf.mxu0
      %v936 = vadd.f32 0.0, %v935
      %937 = vmatmul.bf16.gmra.mxu0 %v913
      %v938 = vpop.f32.mrf.mxu0
      %v939 = vadd.f32 0.0, %v938
      %v940 = vpop.f32.mrf.mxu0
      %v941 = vadd.f32 0.0, %v940
      %942 = vmatmul.bf16.gmra.mxu0 %v916
      %v943 = vpop.f32.mrf.mxu0
      %v944 = vadd.f32 0.0, %v943
      %v945 = vpop.f32.mrf.mxu0
      %v946 = vadd.f32 0.0, %v945
      %947 = vmatmul.bf16.gmra.mxu0 %v919
      %v948 = vpop.f32.mrf.mxu0
      %v949 = vadd.f32 0.0, %v948
      %v950 = vpop.f32.mrf.mxu0
      %v951 = vadd.f32 0.0, %v950
      %952 = vmatmul.bf16.gmra.mxu0 %v922
      %v953 = vpop.f32.mrf.mxu0
      %v954 = vadd.f32 0.0, %v953
      %v955 = vpop.f32.mrf.mxu0
      %v956 = vadd.f32 0.0, %v955
      %957 = vdwg.mxu0
      %v958 = vadd.f32 %v807, %v934
      %v959 = vadd.f32 %v808, %v936
      %v960 = vadd.f32 %v809, %v939
      %v961 = vadd.f32 %v810, %v941
      %v962 = vadd.f32 %v811, %v944
      %v963 = vadd.f32 %v812, %v946
      %v964 = vadd.f32 %v813, %v949
      %v965 = vadd.f32 %v814, %v951
      %v966 = vadd.f32 %v815, %v954
      %v967 = vadd.f32 %v816, %v956
      %v968 = vld [vmem:[%s257 + $0x4] sm:$0xe]
      %v969 = vld [vmem:[%s257 + $0x8] sm:$0xf]
      %v970 = vld [vmem:[%s257 + $0xc] sm:$0xf]
      %v971 = vld [vmem:[%s257 + $0x10] sm:$0xf]
      %v972 = vld [vmem:[%s257 + $0x14] sm:$0xf]
      %v973 = vld [vmem:[%s257 + $0x18] sm:$0xf]
      %v974 = vld [vmem:[%s257 + $0x1c] sm:$0xf]
      %v975 = vld [vmem:[%s257 + $0x20] sm:$0xf]
      %v976 = vld [vmem:[%s257 + $0x24] sm:$0xf]
      %v977 = vld [vmem:[%s257 + $0x28] sm:$0xf]
      %v978 = vld [vmem:[%s257 + $0x2c] sm:$0x1]
      %s979 = scalar_lea.vmem %s1, 48
      %v980 = vld [vmem:[%s979] sm:$0xf]
      %v981 = vld [vmem:[%s979 + $0x4] sm:$0xf]
      %v993 = vunpack.c.l.b16 %v968
      %v994 = vunpack.c.l.b16 %v969
      %v995 = vunpack.c.l.b16 %v970
      %v996 = vunpack.c.l.b16 %v971
      %v997 = vunpack.c.l.b16 %v972
      %v998 = vunpack.c.l.b16 %v973
      %v999 = vunpack.c.l.b16 %v974
      %v1000 = vunpack.c.l.b16 %v975
      %v1001 = vunpack.c.l.b16 %v976
      %v1002 = vunpack.c.l.b16 %v977
      %v1003 = vunpack.c.l.b16 %v978
      %v1004 = vpack.c.b16 %v994, %v993
      %v1005 = vpack.c.b16 %v996, %v995
      %v1006 = vpack.c.b16 %v998, %v997
      %v1007 = vpack.c.b16 %v1000, %v999
      %v1008 = vpack.c.b16 %v1002, %v1001
      %v1009 = vpack.c.b16 %v1003, %v1003
      %vm1010 = vcmask 1046528
      %v1011 = vrot.slane %v1004, 1
      %v1012 = vrot.slane %v1005, 1
      %v1013 = vsel %vm1010, %v1011, %v1012
      %v1014 = vrot.slane %v1006, 1
      %v1015 = vsel %vm1010, %v1012, %v1014
      %v1016 = vrot.slane %v1007, 1
      %v1017 = vsel %vm1010, %v1014, %v1016
      %v1018 = vrot.slane %v1008, 1
      %v1019 = vsel %vm1010, %v1016, %v1018
      %v1020 = vrot.slane %v1009, 1
      %v1021 = vsel %vm1010, %v1018, %v1020
      %v1024 = vunpack.c.l.b16 %v980
      %v1025 = vunpack.c.l.b16 %v981
      %v1026 = vpack.c.b16 %v1025, %v1024
      %v1029 = vsel %vm327, %v1013, 0
      %v1032 = vsel %vm327, %v1015, 0
      %v1035 = vsel %vm327, %v1017, 0
      %v1038 = vsel %vm327, %v1019, 0
      %v1041 = vsel %vm327, %v1021, 0
      %1043 = vmatpush.bf16.msra.mxu0 0
      %1044 = vmatpush.bf16.msra.mxu0 0
      %1045 = vmatpush.bf16.msra.mxu0 0
      %1046 = vmatpush.bf16.msra.mxu0 0
      %1047 = vmatpush.bf16.msra.mxu0 0
      %1048 = vmatpush.bf16.msra.mxu0 0
      %1049 = vmatpush.bf16.msra.mxu0 0
      %1050 = vmatpush.bf16.msra.mxu0 %v1026
      %1051 = vmatmul.bf16.gmra.mxu0 %v1029
      %v1052 = vpop.f32.mrf.mxu0
      %v1053 = vadd.f32 0.0, %v1052
      %v1054 = vpop.f32.mrf.mxu0
      %v1055 = vadd.f32 0.0, %v1054
      %1056 = vmatmul.bf16.gmra.mxu0 %v1032
      %v1057 = vpop.f32.mrf.mxu0
      %v1058 = vadd.f32 0.0, %v1057
      %v1059 = vpop.f32.mrf.mxu0
      %v1060 = vadd.f32 0.0, %v1059
      %1061 = vmatmul.bf16.gmra.mxu0 %v1035
      %v1062 = vpop.f32.mrf.mxu0
      %v1063 = vadd.f32 0.0, %v1062
      %v1064 = vpop.f32.mrf.mxu0
      %v1065 = vadd.f32 0.0, %v1064
      %1066 = vmatmul.bf16.gmra.mxu0 %v1038
      %v1067 = vpop.f32.mrf.mxu0
      %v1068 = vadd.f32 0.0, %v1067
      %v1069 = vpop.f32.mrf.mxu0
      %v1070 = vadd.f32 0.0, %v1069
      %1071 = vmatmul.bf16.gmra.mxu0 %v1041
      %v1072 = vpop.f32.mrf.mxu0
      %v1073 = vadd.f32 0.0, %v1072
      %v1074 = vpop.f32.mrf.mxu0
      %v1075 = vadd.f32 0.0, %v1074
      %1076 = vdwg.mxu0
      %v1077 = vadd.f32 %v958, %v1053
      %v1078 = vadd.f32 %v959, %v1055
      %v1079 = vadd.f32 %v960, %v1058
      %v1080 = vadd.f32 %v961, %v1060
      %v1081 = vadd.f32 %v962, %v1063
      %v1082 = vadd.f32 %v963, %v1065
      %v1083 = vadd.f32 %v964, %v1068
      %v1084 = vadd.f32 %v965, %v1070
      %v1085 = vadd.f32 %v966, %v1073
      %v1086 = vadd.f32 %v967, %v1075
      %v1087 = vld [vmem:[%s282 + $0x4] sm:$0xe]
      %v1088 = vld [vmem:[%s282 + $0x8] sm:$0xf]
      %v1089 = vld [vmem:[%s282 + $0xc] sm:$0xf]
      %v1090 = vld [vmem:[%s282 + $0x10] sm:$0xf]
      %v1091 = vld [vmem:[%s282 + $0x14] sm:$0xf]
      %v1092 = vld [vmem:[%s282 + $0x18] sm:$0xf]
      %v1093 = vld [vmem:[%s282 + $0x1c] sm:$0xf]
      %v1094 = vld [vmem:[%s282 + $0x20] sm:$0xf]
      %v1095 = vld [vmem:[%s282 + $0x24] sm:$0xf]
      %v1096 = vld [vmem:[%s282 + $0x28] sm:$0xf]
      %v1097 = vld [vmem:[%s282 + $0x2c] sm:$0x1]
      %s1098 = scalar_lea.vmem %s1, 56
      %v1099 = vld [vmem:[%s1098] sm:$0xf]
      %v1100 = vld [vmem:[%s1098 + $0x4] sm:$0xf]
      %v1112 = vunpack.c.l.b16 %v1087
      %v1113 = vunpack.c.l.b16 %v1088
      %v1114 = vunpack.c.l.b16 %v1089
      %v1115 = vunpack.c.l.b16 %v1090
      %v1116 = vunpack.c.l.b16 %v1091
      %v1117 = vunpack.c.l.b16 %v1092
      %v1118 = vunpack.c.l.b16 %v1093
      %v1119 = vunpack.c.l.b16 %v1094
      %v1120 = vunpack.c.l.b16 %v1095
      %v1121 = vunpack.c.l.b16 %v1096
      %v1122 = vunpack.c.l.b16 %v1097
      %v1123 = vpack.c.b16 %v1113, %v1112
      %v1124 = vpack.c.b16 %v1115, %v1114
      %v1125 = vpack.c.b16 %v1117, %v1116
      %v1126 = vpack.c.b16 %v1119, %v1118
      %v1127 = vpack.c.b16 %v1121, %v1120
      %v1128 = vpack.c.b16 %v1122, %v1122
      %v1129 = vrot.slane %v1123, 1
      %v1130 = vrot.slane %v1124, 1
      %v1131 = vsel %vm1010, %v1129, %v1130
      %v1132 = vrot.slane %v1125, 1
      %v1133 = vsel %vm1010, %v1130, %v1132
      %v1134 = vrot.slane %v1126, 1
      %v1135 = vsel %vm1010, %v1132, %v1134
      %v1136 = vrot.slane %v1127, 1
      %v1137 = vsel %vm1010, %v1134, %v1136
      %v1138 = vrot.slane %v1128, 1
      %v1139 = vsel %vm1010, %v1136, %v1138
      %v1142 = vunpack.c.l.b16 %v1099
      %v1143 = vunpack.c.l.b16 %v1100
      %v1144 = vpack.c.b16 %v1143, %v1142
      %v1147 = vsel %vm327, %v1131, 0
      %v1150 = vsel %vm327, %v1133, 0
      %v1153 = vsel %vm327, %v1135, 0
      %v1156 = vsel %vm327, %v1137, 0
      %v1159 = vsel %vm327, %v1139, 0
      %1161 = vmatpush.bf16.msra.mxu0 0
      %1162 = vmatpush.bf16.msra.mxu0 0
      %1163 = vmatpush.bf16.msra.mxu0 0
      %1164 = vmatpush.bf16.msra.mxu0 0
      %1165 = vmatpush.bf16.msra.mxu0 0
      %1166 = vmatpush.bf16.msra.mxu0 0
      %1167 = vmatpush.bf16.msra.mxu0 0
      %1168 = vmatpush.bf16.msra.mxu0 %v1144
      %1169 = vmatmul.bf16.gmra.mxu0 %v1147
      %v1170 = vpop.f32.mrf.mxu0
      %v1171 = vadd.f32 0.0, %v1170
      %v1172 = vpop.f32.mrf.mxu0
      %v1173 = vadd.f32 0.0, %v1172
      %1174 = vmatmul.bf16.gmra.mxu0 %v1150
      %v1175 = vpop.f32.mrf.mxu0
      %v1176 = vadd.f32 0.0, %v1175
      %v1177 = vpop.f32.mrf.mxu0
      %v1178 = vadd.f32 0.0, %v1177
      %1179 = vmatmul.bf16.gmra.mxu0 %v1153
      %v1180 = vpop.f32.mrf.mxu0
      %v1181 = vadd.f32 0.0, %v1180
      %v1182 = vpop.f32.mrf.mxu0
      %v1183 = vadd.f32 0.0, %v1182
      %1184 = vmatmul.bf16.gmra.mxu0 %v1156
      %v1185 = vpop.f32.mrf.mxu0
      %v1186 = vadd.f32 0.0, %v1185
      %v1187 = vpop.f32.mrf.mxu0
      %v1188 = vadd.f32 0.0, %v1187
      %1189 = vmatmul.bf16.gmra.mxu0 %v1159
      %v1190 = vpop.f32.mrf.mxu0
      %v1191 = vadd.f32 0.0, %v1190
      %v1192 = vpop.f32.mrf.mxu0
      %v1193 = vadd.f32 0.0, %v1192
      %1194 = vdwg.mxu0
      %v1195 = vadd.f32 %v1077, %v1171
      %v1196 = vadd.f32 %v1078, %v1173
      %v1197 = vadd.f32 %v1079, %v1176
      %v1198 = vadd.f32 %v1080, %v1178
      %v1199 = vadd.f32 %v1081, %v1181
      %v1200 = vadd.f32 %v1082, %v1183
      %v1201 = vadd.f32 %v1083, %v1186
      %v1202 = vadd.f32 %v1084, %v1188
      %v1203 = vadd.f32 %v1085, %v1191
      %v1204 = vadd.f32 %v1086, %v1193
      %v1205 = vld [vmem:[%s257 + $0x2c] sm:$0x3]
      %s1206 = scalar_lea.vmem %s1, 64
      %v1207 = vld [vmem:[%s1206] sm:$0xf]
      %v1208 = vld [vmem:[%s1206 + $0x4] sm:$0xf]
      %v1210 = vunpack.c.l.b16 %v1205
      %v1211 = vpack.c.b16 %v1210, %v1210
      %vm1212 = vsmask.f32 6400
      %v1214 = vshrl.u32 %v1004, 16
      %v1216 = vrot.slane %v1214, 1
      %v1217 = vshll.u32 %v1004, 16
      %v1219 = vrot.slane %v1217, 2
      %v1220 = vor.u32 %v1216, %v1219
      %v1222 = vshrl.u32 %v1005, 16
      %v1224 = vrot.slane %v1222, 1
      %v1225 = vshll.u32 %v1005, 16
      %v1227 = vrot.slane %v1225, 2
      %v1228 = vor.u32 %v1224, %v1227
      %v1229 = vsel %vm1212, %v1220, %v1228
      %v1231 = vshrl.u32 %v1006, 16
      %v1233 = vrot.slane %v1231, 1
      %v1234 = vshll.u32 %v1006, 16
      %v1236 = vrot.slane %v1234, 2
      %v1237 = vor.u32 %v1233, %v1236
      %v1238 = vsel %vm1212, %v1228, %v1237
      %v1240 = vshrl.u32 %v1007, 16
      %v1242 = vrot.slane %v1240, 1
      %v1243 = vshll.u32 %v1007, 16
      %v1245 = vrot.slane %v1243, 2
      %v1246 = vor.u32 %v1242, %v1245
      %v1247 = vsel %vm1212, %v1237, %v1246
      %v1249 = vshrl.u32 %v1008, 16
      %v1251 = vrot.slane %v1249, 1
      %v1252 = vshll.u32 %v1008, 16
      %v1254 = vrot.slane %v1252, 2
      %v1255 = vor.u32 %v1251, %v1254
      %v1256 = vsel %vm1212, %v1246, %v1255
      %v1258 = vshrl.u32 %v1211, 16
      %v1260 = vrot.slane %v1258, 1
      %v1261 = vshll.u32 %v1211, 16
      %v1263 = vrot.slane %v1261, 2
      %v1264 = vor.u32 %v1260, %v1263
      %v1265 = vsel %vm1212, %v1255, %v1264
      %v1268 = vunpack.c.l.b16 %v1207
      %v1269 = vunpack.c.l.b16 %v1208
      %v1270 = vpack.c.b16 %v1269, %v1268
      %v1273 = vsel %vm327, %v1229, 0
      %v1276 = vsel %vm327, %v1238, 0
      %v1279 = vsel %vm327, %v1247, 0
      %v1282 = vsel %vm327, %v1256, 0
      %v1285 = vsel %vm327, %v1265, 0
      %1287 = vmatpush.bf16.msra.mxu0 0
      %1288 = vmatpush.bf16.msra.mxu0 0
      %1289 = vmatpush.bf16.msra.mxu0 0
      %1290 = vmatpush.bf16.msra.mxu0 0
      %1291 = vmatpush.bf16.msra.mxu0 0
      %1292 = vmatpush.bf16.msra.mxu0 0
      %1293 = vmatpush.bf16.msra.mxu0 0
      %1294 = vmatpush.bf16.msra.mxu0 %v1270
      %1295 = vmatmul.bf16.gmra.mxu0 %v1273
      %v1296 = vpop.f32.mrf.mxu0
      %v1297 = vadd.f32 0.0, %v1296
      %v1298 = vpop.f32.mrf.mxu0
      %v1299 = vadd.f32 0.0, %v1298
      %1300 = vmatmul.bf16.gmra.mxu0 %v1276
      %v1301 = vpop.f32.mrf.mxu0
      %v1302 = vadd.f32 0.0, %v1301
      %v1303 = vpop.f32.mrf.mxu0
      %v1304 = vadd.f32 0.0, %v1303
      %1305 = vmatmul.bf16.gmra.mxu0 %v1279
      %v1306 = vpop.f32.mrf.mxu0
      %v1307 = vadd.f32 0.0, %v1306
      %v1308 = vpop.f32.mrf.mxu0
      %v1309 = vadd.f32 0.0, %v1308
      %1310 = vmatmul.bf16.gmra.mxu0 %v1282
      %v1311 = vpop.f32.mrf.mxu0
      %v1312 = vadd.f32 0.0, %v1311
      %v1313 = vpop.f32.mrf.mxu0
      %v1314 = vadd.f32 0.0, %v1313
      %1315 = vmatmul.bf16.gmra.mxu0 %v1285
      %v1316 = vpop.f32.mrf.mxu0
      %v1317 = vadd.f32 0.0, %v1316
      %v1318 = vpop.f32.mrf.mxu0
      %v1319 = vadd.f32 0.0, %v1318
      %1320 = vdwg.mxu0
      %v1321 = vadd.f32 %v1195, %v1297
      %v1322 = vadd.f32 %v1196, %v1299
      %v1323 = vadd.f32 %v1197, %v1302
      %v1324 = vadd.f32 %v1198, %v1304
      %v1325 = vadd.f32 %v1199, %v1307
      %v1326 = vadd.f32 %v1200, %v1309
      %v1327 = vadd.f32 %v1201, %v1312
      %v1328 = vadd.f32 %v1202, %v1314
      %v1329 = vadd.f32 %v1203, %v1317
      %v1330 = vadd.f32 %v1204, %v1319
      %v1331 = vld [vmem:[%s2] sm:$0x1]
      %v1333 = vperm.slane %v1331, 0
      %v1335 = vadd.f32 %v1321, %v1333
      %v1336 = vadd.f32 %v1322, %v1333
      %v1337 = vadd.f32 %v1323, %v1333
      %v1338 = vadd.f32 %v1324, %v1333
      %v1339 = vadd.f32 %v1325, %v1333
      %v1340 = vadd.f32 %v1326, %v1333
      %v1341 = vadd.f32 %v1327, %v1333
      %v1342 = vadd.f32 %v1328, %v1333
      %v1343 = vadd.f32 %v1329, %v1333
      %v1344 = vadd.f32 %v1330, %v1333
      %v1345 = vpack.c.bf16 %v1335, %v1335
      %v1346 = vpack.c.bf16 %v1336, %v1336
      %v1347 = vpack.c.bf16 %v1337, %v1337
      %v1348 = vpack.c.bf16 %v1338, %v1338
      %v1349 = vpack.c.bf16 %v1339, %v1339
      %v1350 = vpack.c.bf16 %v1340, %v1340
      %v1351 = vpack.c.bf16 %v1341, %v1341
      %v1352 = vpack.c.bf16 %v1342, %v1342
      %v1353 = vpack.c.bf16 %v1343, %v1343
      %v1354 = vpack.c.bf16 %v1344, %v1344
      %vm1355 = vcmask 125952
      %1356 = vst.msk [vmem:[%s262] sm:$0xf] %vm1355, %v1345
      %1357 = vst.msk [vmem:[%s262 + $0x4] sm:$0xf] %vm1355, %v1346
      %1358 = vst.msk [vmem:[%s262 + $0x8] sm:$0xf] %vm1355, %v1347
      %1359 = vst.msk [vmem:[%s262 + $0xc] sm:$0xf] %vm1355, %v1348
      %1360 = vst.msk [vmem:[%s262 + $0x10] sm:$0xf] %vm1355, %v1349
      %1361 = vst.msk [vmem:[%s262 + $0x14] sm:$0xf] %vm1355, %v1350
      %1362 = vst.msk [vmem:[%s262 + $0x18] sm:$0xf] %vm1355, %v1351
      %1363 = vst.msk [vmem:[%s262 + $0x1c] sm:$0xf] %vm1355, %v1352
      %1364 = vst.msk [vmem:[%s262 + $0x20] sm:$0xf] %vm1355, %v1353
      %1365 = vst.msk [vmem:[%s262 + $0x24] sm:$0xf] %vm1355, %v1354
      %v1366 = vld [vmem:[%s3] sm:$0xff]
      %v1367 = vld [vmem:[%s3 + $0x8] sm:$0xff]
      %v1368 = vld [vmem:[%s3 + $0x10] sm:$0xff]
      %v1369 = vld [vmem:[%s3 + $0x18] sm:$0xff]
      %v1370 = vld [vmem:[%s3 + $0x20] sm:$0xff]
      %v1371 = vld [vmem:[%s3 + $0x28] sm:$0xff]
      %v1372 = vld [vmem:[%s3 + $0x30] sm:$0xff]
      %v1373 = vld [vmem:[%s3 + $0x38] sm:$0xff]
      %v1374 = vld [vmem:[%s3 + $0x40] sm:$0xff]
      %v1375 = vld [vmem:[%s3 + $0x48] sm:$0xff]
      %1377 = vset.pattern.permute.xlu0 0
      %1378 = vperm.xlu0 %1377, %v1366
      %v1379 = vpop.permute.xlu0 %1378
      %1382 = vset.pattern.permute.xlu0 0
      %1383 = vperm.xlu0 %1382, %v1367
      %v1384 = vpop.permute.xlu0 %1383
      %1387 = vset.pattern.permute.xlu0 0
      %1388 = vperm.xlu0 %1387, %v1368
      %v1389 = vpop.permute.xlu0 %1388
      %1392 = vset.pattern.permute.xlu0 0
      %1393 = vperm.xlu0 %1392, %v1369
      %v1394 = vpop.permute.xlu0 %1393
      %1397 = vset.pattern.permute.xlu0 0
      %1398 = vperm.xlu0 %1397, %v1370
      %v1399 = vpop.permute.xlu0 %1398
      %1402 = vset.pattern.permute.xlu0 0
      %1403 = vperm.xlu0 %1402, %v1371
      %v1404 = vpop.permute.xlu0 %1403
      %1407 = vset.pattern.permute.xlu0 0
      %1408 = vperm.xlu0 %1407, %v1372
      %v1409 = vpop.permute.xlu0 %1408
      %1412 = vset.pattern.permute.xlu0 0
      %1413 = vperm.xlu0 %1412, %v1373
      %v1414 = vpop.permute.xlu0 %1413
      %1417 = vset.pattern.permute.xlu0 0
      %1418 = vperm.xlu0 %1417, %v1374
      %v1419 = vpop.permute.xlu0 %1418
      %1422 = vset.pattern.permute.xlu0 0
      %1423 = vperm.xlu0 %1422, %v1375
      %v1424 = vpop.permute.xlu0 %1423
      %v1426 = vmul.f32 %v1335, %v1379
      %v1427 = vmul.f32 %v1336, %v1384
      %v1428 = vmul.f32 %v1337, %v1389
      %v1429 = vmul.f32 %v1338, %v1394
      %v1430 = vmul.f32 %v1339, %v1399
      %v1431 = vmul.f32 %v1340, %v1404
      %v1432 = vmul.f32 %v1341, %v1409
      %v1433 = vmul.f32 %v1342, %v1414
      %v1434 = vmul.f32 %v1343, %v1419
      %v1435 = vmul.f32 %v1344, %v1424
      %v1436 = vsel %vm327, %v1426, 0.0
      %v1437 = vsel %vm327, %v1427, 0.0
      %v1438 = vadd.f32 %v1436, %v1437
      %v1439 = vsel %vm327, %v1428, 0.0
      %v1440 = vadd.f32 %v1438, %v1439
      %v1441 = vsel %vm327, %v1429, 0.0
      %v1442 = vadd.f32 %v1440, %v1441
      %v1443 = vsel %vm327, %v1430, 0.0
      %v1444 = vadd.f32 %v1442, %v1443
      %v1445 = vsel %vm327, %v1431, 0.0
      %v1446 = vadd.f32 %v1444, %v1445
      %v1447 = vsel %vm327, %v1432, 0.0
      %v1448 = vadd.f32 %v1446, %v1447
      %v1449 = vsel %vm327, %v1433, 0.0
      %v1450 = vadd.f32 %v1448, %v1449
      %v1451 = vsel %vm327, %v1434, 0.0
      %v1452 = vadd.f32 %v1450, %v1451
      %v1453 = vsel %vm327, %v1435, 0.0
      %v1454 = vadd.f32 %v1452, %v1453
      %v1455 = vrot.slane %v1454, 4
      %v1456 = vadd.f32 %v1454, %v1455
      %v1457 = vrot.slane %v1456, 2
      %v1458 = vadd.f32 %v1456, %v1457
      %v1459 = vrot.slane %v1458, 1
      %v1460 = vadd.f32 %v1458, %v1459
      %vm1461 = vcmask 122880
      %1462 = vst.msk [vmem:[%s265] sm:$0x1] %vm1461, %v1460
      %v1463 = vmul.f32 %v1426, %v1335
      %v1464 = vmul.f32 %v1427, %v1336
      %v1465 = vmul.f32 %v1428, %v1337
      %v1466 = vmul.f32 %v1429, %v1338
      %v1467 = vmul.f32 %v1430, %v1339
      %v1468 = vmul.f32 %v1431, %v1340
      %v1469 = vmul.f32 %v1432, %v1341
      %v1470 = vmul.f32 %v1433, %v1342
      %v1471 = vmul.f32 %v1434, %v1343
      %v1472 = vmul.f32 %v1435, %v1344
      %v1473 = vsel %vm327, %v1463, 0.0
      %v1474 = vsel %vm327, %v1464, 0.0
      %v1475 = vadd.f32 %v1473, %v1474
      %v1476 = vsel %vm327, %v1465, 0.0
      %v1477 = vadd.f32 %v1475, %v1476
      %v1478 = vsel %vm327, %v1466, 0.0
      %v1479 = vadd.f32 %v1477, %v1478
      %v1480 = vsel %vm327, %v1467, 0.0
      %v1481 = vadd.f32 %v1479, %v1480
      %v1482 = vsel %vm327, %v1468, 0.0
      %v1483 = vadd.f32 %v1481, %v1482
      %v1484 = vsel %vm327, %v1469, 0.0
      %v1485 = vadd.f32 %v1483, %v1484
      %v1486 = vsel %vm327, %v1470, 0.0
      %v1487 = vadd.f32 %v1485, %v1486
      %v1488 = vsel %vm327, %v1471, 0.0
      %v1489 = vadd.f32 %v1487, %v1488
      %v1490 = vsel %vm327, %v1472, 0.0
      %v1491 = vadd.f32 %v1489, %v1490
      %v1492 = vrot.slane %v1491, 4
      %v1493 = vadd.f32 %v1491, %v1492
      %v1494 = vrot.slane %v1493, 2
      %v1495 = vadd.f32 %v1493, %v1494
      %v1496 = vrot.slane %v1495, 1
      %v1497 = vadd.f32 %v1495, %v1496
      %1498 = vst.msk [vmem:[%s268] sm:$0x1] %vm1461, %v1497
      %p1499 = scmp.lt.s32.totalorder %s18, 1
      %s1500 = scalar_select %p1499, %s18, 1
      %s1501 = smul.addr %s1500, 10
      %s1502 = smul.addr %s1501, 4
      %s1503 = scalar_lea.vmem %s4, %s1502
      %p1504 = scmp.lt.s32.totalorder %s18, 1
      %s1505 = scalar_select %p1504, %s18, 1
      %s1506 = scalar_lea.vmem %s5, %s1505
      %p1507 = scmp.lt.s32.totalorder %s18, 1
      %s1508 = scalar_select %p1507, %s18, 1
      %s1509 = scalar_lea.vmem %s6, %s1508
      // Predicated region
      $region37: #{resconv_basic_forward.4} parent=35 // pred_check
        %p1510 = pneg %p125
      $region38: #{resconv_basic_forward.4} parent=35 // pred_check_branch
        %1512 = sbr.rel (%p1510) target = $region40
      $region39: #{resconv_basic_forward.4} parent=35 // pred_region
        _
      $region40: #{resconv_basic_forward.4} parent=35 // pred_fallthru
        _
      // Predicated region
      $region41: #{resconv_basic_forward.4} parent=35 // pred_check
        %p1513 = pneg %p151
      $region42: #{resconv_basic_forward.4} parent=35 // pred_check_branch
        %1515 = sbr.rel (%p1513) target = $region44
      $region43: #{resconv_basic_forward.4} parent=35 // pred_region
        _
      $region44: #{resconv_basic_forward.4} parent=35 // pred_fallthru
        _
      // Predicated region
      $region45: #{resconv_basic_forward.4} parent=35 // pred_check
        %p1516 = pneg %p177
      $region46: #{resconv_basic_forward.4} parent=35 // pred_check_branch
        %1518 = sbr.rel (%p1516) target = $region48
      $region47: #{resconv_basic_forward.4} parent=35 // pred_region
        _
      $region48: #{resconv_basic_forward.4} parent=35 // pred_fallthru
        _
    $region36: #{resconv_basic_forward.4} parent=5 // pred_fallthru
      _
    %p1519 = scmp.le.s32.totalorder 2, %s13
    // Predicated region
    $region49: #{resconv_basic_forward.4} parent=5 // pred_check
      %p1520 = pneg %p1519
    $region50: #{resconv_basic_forward.4} parent=5 // pred_check_branch
      %1522 = sbr.rel (%p1520) target = $region52
    $region51: #{resconv_basic_forward.4} parent=5 // pred_region
      %s1523 = ssub.s32 %s13, 2
      // Predicated region
      $region53: #{resconv_basic_forward.4} parent=51 // pred_check
        %p1524 = pneg %p131
      $region54: #{resconv_basic_forward.4} parent=51 // pred_check_branch
        %1526 = sbr.rel (%p1524) target = $region56
      $region55: #{resconv_basic_forward.4} parent=51 // pred_region
        %p1527 = scmp.lt.s32.totalorder %s19, 1
        %s1528 = scalar_select %p1527, %s19, 1
        %s1529 = smul.addr %s1528, 10
        %s1530 = smul.addr %s1529, 4
        %s1531 = scalar_lea.vmem %s4, %s1530
      $region56: #{resconv_basic_forward.4} parent=51 // pred_fallthru
        _
      // Predicated region
      $region57: #{resconv_basic_forward.4} parent=51 // pred_check
        %p1532 = pneg %p157
      $region58: #{resconv_basic_forward.4} parent=51 // pred_check_branch
        %1534 = sbr.rel (%p1532) target = $region60
      $region59: #{resconv_basic_forward.4} parent=51 // pred_region
        %p1535 = scmp.lt.s32.totalorder %s19, 1
        %s1536 = scalar_select %p1535, %s19, 1
        %s1537 = scalar_lea.vmem %s5, %s1536
      $region60: #{resconv_basic_forward.4} parent=51 // pred_fallthru
        _
      // Predicated region
      $region61: #{resconv_basic_forward.4} parent=51 // pred_check
        %p1538 = pneg %p183
      $region62: #{resconv_basic_forward.4} parent=51 // pred_check_branch
        %1540 = sbr.rel (%p1538) target = $region64
      $region63: #{resconv_basic_forward.4} parent=51 // pred_region
        %p1541 = scmp.lt.s32.totalorder %s19, 1
        %s1542 = scalar_select %p1541, %s19, 1
        %s1543 = scalar_lea.vmem %s6, %s1542
      $region64: #{resconv_basic_forward.4} parent=51 // pred_fallthru
        _
    $region52: #{resconv_basic_forward.4} parent=5 // pred_fallthru
      _
  $region6: #{resconv_basic_forward.4} parent=0 // loop_footer
    %s17 = sadd.s32 1, %s13
  $region7: #{resconv_basic_forward.4} parent=0 // loop_footer_branch
    %12 = sbr.rel target = $region3
  $region8: #{resconv_basic_forward.4} parent=0 // loop_exit
    _

</llo_original>
